<compile_context>
chip_gen: v7x
topology: tpu7x:2x2x1
jax: 0.10.0
libtpu: 0.0.40
codegen_flags: <defaults>
</compile_context>

<pallas_src>
import functools
import math

import jax
import jax.numpy as jnp
from jax.experimental import pallas as pl
from jax.experimental.pallas import tpu as pltpu


# ------------------------------- kernel -------------------------------------

def _mobilenet_block_kernel(x_ref, w1_ref, b1_ref, wdw_ref, b2_ref,
                            wpw_ref, b3_ref, o_ref, mid_ref,
                            *, H1, W1, H2, W2, Cp, Cpo, s, off, Wm):
    # x_ref: (H+2, W+2, Cp) spatially pre-padded NHWC input in the MXU dtype,
    # channels pre-padded to the 128-lane width (batch dim squeezed out).

    # ---- stage 1: 3x3 conv (stride s) as 9 accumulating MXU dots + bias/ReLU
    x_val = None if s == 1 else x_ref[...]          # stride!=1 fallback path
    acc1 = None
    for dy in range(3):
        for dx in range(3):
            if s == 1:
                patch = x_ref[dy:dy + H1, dx:dx + W1, :]          # (H1,W1,Cp)
            else:
                patch = x_val[dy:dy + (H1 - 1) * s + 1:s,
                              dx:dx + (W1 - 1) * s + 1:s, :]
            d = jnp.dot(patch.reshape(H1 * W1, Cp), w1_ref[3 * dy + dx],
                        preferred_element_type=jnp.float32)
            acc1 = d if acc1 is None else acc1 + d
    y1 = jnp.maximum(acc1 + b1_ref[...], 0.0)                     # (H1*W1,Cp) f32

    # ---- stage-1 -> stage-2 handoff: aligned zero halo + aligned interior ---
    # Re-zero the halo every grid step with dense, sublane-aligned strips
    # (required: scratch is per-core and uninitialized on a core's first step).
    zrow = jnp.zeros((1, Wm, Cp), jnp.float32)
    zcol = jnp.zeros((H1 + 2, 8, Cp), jnp.float32)
    mid_ref[0:1, :, :] = zrow
    mid_ref[H1 + 1:H1 + 2, :, :] = zrow
    mid_ref[:, 0:8, :] = zcol
    mid_ref[:, off + W1:off + W1 + 8, :] = zcol
    mid_ref[1:1 + H1, off:off + W1, :] = y1.reshape(H1, W1, Cp)

    # ---- stage 2: depthwise 3x3 conv (stride s) + bias + ReLU (VPU, f32) ----
    m_val = None if s == 1 else mid_ref[...]
    acc2 = None
    for dy in range(3):
        for dx in range(3):
            c0 = off - 1 + dx
            if s == 1:
                patch = mid_ref[dy:dy + H2, c0:c0 + W2, :]        # (H2,W2,Cp)
            else:
                patch = m_val[dy:dy + (H2 - 1) * s + 1:s,
                              c0:c0 + (W2 - 1) * s + 1:s, :]
            k = 3 * dy + dx
            t = patch * wdw_ref[k:k + 1, :]                       # bcast (1,Cp)
            acc2 = t if acc2 is None else acc2 + t
    y2 = jnp.maximum(acc2 + b2_ref[...], 0.0)                     # (H2,W2,Cp)

    # ---- stage 3: pointwise 1x1 conv + bias + ReLU (MXU) --------------------
    y3 = jnp.dot(y2.reshape(H2 * W2, Cp).astype(wpw_ref.dtype), wpw_ref[...],
                 preferred_element_type=jnp.float32)              # (H2*W2,Cpo)
    y3 = jnp.maximum(y3 + b3_ref[...], 0.0)

    # lane-dense (Cpo multiple of 128) unmasked store
    o_ref[...] = y3.reshape(H2, W2, Cpo).astype(o_ref.dtype)


# ------------------------------- wrapper -------------------------------------

def _round_up(n, m):
    return ((n + m - 1) // m) * m


def mobilenet_block_forward(x_nchw, params, stride):
    """NCHW in -> NCHW out (f32), matching the PyTorch module (eval-mode BN)."""
    B, Cin, H, W = x_nchw.shape
    Cout, Cp, Cpo = params["cout"], params["cp"], params["cpo"]
    mxu_dtype = params["mxu_dtype"]
    s = stride
    H1 = (H - 1) // s + 1
    W1 = (W - 1) // s + 1
    H2 = (H1 - 1) // s + 1
    W2 = (W1 - 1) // s + 1
    off = 8                                    # sublane-aligned left halo
    Wm = off + _round_up(W1 + 8, 8)            # scratch width (multiple of 8)

    # Glue: NCHW -> NHWC, 1-px spatial halo for conv1, lane-pad channels,
    # pre-cast to the MXU dtype (halves input DMA bytes vs f32).
    x_nhwc = jnp.transpose(x_nchw, (0, 2, 3, 1))
    x_pad = jnp.pad(x_nhwc, ((0, 0), (1, 1), (1, 1), (0, Cp - Cin))).astype(mxu_dtype)

    kernel = functools.partial(
        _mobilenet_block_kernel,
        H1=H1, W1=W1, H2=H2, W2=W2, Cp=Cp, Cpo=Cpo, s=s, off=off, Wm=Wm)

    def full(shape):
        n = len(shape)
        return pl.BlockSpec(shape, lambda b, _n=n: (0,) * _n)

    def nbytes(shape, dtype):
        return math.prod(shape) * jnp.dtype(dtype).itemsize

    # Explicit VMEM budget: auto-pipelined operands are double-buffered.
    vmem_bytes = 2 * (
        nbytes((1, H + 2, W + 2, Cp), mxu_dtype)
        + nbytes((9, Cp, Cp), mxu_dtype) + nbytes((1, Cp), jnp.float32)
        + nbytes((9, Cp), jnp.float32) + nbytes((1, Cp), jnp.float32)
        + nbytes((Cp, Cpo), mxu_dtype) + nbytes((1, Cpo), jnp.float32)
        + nbytes((1, H2, W2, Cpo), jnp.bfloat16)
    ) + nbytes((H1 + 2, Wm, Cp), jnp.float32)
    vmem_limit = min(int(1.5 * vmem_bytes) + (8 << 20), 64 << 20)

    out_nhwc = pl.pallas_call(
        kernel,
        out_shape=jax.ShapeDtypeStruct((B, H2, W2, Cpo), jnp.bfloat16),
        grid=(B,),
        in_specs=[
            pl.BlockSpec((None, H + 2, W + 2, Cp), lambda b: (b, 0, 0, 0)),
            full((9, Cp, Cp)), full((1, Cp)),      # conv1 per-tap weights / bias
            full((9, Cp)), full((1, Cp)),          # depthwise weights / bias
            full((Cp, Cpo)), full((1, Cpo)),       # pointwise weights / bias
        ],
        out_specs=pl.BlockSpec((None, H2, W2, Cpo), lambda b: (b, 0, 0, 0)),
        scratch_shapes=[pltpu.VMEM((H1 + 2, Wm, Cp), jnp.float32)],
        compiler_params=pltpu.CompilerParams(
            dimension_semantics=("parallel",),
            vmem_limit_bytes=vmem_limit),
    )(x_pad,
      params["w1p"], params["b1p"],
      params["wdwp"], params["b2p"],
      params["wpwp"], params["b3p"])

    # Strip channel padding, back to NCHW, f32 for the caller.
    return jnp.transpose(out_nhwc[..., :Cout], (0, 3, 1, 2)).astype(jnp.float32)


# ----------------------------- parameter setup -------------------------------

def _fold_bn(gamma, beta, mean, var, eps=1e-5):
    scale = gamma / jnp.sqrt(var + eps)
    bias = beta - mean * scale
    return scale, bias


def make_params(key, cin, cout, lane=128, mxu_dtype=jnp.bfloat16):
    ks = jax.random.split(key, 6)
    # conv weights (PyTorch OIHW layouts, kept for the reference path)
    w1 = 0.2 * jax.random.normal(ks[0], (cin, cin, 3, 3), jnp.float32)    # OIHW
    wdw = 0.2 * jax.random.normal(ks[1], (cin, 1, 3, 3), jnp.float32)     # OIHW, groups=cin
    wpw = 0.2 * jax.random.normal(ks[2], (cout, cin, 1, 1), jnp.float32)  # OIHW

    # eval-mode BatchNorm parameters (deterministic, non-trivial)
    def bn(k, c):
        kk = jax.random.split(k, 4)
        gamma = 1.0 + 0.1 * jax.random.normal(kk[0], (c,), jnp.float32)
        beta = 0.05 * jax.random.normal(kk[1], (c,), jnp.float32)
        mean = 0.02 * jax.random.normal(kk[2], (c,), jnp.float32)
        var = 1.0 + 0.1 * jnp.abs(jax.random.normal(kk[3], (c,), jnp.float32))
        return _fold_bn(gamma, beta, mean, var)

    sc1, b1 = bn(ks[3], cin)
    sc2, b2 = bn(ks[4], cin)
    sc3, b3 = bn(ks[5], cout)

    cp = _round_up(cin, lane)
    cpo = _round_up(cout, lane)

    # kernel layouts: BN scale folded into weights, channels padded to 128,
    # MXU operands pre-cast (bf16 by default).
    w1_hwio = jnp.transpose(w1, (2, 3, 1, 0)) * sc1[None, None, None, :]       # (3,3,i,o)
    w1p = jnp.zeros((3, 3, cp, cp), jnp.float32).at[:, :, :cin, :cin].set(w1_hwio)
    w1p = w1p.reshape(9, cp, cp).astype(mxu_dtype)                             # per-tap matrices

    wdw_hwc = jnp.transpose(wdw[:, 0, :, :], (1, 2, 0)) * sc2[None, None, :]   # (3,3,c)
    wdwp = jnp.zeros((3, 3, cp), jnp.float32).at[:, :, :cin].set(wdw_hwc)
    wdwp = wdwp.reshape(9, cp)                                                 # f32 (VPU stage)

    wpw_io = jnp.transpose(wpw[:, :, 0, 0], (1, 0)) * sc3[None, :]             # (i,o)
    wpwp = jnp.zeros((cp, cpo), jnp.float32).at[:cin, :cout].set(wpw_io).astype(mxu_dtype)

    b1p = jnp.zeros((1, cp), jnp.float32).at[0, :cin].set(b1)
    b2p = jnp.zeros((1, cp), jnp.float32).at[0, :cin].set(b2)
    b3p = jnp.zeros((1, cpo), jnp.float32).at[0, :cout].set(b3)

    return {
        "cin": cin, "cout": cout, "cp": cp, "cpo": cpo, "mxu_dtype": mxu_dtype,
        # reference (NCHW / OIHW, separate BN) layouts
        "w1_oihw": w1, "wdw_oihw": wdw, "wpw_oihw": wpw,
        "sc1": sc1, "b1": b1, "sc2": sc2, "b2": b2, "sc3": sc3, "b3": b3,
        # kernel (lane-dense NHWC) layouts
        "w1p": w1p, "b1p": b1p, "wdwp": wdwp, "b2p": b2p,
        "wpwp": wpwp, "b3p": b3p,
    }


# ------------------------- pure-JAX reference (NCHW) -------------------------

def reference_forward(x, p, stride):
    def bn_relu(y, scale, bias):
        return jnp.maximum(
            y * scale[None, :, None, None] + bias[None, :, None, None], 0.0)
    dn = ("NCHW", "OIHW", "NCHW")
    y = jax.lax.conv_general_dilated(x, p["w1_oihw"], (stride, stride),
                                     [(1, 1), (1, 1)], dimension_numbers=dn)
    y = bn_relu(y, p["sc1"], p["b1"])
    y = jax.lax.conv_general_dilated(y, p["wdw_oihw"], (stride, stride),
                                     [(1, 1), (1, 1)], dimension_numbers=dn,
                                     feature_group_count=p["cin"])
    y = bn_relu(y, p["sc2"], p["b2"])
    y = jax.lax.conv_general_dilated(y, p["wpw_oihw"], (1, 1),
                                     [(0, 0), (0, 0)], dimension_numbers=dn)
    y = bn_relu(y, p["sc3"], p["b3"])
    return y


if __name__ == "__main__":
    B, Cin, Cout, H, W = 2, 4, 8, 16, 16
    stride = 1  # TODO(synk): stride=2 supported mathematically but not exercised here

    key = jax.random.PRNGKey(0)
    kx, kp = jax.random.split(key)
    x = jax.random.normal(kx, (B, Cin, H, W), jnp.float32)

    # bf16 MXU path (recommended on all generations). Pass mxu_dtype=jnp.float32
    # to make_params for a ~1e-4-tight numerical check instead.
    params = make_params(kp, Cin, Cout)

    out = jax.block_until_ready(mobilenet_block_forward(x, params, stride))
    ref = jax.block_until_ready(reference_forward(x, params, stride))

    assert out.shape == ref.shape, (out.shape, ref.shape)
    err = float(jnp.max(jnp.abs(out - ref)))
    # Relaxed tolerance: bf16 MXU operands + bf16 output store, f32 accumulation.
    assert err < 5e-2, f"max abs err {err}"

    print("KERNEL_OK")
</pallas_src>

<mosaic_0001>
module attributes {stable_mosaic.version = 11 : i64} {
  func.func @_mobilenet_block_kernel(%arg0: i32, %arg1: memref<1x18x18x128xbf16, #tpu.memory_space<vmem>>, %arg2: memref<9x128x128xbf16, #tpu.memory_space<vmem>>, %arg3: memref<1x128xf32, #tpu.memory_space<vmem>>, %arg4: memref<9x128xf32, #tpu.memory_space<vmem>>, %arg5: memref<1x128xf32, #tpu.memory_space<vmem>>, %arg6: memref<128x128xbf16, #tpu.memory_space<vmem>>, %arg7: memref<1x128xf32, #tpu.memory_space<vmem>>, %arg8: memref<1x16x16x128xbf16, #tpu.memory_space<vmem>>, %arg9: memref<18x32x128xf32, #tpu.memory_space<vmem>>) attributes {dimension_semantics = [#tpu.dimension_semantics<parallel>], iteration_bounds = array<i64: 2>, scalar_prefetch = 0 : i64, scratch_operands = 1 : i64, tpu.core_type = #tpu.core_type<tc>, window_params = [{transform_indices = @transform_0, window_bounds = array<i64: 1, 18, 18, 128>}, {pipeline_mode = #tpu.pipeline_mode<synchronous>, transform_indices = @transform_1, window_bounds = array<i64: 9, 128, 128>}, {pipeline_mode = #tpu.pipeline_mode<synchronous>, transform_indices = @transform_2, window_bounds = array<i64: 1, 128>}, {pipeline_mode = #tpu.pipeline_mode<synchronous>, transform_indices = @transform_3, window_bounds = array<i64: 9, 128>}, {pipeline_mode = #tpu.pipeline_mode<synchronous>, transform_indices = @transform_4, window_bounds = array<i64: 1, 128>}, {pipeline_mode = #tpu.pipeline_mode<synchronous>, transform_indices = @transform_5, window_bounds = array<i64: 128, 128>}, {pipeline_mode = #tpu.pipeline_mode<synchronous>, transform_indices = @transform_6, window_bounds = array<i64: 1, 128>}, {transform_indices = @transform_7, window_bounds = array<i64: 1, 16, 16, 128>}]} {
    %c0 = arith.constant 0 : index
    %c0_0 = arith.constant 0 : index
    %c0_1 = arith.constant 0 : index
    %c0_2 = arith.constant 0 : index
    %0 = vector.load %arg1[%c0, %c0_0, %c0_1, %c0_2] : memref<1x18x18x128xbf16, #tpu.memory_space<vmem>>, vector<1x16x16x128xbf16>
    %1 = vector.shape_cast %0 : vector<1x16x16x128xbf16> to vector<16x16x128xbf16>
    %2 = vector.shape_cast %1 : vector<16x16x128xbf16> to vector<256x128xbf16>
    %c0_3 = arith.constant 0 : index
    %c0_4 = arith.constant 0 : index
    %c0_5 = arith.constant 0 : index
    %3 = vector.load %arg2[%c0_3, %c0_4, %c0_5] : memref<9x128x128xbf16, #tpu.memory_space<vmem>>, vector<1x128x128xbf16>
    %4 = vector.shape_cast %3 : vector<1x128x128xbf16> to vector<128x128xbf16>
    %cst = arith.constant dense<0.000000e+00> : vector<256x128xf32>
    %5 = tpu.matmul %2, %4, %cst {dimension_numbers = #tpu.dot_dimension_numbers<[1], [0], [0], [1], [0, 0, 1, 1], [], []>} : vector<256x128xbf16>, vector<128x128xbf16>, vector<256x128xf32> -> vector<256x128xf32>
    %c0_6 = arith.constant 0 : index
    %c0_7 = arith.constant 0 : index
    %c1 = arith.constant 1 : index
    %c0_8 = arith.constant 0 : index
    %6 = vector.load %arg1[%c0_6, %c0_7, %c1, %c0_8] : memref<1x18x18x128xbf16, #tpu.memory_space<vmem>>, vector<1x16x16x128xbf16>
    %7 = vector.shape_cast %6 : vector<1x16x16x128xbf16> to vector<16x16x128xbf16>
    %8 = vector.shape_cast %7 : vector<16x16x128xbf16> to vector<256x128xbf16>
    %c1_9 = arith.constant 1 : index
    %c0_10 = arith.constant 0 : index
    %c0_11 = arith.constant 0 : index
    %9 = vector.load %arg2[%c1_9, %c0_10, %c0_11] : memref<9x128x128xbf16, #tpu.memory_space<vmem>>, vector<1x128x128xbf16>
    %10 = vector.shape_cast %9 : vector<1x128x128xbf16> to vector<128x128xbf16>
    %cst_12 = arith.constant dense<0.000000e+00> : vector<256x128xf32>
    %11 = tpu.matmul %8, %10, %cst_12 {dimension_numbers = #tpu.dot_dimension_numbers<[1], [0], [0], [1], [0, 0, 1, 1], [], []>} : vector<256x128xbf16>, vector<128x128xbf16>, vector<256x128xf32> -> vector<256x128xf32>
    %12 = arith.addf %5, %11 : vector<256x128xf32>
    %c0_13 = arith.constant 0 : index
    %c0_14 = arith.constant 0 : index
    %c2 = arith.constant 2 : index
    %c0_15 = arith.constant 0 : index
    %13 = vector.load %arg1[%c0_13, %c0_14, %c2, %c0_15] : memref<1x18x18x128xbf16, #tpu.memory_space<vmem>>, vector<1x16x16x128xbf16>
    %14 = vector.shape_cast %13 : vector<1x16x16x128xbf16> to vector<16x16x128xbf16>
    %15 = vector.shape_cast %14 : vector<16x16x128xbf16> to vector<256x128xbf16>
    %c2_16 = arith.constant 2 : index
    %c0_17 = arith.constant 0 : index
    %c0_18 = arith.constant 0 : index
    %16 = vector.load %arg2[%c2_16, %c0_17, %c0_18] : memref<9x128x128xbf16, #tpu.memory_space<vmem>>, vector<1x128x128xbf16>
    %17 = vector.shape_cast %16 : vector<1x128x128xbf16> to vector<128x128xbf16>
    %cst_19 = arith.constant dense<0.000000e+00> : vector<256x128xf32>
    %18 = tpu.matmul %15, %17, %cst_19 {dimension_numbers = #tpu.dot_dimension_numbers<[1], [0], [0], [1], [0, 0, 1, 1], [], []>} : vector<256x128xbf16>, vector<128x128xbf16>, vector<256x128xf32> -> vector<256x128xf32>
    %19 = arith.addf %12, %18 : vector<256x128xf32>
    %c0_20 = arith.constant 0 : index
    %c1_21 = arith.constant 1 : index
    %c0_22 = arith.constant 0 : index
    %c0_23 = arith.constant 0 : index
    %20 = vector.load %arg1[%c0_20, %c1_21, %c0_22, %c0_23] : memref<1x18x18x128xbf16, #tpu.memory_space<vmem>>, vector<1x16x16x128xbf16>
    %21 = vector.shape_cast %20 : vector<1x16x16x128xbf16> to vector<16x16x128xbf16>
    %22 = vector.shape_cast %21 : vector<16x16x128xbf16> to vector<256x128xbf16>
    %c3 = arith.constant 3 : index
    %c0_24 = arith.constant 0 : index
    %c0_25 = arith.constant 0 : index
    %23 = vector.load %arg2[%c3, %c0_24, %c0_25] : memref<9x128x128xbf16, #tpu.memory_space<vmem>>, vector<1x128x128xbf16>
    %24 = vector.shape_cast %23 : vector<1x128x128xbf16> to vector<128x128xbf16>
    %cst_26 = arith.constant dense<0.000000e+00> : vector<256x128xf32>
    %25 = tpu.matmul %22, %24, %cst_26 {dimension_numbers = #tpu.dot_dimension_numbers<[1], [0], [0], [1], [0, 0, 1, 1], [], []>} : vector<256x128xbf16>, vector<128x128xbf16>, vector<256x128xf32> -> vector<256x128xf32>
    %26 = arith.addf %19, %25 : vector<256x128xf32>
    %c0_27 = arith.constant 0 : index
    %c1_28 = arith.constant 1 : index
    %c1_29 = arith.constant 1 : index
    %c0_30 = arith.constant 0 : index
    %27 = vector.load %arg1[%c0_27, %c1_28, %c1_29, %c0_30] : memref<1x18x18x128xbf16, #tpu.memory_space<vmem>>, vector<1x16x16x128xbf16>
    %28 = vector.shape_cast %27 : vector<1x16x16x128xbf16> to vector<16x16x128xbf16>
    %29 = vector.shape_cast %28 : vector<16x16x128xbf16> to vector<256x128xbf16>
    %c4 = arith.constant 4 : index
    %c0_31 = arith.constant 0 : index
    %c0_32 = arith.constant 0 : index
    %30 = vector.load %arg2[%c4, %c0_31, %c0_32] : memref<9x128x128xbf16, #tpu.memory_space<vmem>>, vector<1x128x128xbf16>
    %31 = vector.shape_cast %30 : vector<1x128x128xbf16> to vector<128x128xbf16>
    %cst_33 = arith.constant dense<0.000000e+00> : vector<256x128xf32>
    %32 = tpu.matmul %29, %31, %cst_33 {dimension_numbers = #tpu.dot_dimension_numbers<[1], [0], [0], [1], [0, 0, 1, 1], [], []>} : vector<256x128xbf16>, vector<128x128xbf16>, vector<256x128xf32> -> vector<256x128xf32>
    %33 = arith.addf %26, %32 : vector<256x128xf32>
    %c0_34 = arith.constant 0 : index
    %c1_35 = arith.constant 1 : index
    %c2_36 = arith.constant 2 : index
    %c0_37 = arith.constant 0 : index
    %34 = vector.load %arg1[%c0_34, %c1_35, %c2_36, %c0_37] : memref<1x18x18x128xbf16, #tpu.memory_space<vmem>>, vector<1x16x16x128xbf16>
    %35 = vector.shape_cast %34 : vector<1x16x16x128xbf16> to vector<16x16x128xbf16>
    %36 = vector.shape_cast %35 : vector<16x16x128xbf16> to vector<256x128xbf16>
    %c5 = arith.constant 5 : index
    %c0_38 = arith.constant 0 : index
    %c0_39 = arith.constant 0 : index
    %37 = vector.load %arg2[%c5, %c0_38, %c0_39] : memref<9x128x128xbf16, #tpu.memory_space<vmem>>, vector<1x128x128xbf16>
    %38 = vector.shape_cast %37 : vector<1x128x128xbf16> to vector<128x128xbf16>
    %cst_40 = arith.constant dense<0.000000e+00> : vector<256x128xf32>
    %39 = tpu.matmul %36, %38, %cst_40 {dimension_numbers = #tpu.dot_dimension_numbers<[1], [0], [0], [1], [0, 0, 1, 1], [], []>} : vector<256x128xbf16>, vector<128x128xbf16>, vector<256x128xf32> -> vector<256x128xf32>
    %40 = arith.addf %33, %39 : vector<256x128xf32>
    %c0_41 = arith.constant 0 : index
    %c2_42 = arith.constant 2 : index
    %c0_43 = arith.constant 0 : index
    %c0_44 = arith.constant 0 : index
    %41 = vector.load %arg1[%c0_41, %c2_42, %c0_43, %c0_44] : memref<1x18x18x128xbf16, #tpu.memory_space<vmem>>, vector<1x16x16x128xbf16>
    %42 = vector.shape_cast %41 : vector<1x16x16x128xbf16> to vector<16x16x128xbf16>
    %43 = vector.shape_cast %42 : vector<16x16x128xbf16> to vector<256x128xbf16>
    %c6 = arith.constant 6 : index
    %c0_45 = arith.constant 0 : index
    %c0_46 = arith.constant 0 : index
    %44 = vector.load %arg2[%c6, %c0_45, %c0_46] : memref<9x128x128xbf16, #tpu.memory_space<vmem>>, vector<1x128x128xbf16>
    %45 = vector.shape_cast %44 : vector<1x128x128xbf16> to vector<128x128xbf16>
    %cst_47 = arith.constant dense<0.000000e+00> : vector<256x128xf32>
    %46 = tpu.matmul %43, %45, %cst_47 {dimension_numbers = #tpu.dot_dimension_numbers<[1], [0], [0], [1], [0, 0, 1, 1], [], []>} : vector<256x128xbf16>, vector<128x128xbf16>, vector<256x128xf32> -> vector<256x128xf32>
    %47 = arith.addf %40, %46 : vector<256x128xf32>
    %c0_48 = arith.constant 0 : index
    %c2_49 = arith.constant 2 : index
    %c1_50 = arith.constant 1 : index
    %c0_51 = arith.constant 0 : index
    %48 = vector.load %arg1[%c0_48, %c2_49, %c1_50, %c0_51] : memref<1x18x18x128xbf16, #tpu.memory_space<vmem>>, vector<1x16x16x128xbf16>
    %49 = vector.shape_cast %48 : vector<1x16x16x128xbf16> to vector<16x16x128xbf16>
    %50 = vector.shape_cast %49 : vector<16x16x128xbf16> to vector<256x128xbf16>
    %c7 = arith.constant 7 : index
    %c0_52 = arith.constant 0 : index
    %c0_53 = arith.constant 0 : index
    %51 = vector.load %arg2[%c7, %c0_52, %c0_53] : memref<9x128x128xbf16, #tpu.memory_space<vmem>>, vector<1x128x128xbf16>
    %52 = vector.shape_cast %51 : vector<1x128x128xbf16> to vector<128x128xbf16>
    %cst_54 = arith.constant dense<0.000000e+00> : vector<256x128xf32>
    %53 = tpu.matmul %50, %52, %cst_54 {dimension_numbers = #tpu.dot_dimension_numbers<[1], [0], [0], [1], [0, 0, 1, 1], [], []>} : vector<256x128xbf16>, vector<128x128xbf16>, vector<256x128xf32> -> vector<256x128xf32>
    %54 = arith.addf %47, %53 : vector<256x128xf32>
    %c0_55 = arith.constant 0 : index
    %c2_56 = arith.constant 2 : index
    %c2_57 = arith.constant 2 : index
    %c0_58 = arith.constant 0 : index
    %55 = vector.load %arg1[%c0_55, %c2_56, %c2_57, %c0_58] : memref<1x18x18x128xbf16, #tpu.memory_space<vmem>>, vector<1x16x16x128xbf16>
    %56 = vector.shape_cast %55 : vector<1x16x16x128xbf16> to vector<16x16x128xbf16>
    %57 = vector.shape_cast %56 : vector<16x16x128xbf16> to vector<256x128xbf16>
    %c8 = arith.constant 8 : index
    %c0_59 = arith.constant 0 : index
    %c0_60 = arith.constant 0 : index
    %58 = vector.load %arg2[%c8, %c0_59, %c0_60] : memref<9x128x128xbf16, #tpu.memory_space<vmem>>, vector<1x128x128xbf16>
    %59 = vector.shape_cast %58 : vector<1x128x128xbf16> to vector<128x128xbf16>
    %cst_61 = arith.constant dense<0.000000e+00> : vector<256x128xf32>
    %60 = tpu.matmul %57, %59, %cst_61 {dimension_numbers = #tpu.dot_dimension_numbers<[1], [0], [0], [1], [0, 0, 1, 1], [], []>} : vector<256x128xbf16>, vector<128x128xbf16>, vector<256x128xf32> -> vector<256x128xf32>
    %61 = arith.addf %54, %60 : vector<256x128xf32>
    %c0_62 = arith.constant 0 : index
    %c0_63 = arith.constant 0 : index
    %62 = vector.load %arg3[%c0_62, %c0_63] : memref<1x128xf32, #tpu.memory_space<vmem>>, vector<1x128xf32>
    %63 = vector.broadcast %62 : vector<1x128xf32> to vector<256x128xf32>
    %64 = arith.addf %61, %63 : vector<256x128xf32>
    %cst_64 = arith.constant 0.000000e+00 : f32
    %65 = vector.broadcast %cst_64 : f32 to vector<256x128xf32>
    %66 = arith.maximumf %64, %65 : vector<256x128xf32>
    %cst_65 = arith.constant 0.000000e+00 : f32
    %67 = vector.broadcast %cst_65 : f32 to vector<1x32x128xf32>
    %cst_66 = arith.constant 0.000000e+00 : f32
    %68 = vector.broadcast %cst_66 : f32 to vector<18x8x128xf32>
    %c0_67 = arith.constant 0 : index
    %c0_68 = arith.constant 0 : index
    %c0_69 = arith.constant 0 : index
    %69 = vector.load %arg9[%c0_67, %c0_68, %c0_69] : memref<18x32x128xf32, #tpu.memory_space<vmem>>, vector<1x32x128xf32>
    tpu.vector_store %arg9[%c0_67, %c0_68, %c0_69], %67 {strides = array<i32>} : memref<18x32x128xf32, #tpu.memory_space<vmem>>, vector<1x32x128xf32>,
    %c17 = arith.constant 17 : index
    %c0_70 = arith.constant 0 : index
    %c0_71 = arith.constant 0 : index
    %70 = vector.load %arg9[%c17, %c0_70, %c0_71] : memref<18x32x128xf32, #tpu.memory_space<vmem>>, vector<1x32x128xf32>
    tpu.vector_store %arg9[%c17, %c0_70, %c0_71], %67 {strides = array<i32>} : memref<18x32x128xf32, #tpu.memory_space<vmem>>, vector<1x32x128xf32>,
    %c0_72 = arith.constant 0 : index
    %c0_73 = arith.constant 0 : index
    %c0_74 = arith.constant 0 : index
    %71 = vector.load %arg9[%c0_72, %c0_73, %c0_74] : memref<18x32x128xf32, #tpu.memory_space<vmem>>, vector<18x8x128xf32>
    tpu.vector_store %arg9[%c0_72, %c0_73, %c0_74], %68 {strides = array<i32>} : memref<18x32x128xf32, #tpu.memory_space<vmem>>, vector<18x8x128xf32>,
    %c0_75 = arith.constant 0 : index
    %c24 = arith.constant 24 : index
    %c0_76 = arith.constant 0 : index
    %72 = vector.load %arg9[%c0_75, %c24, %c0_76] : memref<18x32x128xf32, #tpu.memory_space<vmem>>, vector<18x8x128xf32>
    tpu.vector_store %arg9[%c0_75, %c24, %c0_76], %68 {strides = array<i32>} : memref<18x32x128xf32, #tpu.memory_space<vmem>>, vector<18x8x128xf32>,
    %73 = vector.shape_cast %66 : vector<256x128xf32> to vector<16x16x128xf32>
    %c1_77 = arith.constant 1 : index
    %c8_78 = arith.constant 8 : index
    %c0_79 = arith.constant 0 : index
    %74 = vector.load %arg9[%c1_77, %c8_78, %c0_79] : memref<18x32x128xf32, #tpu.memory_space<vmem>>, vector<16x16x128xf32>
    tpu.vector_store %arg9[%c1_77, %c8_78, %c0_79], %73 {strides = array<i32>} : memref<18x32x128xf32, #tpu.memory_space<vmem>>, vector<16x16x128xf32>,
    %c0_80 = arith.constant 0 : index
    %c7_81 = arith.constant 7 : index
    %c0_82 = arith.constant 0 : index
    %75 = vector.load %arg9[%c0_80, %c7_81, %c0_82] : memref<18x32x128xf32, #tpu.memory_space<vmem>>, vector<16x16x128xf32>
    %c0_83 = arith.constant 0 : index
    %c0_84 = arith.constant 0 : index
    %76 = vector.load %arg4[%c0_83, %c0_84] : memref<9x128xf32, #tpu.memory_space<vmem>>, vector<1x128xf32>
    %77 = vector.shape_cast %76 : vector<1x128xf32> to vector<1x1x128xf32>
    %78 = vector.broadcast %77 : vector<1x1x128xf32> to vector<16x16x128xf32>
    %79 = arith.mulf %75, %78 : vector<16x16x128xf32>
    %c0_85 = arith.constant 0 : index
    %c8_86 = arith.constant 8 : index
    %c0_87 = arith.constant 0 : index
    %80 = vector.load %arg9[%c0_85, %c8_86, %c0_87] : memref<18x32x128xf32, #tpu.memory_space<vmem>>, vector<16x16x128xf32>
    %c1_88 = arith.constant 1 : index
    %c0_89 = arith.constant 0 : index
    %81 = vector.load %arg4[%c1_88, %c0_89] : memref<9x128xf32, #tpu.memory_space<vmem>>, vector<1x128xf32>
    %82 = vector.shape_cast %81 : vector<1x128xf32> to vector<1x1x128xf32>
    %83 = vector.broadcast %82 : vector<1x1x128xf32> to vector<16x16x128xf32>
    %84 = arith.mulf %80, %83 : vector<16x16x128xf32>
    %85 = arith.addf %79, %84 : vector<16x16x128xf32>
    %c0_90 = arith.constant 0 : index
    %c9 = arith.constant 9 : index
    %c0_91 = arith.constant 0 : index
    %86 = vector.load %arg9[%c0_90, %c9, %c0_91] : memref<18x32x128xf32, #tpu.memory_space<vmem>>, vector<16x16x128xf32>
    %c2_92 = arith.constant 2 : index
    %c0_93 = arith.constant 0 : index
    %87 = vector.load %arg4[%c2_92, %c0_93] : memref<9x128xf32, #tpu.memory_space<vmem>>, vector<1x128xf32>
    %88 = vector.shape_cast %87 : vector<1x128xf32> to vector<1x1x128xf32>
    %89 = vector.broadcast %88 : vector<1x1x128xf32> to vector<16x16x128xf32>
    %90 = arith.mulf %86, %89 : vector<16x16x128xf32>
    %91 = arith.addf %85, %90 : vector<16x16x128xf32>
    %c1_94 = arith.constant 1 : index
    %c7_95 = arith.constant 7 : index
    %c0_96 = arith.constant 0 : index
    %92 = vector.load %arg9[%c1_94, %c7_95, %c0_96] : memref<18x32x128xf32, #tpu.memory_space<vmem>>, vector<16x16x128xf32>
    %c3_97 = arith.constant 3 : index
    %c0_98 = arith.constant 0 : index
    %93 = vector.load %arg4[%c3_97, %c0_98] : memref<9x128xf32, #tpu.memory_space<vmem>>, vector<1x128xf32>
    %94 = vector.shape_cast %93 : vector<1x128xf32> to vector<1x1x128xf32>
    %95 = vector.broadcast %94 : vector<1x1x128xf32> to vector<16x16x128xf32>
    %96 = arith.mulf %92, %95 : vector<16x16x128xf32>
    %97 = arith.addf %91, %96 : vector<16x16x128xf32>
    %c1_99 = arith.constant 1 : index
    %c8_100 = arith.constant 8 : index
    %c0_101 = arith.constant 0 : index
    %98 = vector.load %arg9[%c1_99, %c8_100, %c0_101] : memref<18x32x128xf32, #tpu.memory_space<vmem>>, vector<16x16x128xf32>
    %c4_102 = arith.constant 4 : index
    %c0_103 = arith.constant 0 : index
    %99 = vector.load %arg4[%c4_102, %c0_103] : memref<9x128xf32, #tpu.memory_space<vmem>>, vector<1x128xf32>
    %100 = vector.shape_cast %99 : vector<1x128xf32> to vector<1x1x128xf32>
    %101 = vector.broadcast %100 : vector<1x1x128xf32> to vector<16x16x128xf32>
    %102 = arith.mulf %98, %101 : vector<16x16x128xf32>
    %103 = arith.addf %97, %102 : vector<16x16x128xf32>
    %c1_104 = arith.constant 1 : index
    %c9_105 = arith.constant 9 : index
    %c0_106 = arith.constant 0 : index
    %104 = vector.load %arg9[%c1_104, %c9_105, %c0_106] : memref<18x32x128xf32, #tpu.memory_space<vmem>>, vector<16x16x128xf32>
    %c5_107 = arith.constant 5 : index
    %c0_108 = arith.constant 0 : index
    %105 = vector.load %arg4[%c5_107, %c0_108] : memref<9x128xf32, #tpu.memory_space<vmem>>, vector<1x128xf32>
    %106 = vector.shape_cast %105 : vector<1x128xf32> to vector<1x1x128xf32>
    %107 = vector.broadcast %106 : vector<1x1x128xf32> to vector<16x16x128xf32>
    %108 = arith.mulf %104, %107 : vector<16x16x128xf32>
    %109 = arith.addf %103, %108 : vector<16x16x128xf32>
    %c2_109 = arith.constant 2 : index
    %c7_110 = arith.constant 7 : index
    %c0_111 = arith.constant 0 : index
    %110 = vector.load %arg9[%c2_109, %c7_110, %c0_111] : memref<18x32x128xf32, #tpu.memory_space<vmem>>, vector<16x16x128xf32>
    %c6_112 = arith.constant 6 : index
    %c0_113 = arith.constant 0 : index
    %111 = vector.load %arg4[%c6_112, %c0_113] : memref<9x128xf32, #tpu.memory_space<vmem>>, vector<1x128xf32>
    %112 = vector.shape_cast %111 : vector<1x128xf32> to vector<1x1x128xf32>
    %113 = vector.broadcast %112 : vector<1x1x128xf32> to vector<16x16x128xf32>
    %114 = arith.mulf %110, %113 : vector<16x16x128xf32>
    %115 = arith.addf %109, %114 : vector<16x16x128xf32>
    %c2_114 = arith.constant 2 : index
    %c8_115 = arith.constant 8 : index
    %c0_116 = arith.constant 0 : index
    %116 = vector.load %arg9[%c2_114, %c8_115, %c0_116] : memref<18x32x128xf32, #tpu.memory_space<vmem>>, vector<16x16x128xf32>
    %c7_117 = arith.constant 7 : index
    %c0_118 = arith.constant 0 : index
    %117 = vector.load %arg4[%c7_117, %c0_118] : memref<9x128xf32, #tpu.memory_space<vmem>>, vector<1x128xf32>
    %118 = vector.shape_cast %117 : vector<1x128xf32> to vector<1x1x128xf32>
    %119 = vector.broadcast %118 : vector<1x1x128xf32> to vector<16x16x128xf32>
    %120 = arith.mulf %116, %119 : vector<16x16x128xf32>
    %121 = arith.addf %115, %120 : vector<16x16x128xf32>
    %c2_119 = arith.constant 2 : index
    %c9_120 = arith.constant 9 : index
    %c0_121 = arith.constant 0 : index
    %122 = vector.load %arg9[%c2_119, %c9_120, %c0_121] : memref<18x32x128xf32, #tpu.memory_space<vmem>>, vector<16x16x128xf32>
    %c8_122 = arith.constant 8 : index
    %c0_123 = arith.constant 0 : index
    %123 = vector.load %arg4[%c8_122, %c0_123] : memref<9x128xf32, #tpu.memory_space<vmem>>, vector<1x128xf32>
    %124 = vector.shape_cast %123 : vector<1x128xf32> to vector<1x1x128xf32>
    %125 = vector.broadcast %124 : vector<1x1x128xf32> to vector<16x16x128xf32>
    %126 = arith.mulf %122, %125 : vector<16x16x128xf32>
    %127 = arith.addf %121, %126 : vector<16x16x128xf32>
    %c0_124 = arith.constant 0 : index
    %c0_125 = arith.constant 0 : index
    %128 = vector.load %arg5[%c0_124, %c0_125] : memref<1x128xf32, #tpu.memory_space<vmem>>, vector<1x128xf32>
    %129 = vector.shape_cast %128 : vector<1x128xf32> to vector<1x1x128xf32>
    %130 = vector.broadcast %129 : vector<1x1x128xf32> to vector<16x16x128xf32>
    %131 = arith.addf %127, %130 : vector<16x16x128xf32>
    %cst_126 = arith.constant 0.000000e+00 : f32
    %132 = vector.broadcast %cst_126 : f32 to vector<16x16x128xf32>
    %133 = arith.maximumf %131, %132 : vector<16x16x128xf32>
    %134 = vector.shape_cast %133 : vector<16x16x128xf32> to vector<256x128xf32>
    %135 = arith.truncf %134 : vector<256x128xf32> to vector<256x128xbf16>
    %c0_127 = arith.constant 0 : index
    %c0_128 = arith.constant 0 : index
    %136 = vector.load %arg6[%c0_127, %c0_128] : memref<128x128xbf16, #tpu.memory_space<vmem>>, vector<128x128xbf16>
    %cst_129 = arith.constant dense<0.000000e+00> : vector<256x128xf32>
    %137 = tpu.matmul %135, %136, %cst_129 {dimension_numbers = #tpu.dot_dimension_numbers<[1], [0], [0], [1], [0, 0, 1, 1], [], []>} : vector<256x128xbf16>, vector<128x128xbf16>, vector<256x128xf32> -> vector<256x128xf32>
    %c0_130 = arith.constant 0 : index
    %c0_131 = arith.constant 0 : index
    %138 = vector.load %arg7[%c0_130, %c0_131] : memref<1x128xf32, #tpu.memory_space<vmem>>, vector<1x128xf32>
    %139 = vector.broadcast %138 : vector<1x128xf32> to vector<256x128xf32>
    %140 = arith.addf %137, %139 : vector<256x128xf32>
    %cst_132 = arith.constant 0.000000e+00 : f32
    %141 = vector.broadcast %cst_132 : f32 to vector<256x128xf32>
    %142 = arith.maximumf %140, %141 : vector<256x128xf32>
    %143 = vector.shape_cast %142 : vector<256x128xf32> to vector<16x16x128xf32>
    %144 = arith.truncf %143 : vector<16x16x128xf32> to vector<16x16x128xbf16>
    %c0_133 = arith.constant 0 : index
    %c0_134 = arith.constant 0 : index
    %c0_135 = arith.constant 0 : index
    %c0_136 = arith.constant 0 : index
    %145 = vector.load %arg8[%c0_133, %c0_134, %c0_135, %c0_136] : memref<1x16x16x128xbf16, #tpu.memory_space<vmem>>, vector<1x16x16x128xbf16>
    %146 = vector.shape_cast %145 : vector<1x16x16x128xbf16> to vector<16x16x128xbf16>
    %147 = vector.shape_cast %144 : vector<16x16x128xbf16> to vector<1x16x16x128xbf16>
    tpu.vector_store %arg8[%c0_133, %c0_134, %c0_135, %c0_136], %147 {strides = array<i32>} : memref<1x16x16x128xbf16, #tpu.memory_space<vmem>>, vector<1x16x16x128xbf16>,
    return
  }
  func.func @transform_0(%arg0: i32) -> (i32, i32, i32, i32) {
    %c0_i32 = arith.constant 0 : i32
    %c0_i32_0 = arith.constant 0 : i32
    %c0_i32_1 = arith.constant 0 : i32
    %c0_i32_2 = arith.constant 0 : i32
    return %arg0, %c0_i32, %c0_i32_0, %c0_i32_1 : i32, i32, i32, i32
  }
  func.func @transform_1(%arg0: i32) -> (i32, i32, i32) {
    %c0_i32 = arith.constant 0 : i32
    %c0_i32_0 = arith.constant 0 : i32
    %c0_i32_1 = arith.constant 0 : i32
    %c0_i32_2 = arith.constant 0 : i32
    return %c0_i32, %c0_i32_0, %c0_i32_1 : i32, i32, i32
  }
  func.func @transform_2(%arg0: i32) -> (i32, i32) {
    %c0_i32 = arith.constant 0 : i32
    %c0_i32_0 = arith.constant 0 : i32
    %c0_i32_1 = arith.constant 0 : i32
    return %c0_i32, %c0_i32_0 : i32, i32
  }
  func.func @transform_3(%arg0: i32) -> (i32, i32) {
    %c0_i32 = arith.constant 0 : i32
    %c0_i32_0 = arith.constant 0 : i32
    %c0_i32_1 = arith.constant 0 : i32
    return %c0_i32, %c0_i32_0 : i32, i32
  }
  func.func @transform_4(%arg0: i32) -> (i32, i32) {
    %c0_i32 = arith.constant 0 : i32
    %c0_i32_0 = arith.constant 0 : i32
    %c0_i32_1 = arith.constant 0 : i32
    return %c0_i32, %c0_i32_0 : i32, i32
  }
  func.func @transform_5(%arg0: i32) -> (i32, i32) {
    %c0_i32 = arith.constant 0 : i32
    %c0_i32_0 = arith.constant 0 : i32
    %c0_i32_1 = arith.constant 0 : i32
    return %c0_i32, %c0_i32_0 : i32, i32
  }
  func.func @transform_6(%arg0: i32) -> (i32, i32) {
    %c0_i32 = arith.constant 0 : i32
    %c0_i32_0 = arith.constant 0 : i32
    %c0_i32_1 = arith.constant 0 : i32
    return %c0_i32, %c0_i32_0 : i32, i32
  }
  func.func @transform_7(%arg0: i32) -> (i32, i32, i32, i32) {
    %c0_i32 = arith.constant 0 : i32
    %c0_i32_0 = arith.constant 0 : i32
    %c0_i32_1 = arith.constant 0 : i32
    %c0_i32_2 = arith.constant 0 : i32
    return %arg0, %c0_i32, %c0_i32_0, %c0_i32_1 : i32, i32, i32, i32
  }
}

</mosaic_0001>

<llo_original>
// kernel: tpu_custom_call.1
$region0: #{tpu_custom_call.1}
  #allocation0 [shape = 'u32[]', space=smem, size = 0x4, offset = 0x4, fixed_abs, tag = 'smem constant byte address 0x4 - core index']
  #allocation1 [shape = 'u32[144,128]{1,0:T(1,128)}', space=vmem, size = 0x12000, scoped, tag = 'internal scratch']
  #allocation2 [shape = 'f32[18,32,128]{2,1,0:T(8,128)}', space=vmem, size = 0x48000, scoped, tag = 'scratch operand']
  %s0 = inlined_call_operand.vmem [shape: bf16[2,18,18,128], index: 0, kind: input, shape index: {}]
  %s1 = inlined_call_operand.vmem [shape: bf16[9,128,128], index: 1, kind: input, shape index: {}]
  %s2 = inlined_call_operand.vmem [shape: f32[1,128], index: 2, kind: input, shape index: {}]
  %s3 = inlined_call_operand.vmem [shape: f32[9,128], index: 3, kind: input, shape index: {}]
  %s4 = inlined_call_operand.vmem [shape: f32[1,128], index: 4, kind: input, shape index: {}]
  %s5 = inlined_call_operand.vmem [shape: bf16[128,128], index: 5, kind: input, shape index: {}]
  %s6 = inlined_call_operand.vmem [shape: f32[1,128], index: 6, kind: input, shape index: {}]
  %s7 = inlined_call_operand.hbm [shape: bf16[2,16,16,128], index: 7, kind: output, shape index: {}]
  %s8 = sld [smem:[#allocation0]]
  $region61: #{tpu_custom_call.1} parent=0
    _
  %s10 = ssub.s32 1, %s8
  %s11 = scalar_select 0, %s10, %s8
  $region1: #{tpu_custom_call.1} parent=0
    #allocation3 [shape = 'u8[131072]{0}', space=vmem, size = 0x20000, scoped, tag = 'output window, operand 0']
    #allocation4 [shape = 's32[2]{0}', space=sflag, size = 0x8, scoped, tag = 'scoped memory for tpu_custom_call.1']
    %12 = vsyncpa [#allocation4], 0
    %s13 = scalar_lea.sflag [#allocation4], 1
    %14 = vsyncpa %s13, 0
    loop: start=0, step=1, limit=4
    $region2: #{tpu_custom_call.1} parent=1 // loop_pre_header
      _
    $region3: #{tpu_custom_call.1} parent=1 // loop_header
      %s16 = sphi 0, %s20
      %p17 = scmp.ge.s32.totalorder %s16, 4
      %s26 = sphi 0, %s28
      %s29 = sphi 0, %s26
      %s30 = sphi 0, %s29
      %s46 = sphi 0, %s30
      %s50 = sphi 0, %s50
      %s52 = sphi 0, %s50
      %s53 = sphi 0, %s52
      %s67 = sphi 0, %s53
      %s71 = sphi 0, %s71
      %s73 = sphi 0, %s71
      %s74 = sphi 0, %s73
      %s88 = sphi 0, %s74
      %s92 = sphi 0, %s92
      %s94 = sphi 0, %s92
      %s95 = sphi 0, %s94
      %s109 = sphi 0, %s95
      %s113 = sphi 0, %s113
      %s115 = sphi 0, %s113
      %s116 = sphi 0, %s115
      %s130 = sphi 0, %s116
      %s134 = sphi 0, %s134
      %s136 = sphi 0, %s134
      %s137 = sphi 0, %s136
      %s151 = sphi 0, %s137
      %s155 = sphi 0, %s155
      %s157 = sphi 0, %s155
      %s158 = sphi 0, %s157
      %s172 = sphi 0, %s158
      %s178 = sphi 0, %s180
      %s181 = sphi 0, %s178
      %s182 = sphi 0, %s181
      %s198 = sphi 0, %s182
    $region4: #{tpu_custom_call.1} parent=1 // loop_header_branch
      %19 = sbr.rel (%p17) target = $region8
    $region5: #{tpu_custom_call.1} parent=1 // loop_body
      %s21 = ssub.s32 %s16, 1
      %s22 = ssub.s32 %s16, 2
      %s23 = sadd.s32 %s16, 1
      %s24 = ssub.s32 %s16, %s23
      %p25 = scmp.eq.s32.totalorder %s24, 0
      %s27 = sadd.s32 %s26, 1
      %s28 = scalar_select %p25, %s26, %s27
      %p31 = pneg %p25
      %p32 = scmp.eq.s32.totalorder %s16, 1
      %p33 = por %p31, %p32
      %p34 = scmp.ne.s32.totalorder %s26, %s29
      %p35 = scmp.eq.s32.totalorder %s16, 0
      %p36 = por %p34, %p35
      %p37 = scmp.ne.s32.totalorder %s26, %s29
      %p38 = scmp.eq.s32.totalorder %s21, 1
      %p39 = por %p37, %p38
      %p40 = scmp.ne.s32.totalorder %s29, %s30
      %p41 = scmp.eq.s32.totalorder %s21, 0
      %p42 = por %p40, %p41
      %p43 = scmp.ne.s32.totalorder %s29, %s30
      %p44 = scmp.eq.s32.totalorder %s22, 1
      %p45 = por %p43, %p44
      %p47 = scmp.ne.s32.totalorder %s30, %s46
      %p48 = scmp.eq.s32.totalorder %s22, 0
      %p49 = por %p47, %p48
      %s51 = sadd.s32 %s50, 1
      %p54 = scmp.eq.s32.totalorder %s16, 1
      %p55 = scmp.ne.s32.totalorder %s50, %s52
      %p56 = scmp.eq.s32.totalorder %s16, 0
      %p57 = por %p55, %p56
      %p58 = scmp.ne.s32.totalorder %s50, %s52
      %p59 = scmp.eq.s32.totalorder %s21, 1
      %p60 = por %p58, %p59
      %p61 = scmp.ne.s32.totalorder %s52, %s53
      %p62 = scmp.eq.s32.totalorder %s21, 0
      %p63 = por %p61, %p62
      %p64 = scmp.ne.s32.totalorder %s52, %s53
      %p65 = scmp.eq.s32.totalorder %s22, 1
      %p66 = por %p64, %p65
      %p68 = scmp.ne.s32.totalorder %s53, %s67
      %p69 = scmp.eq.s32.totalorder %s22, 0
      %p70 = por %p68, %p69
      %s72 = sadd.s32 %s71, 1
      %p75 = scmp.eq.s32.totalorder %s16, 1
      %p76 = scmp.ne.s32.totalorder %s71, %s73
      %p77 = scmp.eq.s32.totalorder %s16, 0
      %p78 = por %p76, %p77
      %p79 = scmp.ne.s32.totalorder %s71, %s73
      %p80 = scmp.eq.s32.totalorder %s21, 1
      %p81 = por %p79, %p80
      %p82 = scmp.ne.s32.totalorder %s73, %s74
      %p83 = scmp.eq.s32.totalorder %s21, 0
      %p84 = por %p82, %p83
      %p85 = scmp.ne.s32.totalorder %s73, %s74
      %p86 = scmp.eq.s32.totalorder %s22, 1
      %p87 = por %p85, %p86
      %p89 = scmp.ne.s32.totalorder %s74, %s88
      %p90 = scmp.eq.s32.totalorder %s22, 0
      %p91 = por %p89, %p90
      %s93 = sadd.s32 %s92, 1
      %p96 = scmp.eq.s32.totalorder %s16, 1
      %p97 = scmp.ne.s32.totalorder %s92, %s94
      %p98 = scmp.eq.s32.totalorder %s16, 0
      %p99 = por %p97, %p98
      %p100 = scmp.ne.s32.totalorder %s92, %s94
      %p101 = scmp.eq.s32.totalorder %s21, 1
      %p102 = por %p100, %p101
      %p103 = scmp.ne.s32.totalorder %s94, %s95
      %p104 = scmp.eq.s32.totalorder %s21, 0
      %p105 = por %p103, %p104
      %p106 = scmp.ne.s32.totalorder %s94, %s95
      %p107 = scmp.eq.s32.totalorder %s22, 1
      %p108 = por %p106, %p107
      %p110 = scmp.ne.s32.totalorder %s95, %s109
      %p111 = scmp.eq.s32.totalorder %s22, 0
      %p112 = por %p110, %p111
      %s114 = sadd.s32 %s113, 1
      %p117 = scmp.eq.s32.totalorder %s16, 1
      %p118 = scmp.ne.s32.totalorder %s113, %s115
      %p119 = scmp.eq.s32.totalorder %s16, 0
      %p120 = por %p118, %p119
      %p121 = scmp.ne.s32.totalorder %s113, %s115
      %p122 = scmp.eq.s32.totalorder %s21, 1
      %p123 = por %p121, %p122
      %p124 = scmp.ne.s32.totalorder %s115, %s116
      %p125 = scmp.eq.s32.totalorder %s21, 0
      %p126 = por %p124, %p125
      %p127 = scmp.ne.s32.totalorder %s115, %s116
      %p128 = scmp.eq.s32.totalorder %s22, 1
      %p129 = por %p127, %p128
      %p131 = scmp.ne.s32.totalorder %s116, %s130
      %p132 = scmp.eq.s32.totalorder %s22, 0
      %p133 = por %p131, %p132
      %s135 = sadd.s32 %s134, 1
      %p138 = scmp.eq.s32.totalorder %s16, 1
      %p139 = scmp.ne.s32.totalorder %s134, %s136
      %p140 = scmp.eq.s32.totalorder %s16, 0
      %p141 = por %p139, %p140
      %p142 = scmp.ne.s32.totalorder %s134, %s136
      %p143 = scmp.eq.s32.totalorder %s21, 1
      %p144 = por %p142, %p143
      %p145 = scmp.ne.s32.totalorder %s136, %s137
      %p146 = scmp.eq.s32.totalorder %s21, 0
      %p147 = por %p145, %p146
      %p148 = scmp.ne.s32.totalorder %s136, %s137
      %p149 = scmp.eq.s32.totalorder %s22, 1
      %p150 = por %p148, %p149
      %p152 = scmp.ne.s32.totalorder %s137, %s151
      %p153 = scmp.eq.s32.totalorder %s22, 0
      %p154 = por %p152, %p153
      %s156 = sadd.s32 %s155, 1
      %p159 = scmp.eq.s32.totalorder %s16, 1
      %p160 = scmp.ne.s32.totalorder %s155, %s157
      %p161 = scmp.eq.s32.totalorder %s16, 0
      %p162 = por %p160, %p161
      %p163 = scmp.ne.s32.totalorder %s155, %s157
      %p164 = scmp.eq.s32.totalorder %s21, 1
      %p165 = por %p163, %p164
      %p166 = scmp.ne.s32.totalorder %s157, %s158
      %p167 = scmp.eq.s32.totalorder %s21, 0
      %p168 = por %p166, %p167
      %p169 = scmp.ne.s32.totalorder %s157, %s158
      %p170 = scmp.eq.s32.totalorder %s22, 1
      %p171 = por %p169, %p170
      %p173 = scmp.ne.s32.totalorder %s158, %s172
      %p174 = scmp.eq.s32.totalorder %s22, 0
      %p175 = por %p173, %p174
      %s176 = ssub.s32 %s16, %s23
      %p177 = scmp.eq.s32.totalorder %s176, 0
      %s179 = sadd.s32 %s178, 1
      %s180 = scalar_select %p177, %s178, %s179
      %p183 = pneg %p177
      %p184 = scmp.eq.s32.totalorder %s16, 1
      %p185 = por %p183, %p184
      %p186 = scmp.ne.s32.totalorder %s178, %s181
      %p187 = scmp.eq.s32.totalorder %s16, 0
      %p188 = por %p186, %p187
      %p189 = scmp.ne.s32.totalorder %s178, %s181
      %p190 = scmp.eq.s32.totalorder %s21, 1
      %p191 = por %p189, %p190
      %p192 = scmp.ne.s32.totalorder %s181, %s182
      %p193 = scmp.eq.s32.totalorder %s21, 0
      %p194 = por %p192, %p193
      %p195 = scmp.ne.s32.totalorder %s181, %s182
      %p196 = scmp.eq.s32.totalorder %s22, 1
      %p197 = por %p195, %p196
      %p199 = scmp.ne.s32.totalorder %s182, %s198
      %p200 = scmp.eq.s32.totalorder %s22, 0
      %p201 = por %p199, %p200
      %p202 = scmp.le.s32.totalorder 1, %s16
      %p203 = scmp.lt.s32.totalorder %s16, 3
      %p204 = pnand %p202, %p203
      %p205 = pneg %p204
      // Predicated region
      $region9: #{tpu_custom_call.1} parent=5 // pred_check
        _
      $region10: #{tpu_custom_call.1} parent=5 // pred_check_branch
        %207 = sbr.rel (%p204) target = $region12
      $region11: #{tpu_custom_call.1} parent=5 // pred_region
        %s208 = ssub.s32 %s16, 1
        // Predicated region
        $region13: #{tpu_custom_call.1} parent=11 // pred_check
          %p209 = pneg %p63
        $region14: #{tpu_custom_call.1} parent=11 // pred_check_branch
          %211 = sbr.rel (%p209) target = $region16
        $region15: #{tpu_custom_call.1} parent=11 // pred_region
          _
        $region16: #{tpu_custom_call.1} parent=11 // pred_fallthru
          _
        // Predicated region
        $region17: #{tpu_custom_call.1} parent=11 // pred_check
          %p212 = pneg %p84
        $region18: #{tpu_custom_call.1} parent=11 // pred_check_branch
          %214 = sbr.rel (%p212) target = $region20
        $region19: #{tpu_custom_call.1} parent=11 // pred_region
          _
        $region20: #{tpu_custom_call.1} parent=11 // pred_fallthru
          _
        // Predicated region
        $region21: #{tpu_custom_call.1} parent=11 // pred_check
          %p215 = pneg %p105
        $region22: #{tpu_custom_call.1} parent=11 // pred_check_branch
          %217 = sbr.rel (%p215) target = $region24
        $region23: #{tpu_custom_call.1} parent=11 // pred_region
          _
        $region24: #{tpu_custom_call.1} parent=11 // pred_fallthru
          _
        // Predicated region
        $region25: #{tpu_custom_call.1} parent=11 // pred_check
          %p218 = pneg %p126
        $region26: #{tpu_custom_call.1} parent=11 // pred_check_branch
          %220 = sbr.rel (%p218) target = $region28
        $region27: #{tpu_custom_call.1} parent=11 // pred_region
          _
        $region28: #{tpu_custom_call.1} parent=11 // pred_fallthru
          _
        // Predicated region
        $region29: #{tpu_custom_call.1} parent=11 // pred_check
          %p221 = pneg %p147
        $region30: #{tpu_custom_call.1} parent=11 // pred_check_branch
          %223 = sbr.rel (%p221) target = $region32
        $region31: #{tpu_custom_call.1} parent=11 // pred_region
          _
        $region32: #{tpu_custom_call.1} parent=11 // pred_fallthru
          _
        // Predicated region
        $region33: #{tpu_custom_call.1} parent=11 // pred_check
          %p224 = pneg %p168
        $region34: #{tpu_custom_call.1} parent=11 // pred_check_branch
          %226 = sbr.rel (%p224) target = $region36
        $region35: #{tpu_custom_call.1} parent=11 // pred_region
          _
        $region36: #{tpu_custom_call.1} parent=11 // pred_fallthru
          _
      $region12: #{tpu_custom_call.1} parent=5 // pred_fallthru
        _
      %p227 = scmp.lt.s32.totalorder %s16, 2
      // Predicated region
      $region37: #{tpu_custom_call.1} parent=5 // pred_check
        %p228 = pneg %p227
      $region38: #{tpu_custom_call.1} parent=5 // pred_check_branch
        %230 = sbr.rel (%p228) target = $region40
      $region39: #{tpu_custom_call.1} parent=5 // pred_region
        // Predicated region
        $region41: #{tpu_custom_call.1} parent=39 // pred_check
          %p231 = pneg %p36
        $region42: #{tpu_custom_call.1} parent=39 // pred_check_branch
          %233 = sbr.rel (%p231) target = $region44
        $region43: #{tpu_custom_call.1} parent=39 // pred_region
          %p234 = scmp.lt.s32.totalorder %s16, 1
          %s235 = scalar_select %p234, %s16, 1
          %s236 = smul.addr %s235, 54
          %s237 = smul.addr %s236, 4
          %s238 = scalar_lea.vmem %s0, %s237
        $region44: #{tpu_custom_call.1} parent=39 // pred_fallthru
          _
      $region40: #{tpu_custom_call.1} parent=5 // pred_fallthru
        _
      %p239 = scmp.le.s32.totalorder 1, %s16
      %p240 = scmp.lt.s32.totalorder %s16, 3
      %p241 = pnand %p239, %p240
      %p242 = pneg %p241
      // Predicated region
      $region45: #{tpu_custom_call.1} parent=5 // pred_check
        _
      $region46: #{tpu_custom_call.1} parent=5 // pred_check_branch
        %244 = sbr.rel (%p241) target = $region48
      $region47: #{tpu_custom_call.1} parent=5 // pred_region
        %s245 = ssub.s32 %s16, 1
        %p246 = scmp.lt.s32.totalorder %s21, 1
        %s247 = scalar_select %p246, %s21, 1
        %s248 = smul.addr %s247, 54
        %s249 = smul.addr %s248, 4
        %s250 = scalar_lea.vmem %s0, %s249
        %p251 = pneg %p42
        %p252 = pneg %p39
        %p253 = pneg %p63
        %p254 = pneg %p60
        %p255 = pneg %p84
        %p256 = pneg %p81
        %p257 = pneg %p105
        %p258 = pneg %p102
        %p259 = pneg %p126
        %p260 = pneg %p123
        %p261 = pneg %p147
        %p262 = pneg %p144
        %p263 = pneg %p168
        %p264 = pneg %p165
        %p265 = pneg %p194
        %p266 = pneg %p191
        %s267 = sand.u32 %s181, 1
        %s268 = scalar_lea.sflag [#allocation4], %s267
        %s269 = sand.u32 %s181, 1
        %s270 = smul.addr %s269, 128
        %s271 = scalar_lea.vmem [#allocation3], %s270
        %p272 = scmp.lt.s32.totalorder %s21, 1
        %s273 = scalar_select %p272, %s21, 1
        %s274 = smul.addr %s273, 54
        %s275 = smul.addr %s274, 4
        %s276 = scalar_lea.vmem %s0, %s275
        %v278 = vld [vmem:[%s276] sm:$0xf]
        %v279 = vld [vmem:[%s276 + $0x4] sm:$0xf]
        %v280 = vld [vmem:[%s276 + $0xc] sm:$0xf]
        %v281 = vld [vmem:[%s276 + $0x10] sm:$0xf]
        %v282 = vld [vmem:[%s276 + $0x18] sm:$0xf]
        %v283 = vld [vmem:[%s276 + $0x1c] sm:$0xf]
        %v284 = vld [vmem:[%s276 + $0x24] sm:$0xf]
        %v285 = vld [vmem:[%s276 + $0x28] sm:$0xf]
        %v286 = vld [vmem:[%s276 + $0x30] sm:$0xf]
        %v287 = vld [vmem:[%s276 + $0x34] sm:$0xf]
        %v288 = vld [vmem:[%s276 + $0x3c] sm:$0xf]
        %v289 = vld [vmem:[%s276 + $0x40] sm:$0xf]
        %v290 = vld [vmem:[%s276 + $0x48] sm:$0xf]
        %v291 = vld [vmem:[%s276 + $0x4c] sm:$0xf]
        %v292 = vld [vmem:[%s276 + $0x54] sm:$0xf]
        %v293 = vld [vmem:[%s276 + $0x58] sm:$0xf]
        %v294 = vld [vmem:[%s276 + $0x60] sm:$0xf]
        %v295 = vld [vmem:[%s276 + $0x64] sm:$0xf]
        %v296 = vld [vmem:[%s276 + $0x6c] sm:$0xf]
        %v297 = vld [vmem:[%s276 + $0x70] sm:$0xf]
        %v298 = vld [vmem:[%s276 + $0x78] sm:$0xf]
        %v299 = vld [vmem:[%s276 + $0x7c] sm:$0xf]
        %v300 = vld [vmem:[%s276 + $0x84] sm:$0xf]
        %v301 = vld [vmem:[%s276 + $0x88] sm:$0xf]
        %v302 = vld [vmem:[%s276 + $0x90] sm:$0xf]
        %v303 = vld [vmem:[%s276 + $0x94] sm:$0xf]
        %v304 = vld [vmem:[%s276 + $0x9c] sm:$0xf]
        %v305 = vld [vmem:[%s276 + $0xa0] sm:$0xf]
        %v306 = vld [vmem:[%s276 + $0xa8] sm:$0xf]
        %v307 = vld [vmem:[%s276 + $0xac] sm:$0xf]
        %v308 = vld [vmem:[%s276 + $0xb4] sm:$0xf]
        %v309 = vld [vmem:[%s276 + $0xb8] sm:$0xf]
        %v310 = vld [vmem:[%s1] sm:$0xf]
        %v311 = vld [vmem:[%s1 + $0x4] sm:$0xf]
        %v312 = vld [vmem:[%s1 + $0x8] sm:$0xf]
        %v313 = vld [vmem:[%s1 + $0xc] sm:$0xf]
        %v314 = vld [vmem:[%s1 + $0x10] sm:$0xf]
        %v315 = vld [vmem:[%s1 + $0x14] sm:$0xf]
        %v316 = vld [vmem:[%s1 + $0x18] sm:$0xf]
        %v317 = vld [vmem:[%s1 + $0x1c] sm:$0xf]
        %v318 = vld [vmem:[%s1 + $0x20] sm:$0xf]
        %v319 = vld [vmem:[%s1 + $0x24] sm:$0xf]
        %v320 = vld [vmem:[%s1 + $0x28] sm:$0xf]
        %v321 = vld [vmem:[%s1 + $0x2c] sm:$0xf]
        %v322 = vld [vmem:[%s1 + $0x30] sm:$0xf]
        %v323 = vld [vmem:[%s1 + $0x34] sm:$0xf]
        %v324 = vld [vmem:[%s1 + $0x38] sm:$0xf]
        %v325 = vld [vmem:[%s1 + $0x3c] sm:$0xf]
        %v326 = vld [vmem:[%s276 + $0x8] sm:$0x1]
        %v327 = vld [vmem:[%s276 + $0x14] sm:$0x1]
        %v328 = vld [vmem:[%s276 + $0x20] sm:$0x1]
        %v329 = vld [vmem:[%s276 + $0x2c] sm:$0x1]
        %v330 = vld [vmem:[%s276 + $0x38] sm:$0x1]
        %v331 = vld [vmem:[%s276 + $0x44] sm:$0x1]
        %v332 = vld [vmem:[%s276 + $0x50] sm:$0x1]
        %v333 = vld [vmem:[%s276 + $0x5c] sm:$0x1]
        %v334 = vld [vmem:[%s276 + $0x68] sm:$0x1]
        %v335 = vld [vmem:[%s276 + $0x74] sm:$0x1]
        %v336 = vld [vmem:[%s276 + $0x80] sm:$0x1]
        %v337 = vld [vmem:[%s276 + $0x8c] sm:$0x1]
        %v338 = vld [vmem:[%s276 + $0x98] sm:$0x1]
        %v339 = vld [vmem:[%s276 + $0xa4] sm:$0x1]
        %v340 = vld [vmem:[%s276 + $0xb0] sm:$0x1]
        %v341 = vld [vmem:[%s276 + $0xbc] sm:$0x1]
        %vm342 = vsmask.f32 3328
        %vm343 = vsmask.f32 7440
        %vm344 = vmor %vm342, %vm343
        %v346 = vshrl.u32 %v278, 16
        %v348 = vrot.slane %v346, 4
        %v349 = vshll.u32 %v278, 16
        %v351 = vrot.slane %v349, 5
        %v352 = vor.u32 %v348, %v351
        %v353 = vrot.slane %v352, 4
        %v355 = vshll.u32 %v279, 16
        %v357 = vrot.slane %v355, 5
        %v358 = vsel %vm344, %v353, %v357
        %v359 = vshrl.u32 %v279, 16
        %v361 = vrot.slane %v359, 4
        %v362 = vor.u32 %v361, %v357
        %v363 = vrot.slane %v362, 4
        %v365 = vshll.u32 %v326, 16
        %v367 = vrot.slane %v365, 5
        %v368 = vsel %vm344, %v363, %v367
        %v370 = vshrl.u32 %v280, 16
        %v372 = vrot.slane %v370, 4
        %v373 = vshll.u32 %v280, 16
        %v375 = vrot.slane %v373, 5
        %v376 = vor.u32 %v372, %v375
        %v377 = vrot.slane %v376, 4
        %v379 = vshll.u32 %v281, 16
        %v381 = vrot.slane %v379, 5
        %v382 = vsel %vm344, %v377, %v381
        %v383 = vshrl.u32 %v281, 16
        %v385 = vrot.slane %v383, 4
        %v386 = vor.u32 %v385, %v381
        %v387 = vrot.slane %v386, 4
        %v389 = vshll.u32 %v327, 16
        %v391 = vrot.slane %v389, 5
        %v392 = vsel %vm344, %v387, %v391
        %v394 = vshrl.u32 %v282, 16
        %v396 = vrot.slane %v394, 4
        %v397 = vshll.u32 %v282, 16
        %v399 = vrot.slane %v397, 5
        %v400 = vor.u32 %v396, %v399
        %v401 = vrot.slane %v400, 4
        %v403 = vshll.u32 %v283, 16
        %v405 = vrot.slane %v403, 5
        %v406 = vsel %vm344, %v401, %v405
        %v407 = vshrl.u32 %v283, 16
        %v409 = vrot.slane %v407, 4
        %v410 = vor.u32 %v409, %v405
        %v411 = vrot.slane %v410, 4
        %v413 = vshll.u32 %v328, 16
        %v415 = vrot.slane %v413, 5
        %v416 = vsel %vm344, %v411, %v415
        %v418 = vshrl.u32 %v284, 16
        %v420 = vrot.slane %v418, 4
        %v421 = vshll.u32 %v284, 16
        %v423 = vrot.slane %v421, 5
        %v424 = vor.u32 %v420, %v423
        %v425 = vrot.slane %v424, 4
        %v427 = vshll.u32 %v285, 16
        %v429 = vrot.slane %v427, 5
        %v430 = vsel %vm344, %v425, %v429
        %v431 = vshrl.u32 %v285, 16
        %v433 = vrot.slane %v431, 4
        %v434 = vor.u32 %v433, %v429
        %v435 = vrot.slane %v434, 4
        %v437 = vshll.u32 %v329, 16
        %v439 = vrot.slane %v437, 5
        %v440 = vsel %vm344, %v435, %v439
        %v442 = vshrl.u32 %v286, 16
        %v444 = vrot.slane %v442, 4
        %v445 = vshll.u32 %v286, 16
        %v447 = vrot.slane %v445, 5
        %v448 = vor.u32 %v444, %v447
        %v449 = vrot.slane %v448, 4
        %v451 = vshll.u32 %v287, 16
        %v453 = vrot.slane %v451, 5
        %v454 = vsel %vm344, %v449, %v453
        %v455 = vshrl.u32 %v287, 16
        %v457 = vrot.slane %v455, 4
        %v458 = vor.u32 %v457, %v453
        %v459 = vrot.slane %v458, 4
        %v461 = vshll.u32 %v330, 16
        %v463 = vrot.slane %v461, 5
        %v464 = vsel %vm344, %v459, %v463
        %v466 = vshrl.u32 %v288, 16
        %v468 = vrot.slane %v466, 4
        %v469 = vshll.u32 %v288, 16
        %v471 = vrot.slane %v469, 5
        %v472 = vor.u32 %v468, %v471
        %v473 = vrot.slane %v472, 4
        %v475 = vshll.u32 %v289, 16
        %v477 = vrot.slane %v475, 5
        %v478 = vsel %vm344, %v473, %v477
        %v479 = vshrl.u32 %v289, 16
        %v481 = vrot.slane %v479, 4
        %v482 = vor.u32 %v481, %v477
        %v483 = vrot.slane %v482, 4
        %v485 = vshll.u32 %v331, 16
        %v487 = vrot.slane %v485, 5
        %v488 = vsel %vm344, %v483, %v487
        %v490 = vshrl.u32 %v290, 16
        %v492 = vrot.slane %v490, 4
        %v493 = vshll.u32 %v290, 16
        %v495 = vrot.slane %v493, 5
        %v496 = vor.u32 %v492, %v495
        %v497 = vrot.slane %v496, 4
        %v499 = vshll.u32 %v291, 16
        %v501 = vrot.slane %v499, 5
        %v502 = vsel %vm344, %v497, %v501
        %v503 = vshrl.u32 %v291, 16
        %v505 = vrot.slane %v503, 4
        %v506 = vor.u32 %v505, %v501
        %v507 = vrot.slane %v506, 4
        %v509 = vshll.u32 %v332, 16
        %v511 = vrot.slane %v509, 5
        %v512 = vsel %vm344, %v507, %v511
        %v514 = vshrl.u32 %v292, 16
        %v516 = vrot.slane %v514, 4
        %v517 = vshll.u32 %v292, 16
        %v519 = vrot.slane %v517, 5
        %v520 = vor.u32 %v516, %v519
        %v521 = vrot.slane %v520, 4
        %v523 = vshll.u32 %v293, 16
        %v525 = vrot.slane %v523, 5
        %v526 = vsel %vm344, %v521, %v525
        %v527 = vshrl.u32 %v293, 16
        %v529 = vrot.slane %v527, 4
        %v530 = vor.u32 %v529, %v525
        %v531 = vrot.slane %v530, 4
        %v533 = vshll.u32 %v333, 16
        %v535 = vrot.slane %v533, 5
        %v536 = vsel %vm344, %v531, %v535
        %v538 = vshrl.u32 %v294, 16
        %v540 = vrot.slane %v538, 4
        %v541 = vshll.u32 %v294, 16
        %v543 = vrot.slane %v541, 5
        %v544 = vor.u32 %v540, %v543
        %v545 = vrot.slane %v544, 4
        %v547 = vshll.u32 %v295, 16
        %v549 = vrot.slane %v547, 5
        %v550 = vsel %vm344, %v545, %v549
        %v551 = vshrl.u32 %v295, 16
        %v553 = vrot.slane %v551, 4
        %v554 = vor.u32 %v553, %v549
        %v555 = vrot.slane %v554, 4
        %v557 = vshll.u32 %v334, 16
        %v559 = vrot.slane %v557, 5
        %v560 = vsel %vm344, %v555, %v559
        %v562 = vshrl.u32 %v296, 16
        %v564 = vrot.slane %v562, 4
        %v565 = vshll.u32 %v296, 16
        %v567 = vrot.slane %v565, 5
        %v568 = vor.u32 %v564, %v567
        %v569 = vrot.slane %v568, 4
        %v571 = vshll.u32 %v297, 16
        %v573 = vrot.slane %v571, 5
        %v574 = vsel %vm344, %v569, %v573
        %v575 = vshrl.u32 %v297, 16
        %v577 = vrot.slane %v575, 4
        %v578 = vor.u32 %v577, %v573
        %v579 = vrot.slane %v578, 4
        %v581 = vshll.u32 %v335, 16
        %v583 = vrot.slane %v581, 5
        %v584 = vsel %vm344, %v579, %v583
        %v586 = vshrl.u32 %v298, 16
        %v588 = vrot.slane %v586, 4
        %v589 = vshll.u32 %v298, 16
        %v591 = vrot.slane %v589, 5
        %v592 = vor.u32 %v588, %v591
        %v593 = vrot.slane %v592, 4
        %v595 = vshll.u32 %v299, 16
        %v597 = vrot.slane %v595, 5
        %v598 = vsel %vm344, %v593, %v597
        %v599 = vshrl.u32 %v299, 16
        %v601 = vrot.slane %v599, 4
        %v602 = vor.u32 %v601, %v597
        %v603 = vrot.slane %v602, 4
        %v605 = vshll.u32 %v336, 16
        %v607 = vrot.slane %v605, 5
        %v608 = vsel %vm344, %v603, %v607
        %v610 = vshrl.u32 %v300, 16
        %v612 = vrot.slane %v610, 4
        %v613 = vshll.u32 %v300, 16
        %v615 = vrot.slane %v613, 5
        %v616 = vor.u32 %v612, %v615
        %v617 = vrot.slane %v616, 4
        %v619 = vshll.u32 %v301, 16
        %v621 = vrot.slane %v619, 5
        %v622 = vsel %vm344, %v617, %v621
        %v623 = vshrl.u32 %v301, 16
        %v625 = vrot.slane %v623, 4
        %v626 = vor.u32 %v625, %v621
        %v627 = vrot.slane %v626, 4
        %v629 = vshll.u32 %v337, 16
        %v631 = vrot.slane %v629, 5
        %v632 = vsel %vm344, %v627, %v631
        %v634 = vshrl.u32 %v302, 16
        %v636 = vrot.slane %v634, 4
        %v637 = vshll.u32 %v302, 16
        %v639 = vrot.slane %v637, 5
        %v640 = vor.u32 %v636, %v639
        %v641 = vrot.slane %v640, 4
        %v643 = vshll.u32 %v303, 16
        %v645 = vrot.slane %v643, 5
        %v646 = vsel %vm344, %v641, %v645
        %v647 = vshrl.u32 %v303, 16
        %v649 = vrot.slane %v647, 4
        %v650 = vor.u32 %v649, %v645
        %v651 = vrot.slane %v650, 4
        %v653 = vshll.u32 %v338, 16
        %v655 = vrot.slane %v653, 5
        %v656 = vsel %vm344, %v651, %v655
        %v658 = vshrl.u32 %v304, 16
        %v660 = vrot.slane %v658, 4
        %v661 = vshll.u32 %v304, 16
        %v663 = vrot.slane %v661, 5
        %v664 = vor.u32 %v660, %v663
        %v665 = vrot.slane %v664, 4
        %v667 = vshll.u32 %v305, 16
        %v669 = vrot.slane %v667, 5
        %v670 = vsel %vm344, %v665, %v669
        %v671 = vshrl.u32 %v305, 16
        %v673 = vrot.slane %v671, 4
        %v674 = vor.u32 %v673, %v669
        %v675 = vrot.slane %v674, 4
        %v677 = vshll.u32 %v339, 16
        %v679 = vrot.slane %v677, 5
        %v680 = vsel %vm344, %v675, %v679
        %v682 = vshrl.u32 %v306, 16
        %v684 = vrot.slane %v682, 4
        %v685 = vshll.u32 %v306, 16
        %v687 = vrot.slane %v685, 5
        %v688 = vor.u32 %v684, %v687
        %v689 = vrot.slane %v688, 4
        %v691 = vshll.u32 %v307, 16
        %v693 = vrot.slane %v691, 5
        %v694 = vsel %vm344, %v689, %v693
        %v695 = vshrl.u32 %v307, 16
        %v697 = vrot.slane %v695, 4
        %v698 = vor.u32 %v697, %v693
        %v699 = vrot.slane %v698, 4
        %v701 = vshll.u32 %v340, 16
        %v703 = vrot.slane %v701, 5
        %v704 = vsel %vm344, %v699, %v703
        %v706 = vshrl.u32 %v308, 16
        %v708 = vrot.slane %v706, 4
        %v709 = vshll.u32 %v308, 16
        %v711 = vrot.slane %v709, 5
        %v712 = vor.u32 %v708, %v711
        %v713 = vrot.slane %v712, 4
        %v715 = vshll.u32 %v309, 16
        %v717 = vrot.slane %v715, 5
        %v718 = vsel %vm344, %v713, %v717
        %v719 = vshrl.u32 %v309, 16
        %v721 = vrot.slane %v719, 4
        %v722 = vor.u32 %v721, %v717
        %v723 = vrot.slane %v722, 4
        %v725 = vshll.u32 %v341, 16
        %v727 = vrot.slane %v725, 5
        %v728 = vsel %vm344, %v723, %v727
        %s729 = scalar_lea.vmem %s1, 64
        %v730 = vld [vmem:[%s729] sm:$0xf]
        %v731 = vld [vmem:[%s729 + $0x4] sm:$0xf]
        %v732 = vld [vmem:[%s729 + $0x8] sm:$0xf]
        %v733 = vld [vmem:[%s729 + $0xc] sm:$0xf]
        %v734 = vld [vmem:[%s729 + $0x10] sm:$0xf]
        %v735 = vld [vmem:[%s729 + $0x14] sm:$0xf]
        %v736 = vld [vmem:[%s729 + $0x18] sm:$0xf]
        %v737 = vld [vmem:[%s729 + $0x1c] sm:$0xf]
        %v738 = vld [vmem:[%s729 + $0x20] sm:$0xf]
        %v739 = vld [vmem:[%s729 + $0x24] sm:$0xf]
        %v740 = vld [vmem:[%s729 + $0x28] sm:$0xf]
        %v741 = vld [vmem:[%s729 + $0x2c] sm:$0xf]
        %v742 = vld [vmem:[%s729 + $0x30] sm:$0xf]
        %v743 = vld [vmem:[%s729 + $0x34] sm:$0xf]
        %v744 = vld [vmem:[%s729 + $0x38] sm:$0xf]
        %v745 = vld [vmem:[%s729 + $0x3c] sm:$0xf]
        %v746 = vunpack.c.l.b16 %v358
        %v747 = vunpack.c.l.b16 %v368
        %v748 = vunpack.c.l.b16 %v382
        %v749 = vunpack.c.l.b16 %v392
        %v750 = vunpack.c.l.b16 %v406
        %v751 = vunpack.c.l.b16 %v416
        %v752 = vunpack.c.l.b16 %v430
        %v753 = vunpack.c.l.b16 %v440
        %v754 = vunpack.c.l.b16 %v454
        %v755 = vunpack.c.l.b16 %v464
        %v756 = vunpack.c.l.b16 %v478
        %v757 = vunpack.c.l.b16 %v488
        %v758 = vunpack.c.l.b16 %v502
        %v759 = vunpack.c.l.b16 %v512
        %v760 = vunpack.c.l.b16 %v526
        %v761 = vunpack.c.l.b16 %v536
        %v762 = vunpack.c.l.b16 %v550
        %v763 = vunpack.c.l.b16 %v560
        %v764 = vunpack.c.l.b16 %v574
        %v765 = vunpack.c.l.b16 %v584
        %v766 = vunpack.c.l.b16 %v598
        %v767 = vunpack.c.l.b16 %v608
        %v768 = vunpack.c.l.b16 %v622
        %v769 = vunpack.c.l.b16 %v632
        %v770 = vunpack.c.l.b16 %v646
        %v771 = vunpack.c.l.b16 %v656
        %v772 = vunpack.c.l.b16 %v670
        %v773 = vunpack.c.l.b16 %v680
        %v774 = vunpack.c.l.b16 %v694
        %v775 = vunpack.c.l.b16 %v704
        %v776 = vunpack.c.l.b16 %v718
        %v777 = vunpack.c.l.b16 %v728
        %v778 = vpack.c.b16 %v747, %v746
        %v779 = vpack.c.b16 %v749, %v748
        %v780 = vpack.c.b16 %v751, %v750
        %v781 = vpack.c.b16 %v753, %v752
        %v782 = vpack.c.b16 %v755, %v754
        %v783 = vpack.c.b16 %v757, %v756
        %v784 = vpack.c.b16 %v759, %v758
        %v785 = vpack.c.b16 %v761, %v760
        %v786 = vpack.c.b16 %v763, %v762
        %v787 = vpack.c.b16 %v765, %v764
        %v788 = vpack.c.b16 %v767, %v766
        %v789 = vpack.c.b16 %v769, %v768
        %v790 = vpack.c.b16 %v771, %v770
        %v791 = vpack.c.b16 %v773, %v772
        %v792 = vpack.c.b16 %v775, %v774
        %v793 = vpack.c.b16 %v777, %v776
        %v826 = vunpack.c.l.b16 %v730
        %v827 = vunpack.c.l.b16 %v731
        %v828 = vunpack.c.l.b16 %v732
        %v829 = vunpack.c.l.b16 %v733
        %v830 = vunpack.c.l.b16 %v734
        %v831 = vunpack.c.l.b16 %v735
        %v832 = vunpack.c.l.b16 %v736
        %v833 = vunpack.c.l.b16 %v737
        %v834 = vunpack.c.l.b16 %v738
        %v835 = vunpack.c.l.b16 %v739
        %v836 = vunpack.c.l.b16 %v740
        %v837 = vunpack.c.l.b16 %v741
        %v838 = vunpack.c.l.b16 %v742
        %v839 = vunpack.c.l.b16 %v743
        %v840 = vunpack.c.l.b16 %v744
        %v841 = vunpack.c.l.b16 %v745
        %v842 = vpack.c.b16 %v827, %v826
        %v843 = vpack.c.b16 %v829, %v828
        %v844 = vpack.c.b16 %v831, %v830
        %v845 = vpack.c.b16 %v833, %v832
        %v846 = vpack.c.b16 %v835, %v834
        %v847 = vpack.c.b16 %v837, %v836
        %v848 = vpack.c.b16 %v839, %v838
        %v849 = vpack.c.b16 %v841, %v840
        %858 = vmatprep.subr.bf16.mxu0 0
        %859 = vmatpush1.bf16.msra.mxu0 %v842
        %860 = vmatprep.subr.bf16.mxu0 0
        %861 = vmatpush1.bf16.msra.mxu0 %v843
        %862 = vmatprep.subr.bf16.mxu0 0
        %863 = vmatpush1.bf16.msra.mxu0 %v844
        %864 = vmatprep.subr.bf16.mxu0 0
        %865 = vmatpush1.bf16.msra.mxu0 %v845
        %866 = vmatprep.subr.bf16.mxu0 0
        %867 = vmatpush1.bf16.msra.mxu0 %v846
        %868 = vmatprep.subr.bf16.mxu0 0
        %869 = vmatpush1.bf16.msra.mxu0 %v847
        %870 = vmatprep.subr.bf16.mxu0 0
        %871 = vmatpush1.bf16.msra.mxu0 %v848
        %872 = vmatprep.subr.bf16.mxu0 0
        %873 = vmatpush1.bf16.msra.mxu0 %v849
        %874 = vmatprep.subr.bf16.mxu0 0
        %875 = vmatpush1.bf16.msra.mxu0 0
        %876 = vmatprep.subr.bf16.mxu0 0
        %877 = vmatpush1.bf16.msra.mxu0 0
        %878 = vmatprep.subr.bf16.mxu0 0
        %879 = vmatpush1.bf16.msra.mxu0 0
        %880 = vmatprep.subr.bf16.mxu0 0
        %881 = vmatpush1.bf16.msra.mxu0 0
        %882 = vmatprep.subr.bf16.mxu0 0
        %883 = vmatpush1.bf16.msra.mxu0 0
        %884 = vmatprep.subr.bf16.mxu0 0
        %885 = vmatpush1.bf16.msra.mxu0 0
        %886 = vmatprep.subr.bf16.mxu0 0
        %887 = vmatpush1.bf16.msra.mxu0 0
        %888 = vmatprep.subr.bf16.mxu0 0
        %889 = vmatpush1.bf16.msra.mxu0 0
        %890 = vmatprep.mubr.bf16.mxu0 0
        %891 = vmatmul.mubr.bf16.gmra.mrb[0].mxu0 %v778
        %v892 = vpop.f32.mrb[0].mxu0
        %v893 = vadd.f32 0.0, %v892
        %v894 = vpop.f32.mrb[0].mxu0
        %v895 = vpop.f32.mrb[0].mxu0
        %v896 = vadd.f32 0.0, %v895
        %v897 = vpop.f32.mrb[0].mxu0
        %898 = vmatprep.mubr.bf16.mxu0 0
        %899 = vmatmul.mubr.bf16.gmra.mrb[0].mxu0 %v779
        %v900 = vpop.f32.mrb[0].mxu0
        %v901 = vadd.f32 0.0, %v900
        %v902 = vpop.f32.mrb[0].mxu0
        %v903 = vpop.f32.mrb[0].mxu0
        %v904 = vadd.f32 0.0, %v903
        %v905 = vpop.f32.mrb[0].mxu0
        %906 = vmatprep.mubr.bf16.mxu0 0
        %907 = vmatmul.mubr.bf16.gmra.mrb[0].mxu0 %v780
        %v908 = vpop.f32.mrb[0].mxu0
        %v909 = vadd.f32 0.0, %v908
        %v910 = vpop.f32.mrb[0].mxu0
        %v911 = vpop.f32.mrb[0].mxu0
        %v912 = vadd.f32 0.0, %v911
        %v913 = vpop.f32.mrb[0].mxu0
        %914 = vmatprep.mubr.bf16.mxu0 0
        %915 = vmatmul.mubr.bf16.gmra.mrb[0].mxu0 %v781
        %v916 = vpop.f32.mrb[0].mxu0
        %v917 = vadd.f32 0.0, %v916
        %v918 = vpop.f32.mrb[0].mxu0
        %v919 = vpop.f32.mrb[0].mxu0
        %v920 = vadd.f32 0.0, %v919
        %v921 = vpop.f32.mrb[0].mxu0
        %922 = vmatprep.mubr.bf16.mxu0 0
        %923 = vmatmul.mubr.bf16.gmra.mrb[0].mxu0 %v782
        %v924 = vpop.f32.mrb[0].mxu0
        %v925 = vadd.f32 0.0, %v924
        %v926 = vpop.f32.mrb[0].mxu0
        %v927 = vpop.f32.mrb[0].mxu0
        %v928 = vadd.f32 0.0, %v927
        %v929 = vpop.f32.mrb[0].mxu0
        %930 = vmatprep.mubr.bf16.mxu0 0
        %931 = vmatmul.mubr.bf16.gmra.mrb[0].mxu0 %v783
        %v932 = vpop.f32.mrb[0].mxu0
        %v933 = vadd.f32 0.0, %v932
        %v934 = vpop.f32.mrb[0].mxu0
        %v935 = vpop.f32.mrb[0].mxu0
        %v936 = vadd.f32 0.0, %v935
        %v937 = vpop.f32.mrb[0].mxu0
        %938 = vmatprep.mubr.bf16.mxu0 0
        %939 = vmatmul.mubr.bf16.gmra.mrb[0].mxu0 %v784
        %v940 = vpop.f32.mrb[0].mxu0
        %v941 = vadd.f32 0.0, %v940
        %v942 = vpop.f32.mrb[0].mxu0
        %v943 = vpop.f32.mrb[0].mxu0
        %v944 = vadd.f32 0.0, %v943
        %v945 = vpop.f32.mrb[0].mxu0
        %946 = vmatprep.mubr.bf16.mxu0 0
        %947 = vmatmul.mubr.bf16.gmra.mrb[0].mxu0 %v785
        %v948 = vpop.f32.mrb[0].mxu0
        %v949 = vadd.f32 0.0, %v948
        %v950 = vpop.f32.mrb[0].mxu0
        %v951 = vpop.f32.mrb[0].mxu0
        %v952 = vadd.f32 0.0, %v951
        %v953 = vpop.f32.mrb[0].mxu0
        %954 = vmatprep.mubr.bf16.mxu0 0
        %955 = vmatmul.mubr.bf16.gmra.mrb[0].mxu0 %v786
        %v956 = vpop.f32.mrb[0].mxu0
        %v957 = vadd.f32 0.0, %v956
        %v958 = vpop.f32.mrb[0].mxu0
        %v959 = vpop.f32.mrb[0].mxu0
        %v960 = vadd.f32 0.0, %v959
        %v961 = vpop.f32.mrb[0].mxu0
        %962 = vmatprep.mubr.bf16.mxu0 0
        %963 = vmatmul.mubr.bf16.gmra.mrb[0].mxu0 %v787
        %v964 = vpop.f32.mrb[0].mxu0
        %v965 = vadd.f32 0.0, %v964
        %v966 = vpop.f32.mrb[0].mxu0
        %v967 = vpop.f32.mrb[0].mxu0
        %v968 = vadd.f32 0.0, %v967
        %v969 = vpop.f32.mrb[0].mxu0
        %970 = vmatprep.mubr.bf16.mxu0 0
        %971 = vmatmul.mubr.bf16.gmra.mrb[0].mxu0 %v788
        %v972 = vpop.f32.mrb[0].mxu0
        %v973 = vadd.f32 0.0, %v972
        %v974 = vpop.f32.mrb[0].mxu0
        %v975 = vpop.f32.mrb[0].mxu0
        %v976 = vadd.f32 0.0, %v975
        %v977 = vpop.f32.mrb[0].mxu0
        %978 = vmatprep.mubr.bf16.mxu0 0
        %979 = vmatmul.mubr.bf16.gmra.mrb[0].mxu0 %v789
        %v980 = vpop.f32.mrb[0].mxu0
        %v981 = vadd.f32 0.0, %v980
        %v982 = vpop.f32.mrb[0].mxu0
        %v983 = vpop.f32.mrb[0].mxu0
        %v984 = vadd.f32 0.0, %v983
        %v985 = vpop.f32.mrb[0].mxu0
        %986 = vmatprep.mubr.bf16.mxu0 0
        %987 = vmatmul.mubr.bf16.gmra.mrb[0].mxu0 %v790
        %v988 = vpop.f32.mrb[0].mxu0
        %v989 = vadd.f32 0.0, %v988
        %v990 = vpop.f32.mrb[0].mxu0
        %v991 = vpop.f32.mrb[0].mxu0
        %v992 = vadd.f32 0.0, %v991
        %v993 = vpop.f32.mrb[0].mxu0
        %994 = vmatprep.mubr.bf16.mxu0 0
        %995 = vmatmul.mubr.bf16.gmra.mrb[0].mxu0 %v791
        %v996 = vpop.f32.mrb[0].mxu0
        %v997 = vadd.f32 0.0, %v996
        %v998 = vpop.f32.mrb[0].mxu0
        %v999 = vpop.f32.mrb[0].mxu0
        %v1000 = vadd.f32 0.0, %v999
        %v1001 = vpop.f32.mrb[0].mxu0
        %1002 = vmatprep.mubr.bf16.mxu0 0
        %1003 = vmatmul.mubr.bf16.gmra.mrb[0].mxu0 %v792
        %v1004 = vpop.f32.mrb[0].mxu0
        %v1005 = vadd.f32 0.0, %v1004
        %v1006 = vpop.f32.mrb[0].mxu0
        %v1007 = vpop.f32.mrb[0].mxu0
        %v1008 = vadd.f32 0.0, %v1007
        %v1009 = vpop.f32.mrb[0].mxu0
        %1010 = vmatprep.mubr.bf16.mxu0 0
        %1011 = vmatmul.mubr.bf16.gmra.mrb[0].mxu0 %v793
        %v1012 = vpop.f32.mrb[0].mxu0
        %v1013 = vadd.f32 0.0, %v1012
        %v1014 = vpop.f32.mrb[0].mxu0
        %v1015 = vpop.f32.mrb[0].mxu0
        %v1016 = vadd.f32 0.0, %v1015
        %v1017 = vpop.f32.mrb[0].mxu0
        %1018 = vdwg.mxu0
        %v1051 = vunpack.c.l.b16 %v278
        %v1052 = vunpack.c.l.b16 %v279
        %v1053 = vunpack.c.l.b16 %v280
        %v1054 = vunpack.c.l.b16 %v281
        %v1055 = vunpack.c.l.b16 %v282
        %v1056 = vunpack.c.l.b16 %v283
        %v1057 = vunpack.c.l.b16 %v284
        %v1058 = vunpack.c.l.b16 %v285
        %v1059 = vunpack.c.l.b16 %v286
        %v1060 = vunpack.c.l.b16 %v287
        %v1061 = vunpack.c.l.b16 %v288
        %v1062 = vunpack.c.l.b16 %v289
        %v1063 = vunpack.c.l.b16 %v290
        %v1064 = vunpack.c.l.b16 %v291
        %v1065 = vunpack.c.l.b16 %v292
        %v1066 = vunpack.c.l.b16 %v293
        %v1067 = vunpack.c.l.b16 %v294
        %v1068 = vunpack.c.l.b16 %v295
        %v1069 = vunpack.c.l.b16 %v296
        %v1070 = vunpack.c.l.b16 %v297
        %v1071 = vunpack.c.l.b16 %v298
        %v1072 = vunpack.c.l.b16 %v299
        %v1073 = vunpack.c.l.b16 %v300
        %v1074 = vunpack.c.l.b16 %v301
        %v1075 = vunpack.c.l.b16 %v302
        %v1076 = vunpack.c.l.b16 %v303
        %v1077 = vunpack.c.l.b16 %v304
        %v1078 = vunpack.c.l.b16 %v305
        %v1079 = vunpack.c.l.b16 %v306
        %v1080 = vunpack.c.l.b16 %v307
        %v1081 = vunpack.c.l.b16 %v308
        %v1082 = vunpack.c.l.b16 %v309
        %v1083 = vpack.c.b16 %v1052, %v1051
        %v1084 = vpack.c.b16 %v1054, %v1053
        %v1085 = vpack.c.b16 %v1056, %v1055
        %v1086 = vpack.c.b16 %v1058, %v1057
        %v1087 = vpack.c.b16 %v1060, %v1059
        %v1088 = vpack.c.b16 %v1062, %v1061
        %v1089 = vpack.c.b16 %v1064, %v1063
        %v1090 = vpack.c.b16 %v1066, %v1065
        %v1091 = vpack.c.b16 %v1068, %v1067
        %v1092 = vpack.c.b16 %v1070, %v1069
        %v1093 = vpack.c.b16 %v1072, %v1071
        %v1094 = vpack.c.b16 %v1074, %v1073
        %v1095 = vpack.c.b16 %v1076, %v1075
        %v1096 = vpack.c.b16 %v1078, %v1077
        %v1097 = vpack.c.b16 %v1080, %v1079
        %v1098 = vpack.c.b16 %v1082, %v1081
        %v1131 = vunpack.c.l.b16 %v310
        %v1132 = vunpack.c.l.b16 %v311
        %v1133 = vunpack.c.l.b16 %v312
        %v1134 = vunpack.c.l.b16 %v313
        %v1135 = vunpack.c.l.b16 %v314
        %v1136 = vunpack.c.l.b16 %v315
        %v1137 = vunpack.c.l.b16 %v316
        %v1138 = vunpack.c.l.b16 %v317
        %v1139 = vunpack.c.l.b16 %v318
        %v1140 = vunpack.c.l.b16 %v319
        %v1141 = vunpack.c.l.b16 %v320
        %v1142 = vunpack.c.l.b16 %v321
        %v1143 = vunpack.c.l.b16 %v322
        %v1144 = vunpack.c.l.b16 %v323
        %v1145 = vunpack.c.l.b16 %v324
        %v1146 = vunpack.c.l.b16 %v325
        %v1147 = vpack.c.b16 %v1132, %v1131
        %v1148 = vpack.c.b16 %v1134, %v1133
        %v1149 = vpack.c.b16 %v1136, %v1135
        %v1150 = vpack.c.b16 %v1138, %v1137
        %v1151 = vpack.c.b16 %v1140, %v1139
        %v1152 = vpack.c.b16 %v1142, %v1141
        %v1153 = vpack.c.b16 %v1144, %v1143
        %v1154 = vpack.c.b16 %v1146, %v1145
        %1163 = vmatprep.subr.bf16.mxu0 0
        %1164 = vmatpush1.bf16.msra.mxu0 %v1147
        %1165 = vmatprep.subr.bf16.mxu0 0
        %1166 = vmatpush1.bf16.msra.mxu0 %v1148
        %1167 = vmatprep.subr.bf16.mxu0 0
        %1168 = vmatpush1.bf16.msra.mxu0 %v1149
        %1169 = vmatprep.subr.bf16.mxu0 0
        %1170 = vmatpush1.bf16.msra.mxu0 %v1150
        %1171 = vmatprep.subr.bf16.mxu0 0
        %1172 = vmatpush1.bf16.msra.mxu0 %v1151
        %1173 = vmatprep.subr.bf16.mxu0 0
        %1174 = vmatpush1.bf16.msra.mxu0 %v1152
        %1175 = vmatprep.subr.bf16.mxu0 0
        %1176 = vmatpush1.bf16.msra.mxu0 %v1153
        %1177 = vmatprep.subr.bf16.mxu0 0
        %1178 = vmatpush1.bf16.msra.mxu0 %v1154
        %1179 = vmatprep.subr.bf16.mxu0 0
        %1180 = vmatpush1.bf16.msra.mxu0 0
        %1181 = vmatprep.subr.bf16.mxu0 0
        %1182 = vmatpush1.bf16.msra.mxu0 0
        %1183 = vmatprep.subr.bf16.mxu0 0
        %1184 = vmatpush1.bf16.msra.mxu0 0
        %1185 = vmatprep.subr.bf16.mxu0 0
        %1186 = vmatpush1.bf16.msra.mxu0 0
        %1187 = vmatprep.subr.bf16.mxu0 0
        %1188 = vmatpush1.bf16.msra.mxu0 0
        %1189 = vmatprep.subr.bf16.mxu0 0
        %1190 = vmatpush1.bf16.msra.mxu0 0
        %1191 = vmatprep.subr.bf16.mxu0 0
        %1192 = vmatpush1.bf16.msra.mxu0 0
        %1193 = vmatprep.subr.bf16.mxu0 0
        %1194 = vmatpush1.bf16.msra.mxu0 0
        %1195 = vmatprep.mubr.bf16.mxu0 0
        %1196 = vmatmul.mubr.bf16.gmra.mrb[0].mxu0 %v1083
        %v1197 = vpop.f32.mrb[0].mxu0
        %v1198 = vadd.f32 %v893, %v1197
        %v1199 = vpop.f32.mrb[0].mxu0
        %v1200 = vpop.f32.mrb[0].mxu0
        %v1201 = vadd.f32 %v896, %v1200
        %v1202 = vpop.f32.mrb[0].mxu0
        %1203 = vmatprep.mubr.bf16.mxu0 0
        %1204 = vmatmul.mubr.bf16.gmra.mrb[0].mxu0 %v1084
        %v1205 = vpop.f32.mrb[0].mxu0
        %v1206 = vadd.f32 %v901, %v1205
        %v1207 = vpop.f32.mrb[0].mxu0
        %v1208 = vpop.f32.mrb[0].mxu0
        %v1209 = vadd.f32 %v904, %v1208
        %v1210 = vpop.f32.mrb[0].mxu0
        %1211 = vmatprep.mubr.bf16.mxu0 0
        %1212 = vmatmul.mubr.bf16.gmra.mrb[0].mxu0 %v1085
        %v1213 = vpop.f32.mrb[0].mxu0
        %v1214 = vadd.f32 %v909, %v1213
        %v1215 = vpop.f32.mrb[0].mxu0
        %v1216 = vpop.f32.mrb[0].mxu0
        %v1217 = vadd.f32 %v912, %v1216
        %v1218 = vpop.f32.mrb[0].mxu0
        %1219 = vmatprep.mubr.bf16.mxu0 0
        %1220 = vmatmul.mubr.bf16.gmra.mrb[0].mxu0 %v1086
        %v1221 = vpop.f32.mrb[0].mxu0
        %v1222 = vadd.f32 %v917, %v1221
        %v1223 = vpop.f32.mrb[0].mxu0
        %v1224 = vpop.f32.mrb[0].mxu0
        %v1225 = vadd.f32 %v920, %v1224
        %v1226 = vpop.f32.mrb[0].mxu0
        %1227 = vmatprep.mubr.bf16.mxu0 0
        %1228 = vmatmul.mubr.bf16.gmra.mrb[0].mxu0 %v1087
        %v1229 = vpop.f32.mrb[0].mxu0
        %v1230 = vadd.f32 %v925, %v1229
        %v1231 = vpop.f32.mrb[0].mxu0
        %v1232 = vpop.f32.mrb[0].mxu0
        %v1233 = vadd.f32 %v928, %v1232
        %v1234 = vpop.f32.mrb[0].mxu0
        %1235 = vmatprep.mubr.bf16.mxu0 0
        %1236 = vmatmul.mubr.bf16.gmra.mrb[0].mxu0 %v1088
        %v1237 = vpop.f32.mrb[0].mxu0
        %v1238 = vadd.f32 %v933, %v1237
        %v1239 = vpop.f32.mrb[0].mxu0
        %v1240 = vpop.f32.mrb[0].mxu0
        %v1241 = vadd.f32 %v936, %v1240
        %v1242 = vpop.f32.mrb[0].mxu0
        %1243 = vmatprep.mubr.bf16.mxu0 0
        %1244 = vmatmul.mubr.bf16.gmra.mrb[0].mxu0 %v1089
        %v1245 = vpop.f32.mrb[0].mxu0
        %v1246 = vadd.f32 %v941, %v1245
        %v1247 = vpop.f32.mrb[0].mxu0
        %v1248 = vpop.f32.mrb[0].mxu0
        %v1249 = vadd.f32 %v944, %v1248
        %v1250 = vpop.f32.mrb[0].mxu0
        %1251 = vmatprep.mubr.bf16.mxu0 0
        %1252 = vmatmul.mubr.bf16.gmra.mrb[0].mxu0 %v1090
        %v1253 = vpop.f32.mrb[0].mxu0
        %v1254 = vadd.f32 %v949, %v1253
        %v1255 = vpop.f32.mrb[0].mxu0
        %v1256 = vpop.f32.mrb[0].mxu0
        %v1257 = vadd.f32 %v952, %v1256
        %v1258 = vpop.f32.mrb[0].mxu0
        %1259 = vmatprep.mubr.bf16.mxu0 0
        %1260 = vmatmul.mubr.bf16.gmra.mrb[0].mxu0 %v1091
        %v1261 = vpop.f32.mrb[0].mxu0
        %v1262 = vadd.f32 %v957, %v1261
        %v1263 = vpop.f32.mrb[0].mxu0
        %v1264 = vpop.f32.mrb[0].mxu0
        %v1265 = vadd.f32 %v960, %v1264
        %v1266 = vpop.f32.mrb[0].mxu0
        %1267 = vmatprep.mubr.bf16.mxu0 0
        %1268 = vmatmul.mubr.bf16.gmra.mrb[0].mxu0 %v1092
        %v1269 = vpop.f32.mrb[0].mxu0
        %v1270 = vadd.f32 %v965, %v1269
        %v1271 = vpop.f32.mrb[0].mxu0
        %v1272 = vpop.f32.mrb[0].mxu0
        %v1273 = vadd.f32 %v968, %v1272
        %v1274 = vpop.f32.mrb[0].mxu0
        %1275 = vmatprep.mubr.bf16.mxu0 0
        %1276 = vmatmul.mubr.bf16.gmra.mrb[0].mxu0 %v1093
        %v1277 = vpop.f32.mrb[0].mxu0
        %v1278 = vadd.f32 %v973, %v1277
        %v1279 = vpop.f32.mrb[0].mxu0
        %v1280 = vpop.f32.mrb[0].mxu0
        %v1281 = vadd.f32 %v976, %v1280
        %v1282 = vpop.f32.mrb[0].mxu0
        %1283 = vmatprep.mubr.bf16.mxu0 0
        %1284 = vmatmul.mubr.bf16.gmra.mrb[0].mxu0 %v1094
        %v1285 = vpop.f32.mrb[0].mxu0
        %v1286 = vadd.f32 %v981, %v1285
        %v1287 = vpop.f32.mrb[0].mxu0
        %v1288 = vpop.f32.mrb[0].mxu0
        %v1289 = vadd.f32 %v984, %v1288
        %v1290 = vpop.f32.mrb[0].mxu0
        %1291 = vmatprep.mubr.bf16.mxu0 0
        %1292 = vmatmul.mubr.bf16.gmra.mrb[0].mxu0 %v1095
        %v1293 = vpop.f32.mrb[0].mxu0
        %v1294 = vadd.f32 %v989, %v1293
        %v1295 = vpop.f32.mrb[0].mxu0
        %v1296 = vpop.f32.mrb[0].mxu0
        %v1297 = vadd.f32 %v992, %v1296
        %v1298 = vpop.f32.mrb[0].mxu0
        %1299 = vmatprep.mubr.bf16.mxu0 0
        %1300 = vmatmul.mubr.bf16.gmra.mrb[0].mxu0 %v1096
        %v1301 = vpop.f32.mrb[0].mxu0
        %v1302 = vadd.f32 %v997, %v1301
        %v1303 = vpop.f32.mrb[0].mxu0
        %v1304 = vpop.f32.mrb[0].mxu0
        %v1305 = vadd.f32 %v1000, %v1304
        %v1306 = vpop.f32.mrb[0].mxu0
        %1307 = vmatprep.mubr.bf16.mxu0 0
        %1308 = vmatmul.mubr.bf16.gmra.mrb[0].mxu0 %v1097
        %v1309 = vpop.f32.mrb[0].mxu0
        %v1310 = vadd.f32 %v1005, %v1309
        %v1311 = vpop.f32.mrb[0].mxu0
        %v1312 = vpop.f32.mrb[0].mxu0
        %v1313 = vadd.f32 %v1008, %v1312
        %v1314 = vpop.f32.mrb[0].mxu0
        %1315 = vmatprep.mubr.bf16.mxu0 0
        %1316 = vmatmul.mubr.bf16.gmra.mrb[0].mxu0 %v1098
        %v1317 = vpop.f32.mrb[0].mxu0
        %v1318 = vadd.f32 %v1013, %v1317
        %v1319 = vpop.f32.mrb[0].mxu0
        %v1320 = vpop.f32.mrb[0].mxu0
        %v1321 = vadd.f32 %v1016, %v1320
        %v1322 = vpop.f32.mrb[0].mxu0
        %1323 = vdwg.mxu0
        %v1324 = vld [vmem:[%s276] sm:$0xe]
        %v1325 = vld [vmem:[%s276 + $0xc] sm:$0xe]
        %v1326 = vld [vmem:[%s276 + $0x18] sm:$0xe]
        %v1327 = vld [vmem:[%s276 + $0x24] sm:$0xe]
        %v1328 = vld [vmem:[%s276 + $0x30] sm:$0xe]
        %v1329 = vld [vmem:[%s276 + $0x3c] sm:$0xe]
        %v1330 = vld [vmem:[%s276 + $0x48] sm:$0xe]
        %v1331 = vld [vmem:[%s276 + $0x54] sm:$0xe]
        %v1332 = vld [vmem:[%s276 + $0x60] sm:$0xe]
        %v1333 = vld [vmem:[%s276 + $0x6c] sm:$0xe]
        %v1334 = vld [vmem:[%s276 + $0x78] sm:$0xe]
        %v1335 = vld [vmem:[%s276 + $0x84] sm:$0xe]
        %v1336 = vld [vmem:[%s276 + $0x90] sm:$0xe]
        %v1337 = vld [vmem:[%s276 + $0x9c] sm:$0xe]
        %v1338 = vld [vmem:[%s276 + $0xa8] sm:$0xe]
        %v1339 = vld [vmem:[%s276 + $0xb4] sm:$0xe]
        %vm1372 = vcmask 1042432
        %vm1373 = vcmask 1046532
        %vm1374 = vmor %vm1372, %vm1373
        %v1375 = vrot.slane %v1324, 5
        %v1376 = vrot.slane %v1375, 4
        %v1377 = vrot.slane %v279, 5
        %v1378 = vsel %vm1374, %v1376, %v1377
        %v1379 = vrot.slane %v1377, 4
        %v1380 = vrot.slane %v326, 5
        %v1381 = vsel %vm1374, %v1379, %v1380
        %v1382 = vrot.slane %v1325, 5
        %v1383 = vrot.slane %v1382, 4
        %v1384 = vrot.slane %v281, 5
        %v1385 = vsel %vm1374, %v1383, %v1384
        %v1386 = vrot.slane %v1384, 4
        %v1387 = vrot.slane %v327, 5
        %v1388 = vsel %vm1374, %v1386, %v1387
        %v1389 = vrot.slane %v1326, 5
        %v1390 = vrot.slane %v1389, 4
        %v1391 = vrot.slane %v283, 5
        %v1392 = vsel %vm1374, %v1390, %v1391
        %v1393 = vrot.slane %v1391, 4
        %v1394 = vrot.slane %v328, 5
        %v1395 = vsel %vm1374, %v1393, %v1394
        %v1396 = vrot.slane %v1327, 5
        %v1397 = vrot.slane %v1396, 4
        %v1398 = vrot.slane %v285, 5
        %v1399 = vsel %vm1374, %v1397, %v1398
        %v1400 = vrot.slane %v1398, 4
        %v1401 = vrot.slane %v329, 5
        %v1402 = vsel %vm1374, %v1400, %v1401
        %v1403 = vrot.slane %v1328, 5
        %v1404 = vrot.slane %v1403, 4
        %v1405 = vrot.slane %v287, 5
        %v1406 = vsel %vm1374, %v1404, %v1405
        %v1407 = vrot.slane %v1405, 4
        %v1408 = vrot.slane %v330, 5
        %v1409 = vsel %vm1374, %v1407, %v1408
        %v1410 = vrot.slane %v1329, 5
        %v1411 = vrot.slane %v1410, 4
        %v1412 = vrot.slane %v289, 5
        %v1413 = vsel %vm1374, %v1411, %v1412
        %v1414 = vrot.slane %v1412, 4
        %v1415 = vrot.slane %v331, 5
        %v1416 = vsel %vm1374, %v1414, %v1415
        %v1417 = vrot.slane %v1330, 5
        %v1418 = vrot.slane %v1417, 4
        %v1419 = vrot.slane %v291, 5
        %v1420 = vsel %vm1374, %v1418, %v1419
        %v1421 = vrot.slane %v1419, 4
        %v1422 = vrot.slane %v332, 5
        %v1423 = vsel %vm1374, %v1421, %v1422
        %v1424 = vrot.slane %v1331, 5
        %v1425 = vrot.slane %v1424, 4
        %v1426 = vrot.slane %v293, 5
        %v1427 = vsel %vm1374, %v1425, %v1426
        %v1428 = vrot.slane %v1426, 4
        %v1429 = vrot.slane %v333, 5
        %v1430 = vsel %vm1374, %v1428, %v1429
        %v1431 = vrot.slane %v1332, 5
        %v1432 = vrot.slane %v1431, 4
        %v1433 = vrot.slane %v295, 5
        %v1434 = vsel %vm1374, %v1432, %v1433
        %v1435 = vrot.slane %v1433, 4
        %v1436 = vrot.slane %v334, 5
        %v1437 = vsel %vm1374, %v1435, %v1436
        %v1438 = vrot.slane %v1333, 5
        %v1439 = vrot.slane %v1438, 4
        %v1440 = vrot.slane %v297, 5
        %v1441 = vsel %vm1374, %v1439, %v1440
        %v1442 = vrot.slane %v1440, 4
        %v1443 = vrot.slane %v335, 5
        %v1444 = vsel %vm1374, %v1442, %v1443
        %v1445 = vrot.slane %v1334, 5
        %v1446 = vrot.slane %v1445, 4
        %v1447 = vrot.slane %v299, 5
        %v1448 = vsel %vm1374, %v1446, %v1447
        %v1449 = vrot.slane %v1447, 4
        %v1450 = vrot.slane %v336, 5
        %v1451 = vsel %vm1374, %v1449, %v1450
        %v1452 = vrot.slane %v1335, 5
        %v1453 = vrot.slane %v1452, 4
        %v1454 = vrot.slane %v301, 5
        %v1455 = vsel %vm1374, %v1453, %v1454
        %v1456 = vrot.slane %v1454, 4
        %v1457 = vrot.slane %v337, 5
        %v1458 = vsel %vm1374, %v1456, %v1457
        %v1459 = vrot.slane %v1336, 5
        %v1460 = vrot.slane %v1459, 4
        %v1461 = vrot.slane %v303, 5
        %v1462 = vsel %vm1374, %v1460, %v1461
        %v1463 = vrot.slane %v1461, 4
        %v1464 = vrot.slane %v338, 5
        %v1465 = vsel %vm1374, %v1463, %v1464
        %v1466 = vrot.slane %v1337, 5
        %v1467 = vrot.slane %v1466, 4
        %v1468 = vrot.slane %v305, 5
        %v1469 = vsel %vm1374, %v1467, %v1468
        %v1470 = vrot.slane %v1468, 4
        %v1471 = vrot.slane %v339, 5
        %v1472 = vsel %vm1374, %v1470, %v1471
        %v1473 = vrot.slane %v1338, 5
        %v1474 = vrot.slane %v1473, 4
        %v1475 = vrot.slane %v307, 5
        %v1476 = vsel %vm1374, %v1474, %v1475
        %v1477 = vrot.slane %v1475, 4
        %v1478 = vrot.slane %v340, 5
        %v1479 = vsel %vm1374, %v1477, %v1478
        %v1480 = vrot.slane %v1339, 5
        %v1481 = vrot.slane %v1480, 4
        %v1482 = vrot.slane %v309, 5
        %v1483 = vsel %vm1374, %v1481, %v1482
        %v1484 = vrot.slane %v1482, 4
        %v1485 = vrot.slane %v341, 5
        %v1486 = vsel %vm1374, %v1484, %v1485
        %s1487 = scalar_lea.vmem %s1, 128
        %v1488 = vld [vmem:[%s1487] sm:$0xf]
        %v1489 = vld [vmem:[%s1487 + $0x4] sm:$0xf]
        %v1490 = vld [vmem:[%s1487 + $0x8] sm:$0xf]
        %v1491 = vld [vmem:[%s1487 + $0xc] sm:$0xf]
        %v1492 = vld [vmem:[%s1487 + $0x10] sm:$0xf]
        %v1493 = vld [vmem:[%s1487 + $0x14] sm:$0xf]
        %v1494 = vld [vmem:[%s1487 + $0x18] sm:$0xf]
        %v1495 = vld [vmem:[%s1487 + $0x1c] sm:$0xf]
        %v1496 = vld [vmem:[%s1487 + $0x20] sm:$0xf]
        %v1497 = vld [vmem:[%s1487 + $0x24] sm:$0xf]
        %v1498 = vld [vmem:[%s1487 + $0x28] sm:$0xf]
        %v1499 = vld [vmem:[%s1487 + $0x2c] sm:$0xf]
        %v1500 = vld [vmem:[%s1487 + $0x30] sm:$0xf]
        %v1501 = vld [vmem:[%s1487 + $0x34] sm:$0xf]
        %v1502 = vld [vmem:[%s1487 + $0x38] sm:$0xf]
        %v1503 = vld [vmem:[%s1487 + $0x3c] sm:$0xf]
        %v1504 = vunpack.c.l.b16 %v1378
        %v1505 = vunpack.c.l.b16 %v1381
        %v1506 = vunpack.c.l.b16 %v1385
        %v1507 = vunpack.c.l.b16 %v1388
        %v1508 = vunpack.c.l.b16 %v1392
        %v1509 = vunpack.c.l.b16 %v1395
        %v1510 = vunpack.c.l.b16 %v1399
        %v1511 = vunpack.c.l.b16 %v1402
        %v1512 = vunpack.c.l.b16 %v1406
        %v1513 = vunpack.c.l.b16 %v1409
        %v1514 = vunpack.c.l.b16 %v1413
        %v1515 = vunpack.c.l.b16 %v1416
        %v1516 = vunpack.c.l.b16 %v1420
        %v1517 = vunpack.c.l.b16 %v1423
        %v1518 = vunpack.c.l.b16 %v1427
        %v1519 = vunpack.c.l.b16 %v1430
        %v1520 = vunpack.c.l.b16 %v1434
        %v1521 = vunpack.c.l.b16 %v1437
        %v1522 = vunpack.c.l.b16 %v1441
        %v1523 = vunpack.c.l.b16 %v1444
        %v1524 = vunpack.c.l.b16 %v1448
        %v1525 = vunpack.c.l.b16 %v1451
        %v1526 = vunpack.c.l.b16 %v1455
        %v1527 = vunpack.c.l.b16 %v1458
        %v1528 = vunpack.c.l.b16 %v1462
        %v1529 = vunpack.c.l.b16 %v1465
        %v1530 = vunpack.c.l.b16 %v1469
        %v1531 = vunpack.c.l.b16 %v1472
        %v1532 = vunpack.c.l.b16 %v1476
        %v1533 = vunpack.c.l.b16 %v1479
        %v1534 = vunpack.c.l.b16 %v1483
        %v1535 = vunpack.c.l.b16 %v1486
        %v1536 = vpack.c.b16 %v1505, %v1504
        %v1537 = vpack.c.b16 %v1507, %v1506
        %v1538 = vpack.c.b16 %v1509, %v1508
        %v1539 = vpack.c.b16 %v1511, %v1510
        %v1540 = vpack.c.b16 %v1513, %v1512
        %v1541 = vpack.c.b16 %v1515, %v1514
        %v1542 = vpack.c.b16 %v1517, %v1516
        %v1543 = vpack.c.b16 %v1519, %v1518
        %v1544 = vpack.c.b16 %v1521, %v1520
        %v1545 = vpack.c.b16 %v1523, %v1522
        %v1546 = vpack.c.b16 %v1525, %v1524
        %v1547 = vpack.c.b16 %v1527, %v1526
        %v1548 = vpack.c.b16 %v1529, %v1528
        %v1549 = vpack.c.b16 %v1531, %v1530
        %v1550 = vpack.c.b16 %v1533, %v1532
        %v1551 = vpack.c.b16 %v1535, %v1534
        %v1584 = vunpack.c.l.b16 %v1488
        %v1585 = vunpack.c.l.b16 %v1489
        %v1586 = vunpack.c.l.b16 %v1490
        %v1587 = vunpack.c.l.b16 %v1491
        %v1588 = vunpack.c.l.b16 %v1492
        %v1589 = vunpack.c.l.b16 %v1493
        %v1590 = vunpack.c.l.b16 %v1494
        %v1591 = vunpack.c.l.b16 %v1495
        %v1592 = vunpack.c.l.b16 %v1496
        %v1593 = vunpack.c.l.b16 %v1497
        %v1594 = vunpack.c.l.b16 %v1498
        %v1595 = vunpack.c.l.b16 %v1499
        %v1596 = vunpack.c.l.b16 %v1500
        %v1597 = vunpack.c.l.b16 %v1501
        %v1598 = vunpack.c.l.b16 %v1502
        %v1599 = vunpack.c.l.b16 %v1503
        %v1600 = vpack.c.b16 %v1585, %v1584
        %v1601 = vpack.c.b16 %v1587, %v1586
        %v1602 = vpack.c.b16 %v1589, %v1588
        %v1603 = vpack.c.b16 %v1591, %v1590
        %v1604 = vpack.c.b16 %v1593, %v1592
        %v1605 = vpack.c.b16 %v1595, %v1594
        %v1606 = vpack.c.b16 %v1597, %v1596
        %v1607 = vpack.c.b16 %v1599, %v1598
        %1616 = vmatprep.subr.bf16.mxu0 0
        %1617 = vmatpush1.bf16.msra.mxu0 %v1600
        %1618 = vmatprep.subr.bf16.mxu0 0
        %1619 = vmatpush1.bf16.msra.mxu0 %v1601
        %1620 = vmatprep.subr.bf16.mxu0 0
        %1621 = vmatpush1.bf16.msra.mxu0 %v1602
        %1622 = vmatprep.subr.bf16.mxu0 0
        %1623 = vmatpush1.bf16.msra.mxu0 %v1603
        %1624 = vmatprep.subr.bf16.mxu0 0
        %1625 = vmatpush1.bf16.msra.mxu0 %v1604
        %1626 = vmatprep.subr.bf16.mxu0 0
        %1627 = vmatpush1.bf16.msra.mxu0 %v1605
        %1628 = vmatprep.subr.bf16.mxu0 0
        %1629 = vmatpush1.bf16.msra.mxu0 %v1606
        %1630 = vmatprep.subr.bf16.mxu0 0
        %1631 = vmatpush1.bf16.msra.mxu0 %v1607
        %1632 = vmatprep.subr.bf16.mxu0 0
        %1633 = vmatpush1.bf16.msra.mxu0 0
        %1634 = vmatprep.subr.bf16.mxu0 0
        %1635 = vmatpush1.bf16.msra.mxu0 0
        %1636 = vmatprep.subr.bf16.mxu0 0
        %1637 = vmatpush1.bf16.msra.mxu0 0
        %1638 = vmatprep.subr.bf16.mxu0 0
        %1639 = vmatpush1.bf16.msra.mxu0 0
        %1640 = vmatprep.subr.bf16.mxu0 0
        %1641 = vmatpush1.bf16.msra.mxu0 0
        %1642 = vmatprep.subr.bf16.mxu0 0
        %1643 = vmatpush1.bf16.msra.mxu0 0
        %1644 = vmatprep.subr.bf16.mxu0 0
        %1645 = vmatpush1.bf16.msra.mxu0 0
        %1646 = vmatprep.subr.bf16.mxu0 0
        %1647 = vmatpush1.bf16.msra.mxu0 0
        %1648 = vmatprep.mubr.bf16.mxu0 0
        %1649 = vmatmul.mubr.bf16.gmra.mrb[0].mxu0 %v1536
        %v1650 = vpop.f32.mrb[0].mxu0
        %v1651 = vadd.f32 0.0, %v1650
        %v1652 = vpop.f32.mrb[0].mxu0
        %v1653 = vpop.f32.mrb[0].mxu0
        %v1654 = vadd.f32 0.0, %v1653
        %v1655 = vpop.f32.mrb[0].mxu0
        %1656 = vmatprep.mubr.bf16.mxu0 0
        %1657 = vmatmul.mubr.bf16.gmra.mrb[0].mxu0 %v1537
        %v1658 = vpop.f32.mrb[0].mxu0
        %v1659 = vadd.f32 0.0, %v1658
        %v1660 = vpop.f32.mrb[0].mxu0
        %v1661 = vpop.f32.mrb[0].mxu0
        %v1662 = vadd.f32 0.0, %v1661
        %v1663 = vpop.f32.mrb[0].mxu0
        %1664 = vmatprep.mubr.bf16.mxu0 0
        %1665 = vmatmul.mubr.bf16.gmra.mrb[0].mxu0 %v1538
        %v1666 = vpop.f32.mrb[0].mxu0
        %v1667 = vadd.f32 0.0, %v1666
        %v1668 = vpop.f32.mrb[0].mxu0
        %v1669 = vpop.f32.mrb[0].mxu0
        %v1670 = vadd.f32 0.0, %v1669
        %v1671 = vpop.f32.mrb[0].mxu0
        %1672 = vmatprep.mubr.bf16.mxu0 0
        %1673 = vmatmul.mubr.bf16.gmra.mrb[0].mxu0 %v1539
        %v1674 = vpop.f32.mrb[0].mxu0
        %v1675 = vadd.f32 0.0, %v1674
        %v1676 = vpop.f32.mrb[0].mxu0
        %v1677 = vpop.f32.mrb[0].mxu0
        %v1678 = vadd.f32 0.0, %v1677
        %v1679 = vpop.f32.mrb[0].mxu0
        %1680 = vmatprep.mubr.bf16.mxu0 0
        %1681 = vmatmul.mubr.bf16.gmra.mrb[0].mxu0 %v1540
        %v1682 = vpop.f32.mrb[0].mxu0
        %v1683 = vadd.f32 0.0, %v1682
        %v1684 = vpop.f32.mrb[0].mxu0
        %v1685 = vpop.f32.mrb[0].mxu0
        %v1686 = vadd.f32 0.0, %v1685
        %v1687 = vpop.f32.mrb[0].mxu0
        %1688 = vmatprep.mubr.bf16.mxu0 0
        %1689 = vmatmul.mubr.bf16.gmra.mrb[0].mxu0 %v1541
        %v1690 = vpop.f32.mrb[0].mxu0
        %v1691 = vadd.f32 0.0, %v1690
        %v1692 = vpop.f32.mrb[0].mxu0
        %v1693 = vpop.f32.mrb[0].mxu0
        %v1694 = vadd.f32 0.0, %v1693
        %v1695 = vpop.f32.mrb[0].mxu0
        %1696 = vmatprep.mubr.bf16.mxu0 0
        %1697 = vmatmul.mubr.bf16.gmra.mrb[0].mxu0 %v1542
        %v1698 = vpop.f32.mrb[0].mxu0
        %v1699 = vadd.f32 0.0, %v1698
        %v1700 = vpop.f32.mrb[0].mxu0
        %v1701 = vpop.f32.mrb[0].mxu0
        %v1702 = vadd.f32 0.0, %v1701
        %v1703 = vpop.f32.mrb[0].mxu0
        %1704 = vmatprep.mubr.bf16.mxu0 0
        %1705 = vmatmul.mubr.bf16.gmra.mrb[0].mxu0 %v1543
        %v1706 = vpop.f32.mrb[0].mxu0
        %v1707 = vadd.f32 0.0, %v1706
        %v1708 = vpop.f32.mrb[0].mxu0
        %v1709 = vpop.f32.mrb[0].mxu0
        %v1710 = vadd.f32 0.0, %v1709
        %v1711 = vpop.f32.mrb[0].mxu0
        %1712 = vmatprep.mubr.bf16.mxu0 0
        %1713 = vmatmul.mubr.bf16.gmra.mrb[0].mxu0 %v1544
        %v1714 = vpop.f32.mrb[0].mxu0
        %v1715 = vadd.f32 0.0, %v1714
        %v1716 = vpop.f32.mrb[0].mxu0
        %v1717 = vpop.f32.mrb[0].mxu0
        %v1718 = vadd.f32 0.0, %v1717
        %v1719 = vpop.f32.mrb[0].mxu0
        %1720 = vmatprep.mubr.bf16.mxu0 0
        %1721 = vmatmul.mubr.bf16.gmra.mrb[0].mxu0 %v1545
        %v1722 = vpop.f32.mrb[0].mxu0
        %v1723 = vadd.f32 0.0, %v1722
        %v1724 = vpop.f32.mrb[0].mxu0
        %v1725 = vpop.f32.mrb[0].mxu0
        %v1726 = vadd.f32 0.0, %v1725
        %v1727 = vpop.f32.mrb[0].mxu0
        %1728 = vmatprep.mubr.bf16.mxu0 0
        %1729 = vmatmul.mubr.bf16.gmra.mrb[0].mxu0 %v1546
        %v1730 = vpop.f32.mrb[0].mxu0
        %v1731 = vadd.f32 0.0, %v1730
        %v1732 = vpop.f32.mrb[0].mxu0
        %v1733 = vpop.f32.mrb[0].mxu0
        %v1734 = vadd.f32 0.0, %v1733
        %v1735 = vpop.f32.mrb[0].mxu0
        %1736 = vmatprep.mubr.bf16.mxu0 0
        %1737 = vmatmul.mubr.bf16.gmra.mrb[0].mxu0 %v1547
        %v1738 = vpop.f32.mrb[0].mxu0
        %v1739 = vadd.f32 0.0, %v1738
        %v1740 = vpop.f32.mrb[0].mxu0
        %v1741 = vpop.f32.mrb[0].mxu0
        %v1742 = vadd.f32 0.0, %v1741
        %v1743 = vpop.f32.mrb[0].mxu0
        %1744 = vmatprep.mubr.bf16.mxu0 0
        %1745 = vmatmul.mubr.bf16.gmra.mrb[0].mxu0 %v1548
        %v1746 = vpop.f32.mrb[0].mxu0
        %v1747 = vadd.f32 0.0, %v1746
        %v1748 = vpop.f32.mrb[0].mxu0
        %v1749 = vpop.f32.mrb[0].mxu0
        %v1750 = vadd.f32 0.0, %v1749
        %v1751 = vpop.f32.mrb[0].mxu0
        %1752 = vmatprep.mubr.bf16.mxu0 0
        %1753 = vmatmul.mubr.bf16.gmra.mrb[0].mxu0 %v1549
        %v1754 = vpop.f32.mrb[0].mxu0
        %v1755 = vadd.f32 0.0, %v1754
        %v1756 = vpop.f32.mrb[0].mxu0
        %v1757 = vpop.f32.mrb[0].mxu0
        %v1758 = vadd.f32 0.0, %v1757
        %v1759 = vpop.f32.mrb[0].mxu0
        %1760 = vmatprep.mubr.bf16.mxu0 0
        %1761 = vmatmul.mubr.bf16.gmra.mrb[0].mxu0 %v1550
        %v1762 = vpop.f32.mrb[0].mxu0
        %v1763 = vadd.f32 0.0, %v1762
        %v1764 = vpop.f32.mrb[0].mxu0
        %v1765 = vpop.f32.mrb[0].mxu0
        %v1766 = vadd.f32 0.0, %v1765
        %v1767 = vpop.f32.mrb[0].mxu0
        %1768 = vmatprep.mubr.bf16.mxu0 0
        %1769 = vmatmul.mubr.bf16.gmra.mrb[0].mxu0 %v1551
        %v1770 = vpop.f32.mrb[0].mxu0
        %v1771 = vadd.f32 0.0, %v1770
        %v1772 = vpop.f32.mrb[0].mxu0
        %v1773 = vpop.f32.mrb[0].mxu0
        %v1774 = vadd.f32 0.0, %v1773
        %v1775 = vpop.f32.mrb[0].mxu0
        %1776 = vdwg.mxu0
        %v1777 = vadd.f32 %v1198, %v1651
        %v1778 = vadd.f32 %v1201, %v1654
        %v1779 = vadd.f32 %v1206, %v1659
        %v1780 = vadd.f32 %v1209, %v1662
        %v1781 = vadd.f32 %v1214, %v1667
        %v1782 = vadd.f32 %v1217, %v1670
        %v1783 = vadd.f32 %v1222, %v1675
        %v1784 = vadd.f32 %v1225, %v1678
        %v1785 = vadd.f32 %v1230, %v1683
        %v1786 = vadd.f32 %v1233, %v1686
        %v1787 = vadd.f32 %v1238, %v1691
        %v1788 = vadd.f32 %v1241, %v1694
        %v1789 = vadd.f32 %v1246, %v1699
        %v1790 = vadd.f32 %v1249, %v1702
        %v1791 = vadd.f32 %v1254, %v1707
        %v1792 = vadd.f32 %v1257, %v1710
        %v1793 = vadd.f32 %v1262, %v1715
        %v1794 = vadd.f32 %v1265, %v1718
        %v1795 = vadd.f32 %v1270, %v1723
        %v1796 = vadd.f32 %v1273, %v1726
        %v1797 = vadd.f32 %v1278, %v1731
        %v1798 = vadd.f32 %v1281, %v1734
        %v1799 = vadd.f32 %v1286, %v1739
        %v1800 = vadd.f32 %v1289, %v1742
        %v1801 = vadd.f32 %v1294, %v1747
        %v1802 = vadd.f32 %v1297, %v1750
        %v1803 = vadd.f32 %v1302, %v1755
        %v1804 = vadd.f32 %v1305, %v1758
        %v1805 = vadd.f32 %v1310, %v1763
        %v1806 = vadd.f32 %v1313, %v1766
        %v1807 = vadd.f32 %v1318, %v1771
        %v1808 = vadd.f32 %v1321, %v1774
        %s1809 = scalar_lea.vmem %s276, 12
        %v1810 = vld [vmem:[%s1809] sm:$0xf]
        %v1811 = vld [vmem:[%s1809 + $0x4] sm:$0xf]
        %v1812 = vld [vmem:[%s1809 + $0xc] sm:$0xf]
        %v1813 = vld [vmem:[%s1809 + $0x10] sm:$0xf]
        %v1814 = vld [vmem:[%s1809 + $0x18] sm:$0xf]
        %v1815 = vld [vmem:[%s1809 + $0x1c] sm:$0xf]
        %v1816 = vld [vmem:[%s1809 + $0x24] sm:$0xf]
        %v1817 = vld [vmem:[%s1809 + $0x28] sm:$0xf]
        %v1818 = vld [vmem:[%s1809 + $0x30] sm:$0xf]
        %v1819 = vld [vmem:[%s1809 + $0x34] sm:$0xf]
        %v1820 = vld [vmem:[%s1809 + $0x3c] sm:$0xf]
        %v1821 = vld [vmem:[%s1809 + $0x40] sm:$0xf]
        %v1822 = vld [vmem:[%s1809 + $0x48] sm:$0xf]
        %v1823 = vld [vmem:[%s1809 + $0x4c] sm:$0xf]
        %v1824 = vld [vmem:[%s1809 + $0x54] sm:$0xf]
        %v1825 = vld [vmem:[%s1809 + $0x58] sm:$0xf]
        %v1826 = vld [vmem:[%s1809 + $0x60] sm:$0xf]
        %v1827 = vld [vmem:[%s1809 + $0x64] sm:$0xf]
        %v1828 = vld [vmem:[%s1809 + $0x6c] sm:$0xf]
        %v1829 = vld [vmem:[%s1809 + $0x70] sm:$0xf]
        %v1830 = vld [vmem:[%s1809 + $0x78] sm:$0xf]
        %v1831 = vld [vmem:[%s1809 + $0x7c] sm:$0xf]
        %v1832 = vld [vmem:[%s1809 + $0x84] sm:$0xf]
        %v1833 = vld [vmem:[%s1809 + $0x88] sm:$0xf]
        %v1834 = vld [vmem:[%s1809 + $0x90] sm:$0xf]
        %v1835 = vld [vmem:[%s1809 + $0x94] sm:$0xf]
        %v1836 = vld [vmem:[%s1809 + $0x9c] sm:$0xf]
        %v1837 = vld [vmem:[%s1809 + $0xa0] sm:$0xf]
        %v1838 = vld [vmem:[%s1809 + $0xa8] sm:$0xf]
        %v1839 = vld [vmem:[%s1809 + $0xac] sm:$0xf]
        %v1840 = vld [vmem:[%s1809 + $0xb4] sm:$0xf]
        %v1841 = vld [vmem:[%s1809 + $0xb8] sm:$0xf]
        %s1842 = scalar_lea.vmem %s1, 192
        %v1843 = vld [vmem:[%s1842] sm:$0xf]
        %v1844 = vld [vmem:[%s1842 + $0x4] sm:$0xf]
        %v1845 = vld [vmem:[%s1842 + $0x8] sm:$0xf]
        %v1846 = vld [vmem:[%s1842 + $0xc] sm:$0xf]
        %v1847 = vld [vmem:[%s1842 + $0x10] sm:$0xf]
        %v1848 = vld [vmem:[%s1842 + $0x14] sm:$0xf]
        %v1849 = vld [vmem:[%s1842 + $0x18] sm:$0xf]
        %v1850 = vld [vmem:[%s1842 + $0x1c] sm:$0xf]
        %v1851 = vld [vmem:[%s1842 + $0x20] sm:$0xf]
        %v1852 = vld [vmem:[%s1842 + $0x24] sm:$0xf]
        %v1853 = vld [vmem:[%s1842 + $0x28] sm:$0xf]
        %v1854 = vld [vmem:[%s1842 + $0x2c] sm:$0xf]
        %v1855 = vld [vmem:[%s1842 + $0x30] sm:$0xf]
        %v1856 = vld [vmem:[%s1842 + $0x34] sm:$0xf]
        %v1857 = vld [vmem:[%s1842 + $0x38] sm:$0xf]
        %v1858 = vld [vmem:[%s1842 + $0x3c] sm:$0xf]
        %v1891 = vunpack.c.l.b16 %v1810
        %v1892 = vunpack.c.l.b16 %v1811
        %v1893 = vunpack.c.l.b16 %v1812
        %v1894 = vunpack.c.l.b16 %v1813
        %v1895 = vunpack.c.l.b16 %v1814
        %v1896 = vunpack.c.l.b16 %v1815
        %v1897 = vunpack.c.l.b16 %v1816
        %v1898 = vunpack.c.l.b16 %v1817
        %v1899 = vunpack.c.l.b16 %v1818
        %v1900 = vunpack.c.l.b16 %v1819
        %v1901 = vunpack.c.l.b16 %v1820
        %v1902 = vunpack.c.l.b16 %v1821
        %v1903 = vunpack.c.l.b16 %v1822
        %v1904 = vunpack.c.l.b16 %v1823
        %v1905 = vunpack.c.l.b16 %v1824
        %v1906 = vunpack.c.l.b16 %v1825
        %v1907 = vunpack.c.l.b16 %v1826
        %v1908 = vunpack.c.l.b16 %v1827
        %v1909 = vunpack.c.l.b16 %v1828
        %v1910 = vunpack.c.l.b16 %v1829
        %v1911 = vunpack.c.l.b16 %v1830
        %v1912 = vunpack.c.l.b16 %v1831
        %v1913 = vunpack.c.l.b16 %v1832
        %v1914 = vunpack.c.l.b16 %v1833
        %v1915 = vunpack.c.l.b16 %v1834
        %v1916 = vunpack.c.l.b16 %v1835
        %v1917 = vunpack.c.l.b16 %v1836
        %v1918 = vunpack.c.l.b16 %v1837
        %v1919 = vunpack.c.l.b16 %v1838
        %v1920 = vunpack.c.l.b16 %v1839
        %v1921 = vunpack.c.l.b16 %v1840
        %v1922 = vunpack.c.l.b16 %v1841
        %v1923 = vpack.c.b16 %v1892, %v1891
        %v1924 = vpack.c.b16 %v1894, %v1893
        %v1925 = vpack.c.b16 %v1896, %v1895
        %v1926 = vpack.c.b16 %v1898, %v1897
        %v1927 = vpack.c.b16 %v1900, %v1899
        %v1928 = vpack.c.b16 %v1902, %v1901
        %v1929 = vpack.c.b16 %v1904, %v1903
        %v1930 = vpack.c.b16 %v1906, %v1905
        %v1931 = vpack.c.b16 %v1908, %v1907
        %v1932 = vpack.c.b16 %v1910, %v1909
        %v1933 = vpack.c.b16 %v1912, %v1911
        %v1934 = vpack.c.b16 %v1914, %v1913
        %v1935 = vpack.c.b16 %v1916, %v1915
        %v1936 = vpack.c.b16 %v1918, %v1917
        %v1937 = vpack.c.b16 %v1920, %v1919
        %v1938 = vpack.c.b16 %v1922, %v1921
        %v1971 = vunpack.c.l.b16 %v1843
        %v1972 = vunpack.c.l.b16 %v1844
        %v1973 = vunpack.c.l.b16 %v1845
        %v1974 = vunpack.c.l.b16 %v1846
        %v1975 = vunpack.c.l.b16 %v1847
        %v1976 = vunpack.c.l.b16 %v1848
        %v1977 = vunpack.c.l.b16 %v1849
        %v1978 = vunpack.c.l.b16 %v1850
        %v1979 = vunpack.c.l.b16 %v1851
        %v1980 = vunpack.c.l.b16 %v1852
        %v1981 = vunpack.c.l.b16 %v1853
        %v1982 = vunpack.c.l.b16 %v1854
        %v1983 = vunpack.c.l.b16 %v1855
        %v1984 = vunpack.c.l.b16 %v1856
        %v1985 = vunpack.c.l.b16 %v1857
        %v1986 = vunpack.c.l.b16 %v1858
        %v1987 = vpack.c.b16 %v1972, %v1971
        %v1988 = vpack.c.b16 %v1974, %v1973
        %v1989 = vpack.c.b16 %v1976, %v1975
        %v1990 = vpack.c.b16 %v1978, %v1977
        %v1991 = vpack.c.b16 %v1980, %v1979
        %v1992 = vpack.c.b16 %v1982, %v1981
        %v1993 = vpack.c.b16 %v1984, %v1983
        %v1994 = vpack.c.b16 %v1986, %v1985
        %2003 = vmatprep.subr.bf16.mxu0 0
        %2004 = vmatpush1.bf16.msra.mxu0 %v1987
        %2005 = vmatprep.subr.bf16.mxu0 0
        %2006 = vmatpush1.bf16.msra.mxu0 %v1988
        %2007 = vmatprep.subr.bf16.mxu0 0
        %2008 = vmatpush1.bf16.msra.mxu0 %v1989
        %2009 = vmatprep.subr.bf16.mxu0 0
        %2010 = vmatpush1.bf16.msra.mxu0 %v1990
        %2011 = vmatprep.subr.bf16.mxu0 0
        %2012 = vmatpush1.bf16.msra.mxu0 %v1991
        %2013 = vmatprep.subr.bf16.mxu0 0
        %2014 = vmatpush1.bf16.msra.mxu0 %v1992
        %2015 = vmatprep.subr.bf16.mxu0 0
        %2016 = vmatpush1.bf16.msra.mxu0 %v1993
        %2017 = vmatprep.subr.bf16.mxu0 0
        %2018 = vmatpush1.bf16.msra.mxu0 %v1994
        %2019 = vmatprep.subr.bf16.mxu0 0
        %2020 = vmatpush1.bf16.msra.mxu0 0
        %2021 = vmatprep.subr.bf16.mxu0 0
        %2022 = vmatpush1.bf16.msra.mxu0 0
        %2023 = vmatprep.subr.bf16.mxu0 0
        %2024 = vmatpush1.bf16.msra.mxu0 0
        %2025 = vmatprep.subr.bf16.mxu0 0
        %2026 = vmatpush1.bf16.msra.mxu0 0
        %2027 = vmatprep.subr.bf16.mxu0 0
        %2028 = vmatpush1.bf16.msra.mxu0 0
        %2029 = vmatprep.subr.bf16.mxu0 0
        %2030 = vmatpush1.bf16.msra.mxu0 0
        %2031 = vmatprep.subr.bf16.mxu0 0
        %2032 = vmatpush1.bf16.msra.mxu0 0
        %2033 = vmatprep.subr.bf16.mxu0 0
        %2034 = vmatpush1.bf16.msra.mxu0 0
        %2035 = vmatprep.mubr.bf16.mxu0 0
        %2036 = vmatmul.mubr.bf16.gmra.mrb[0].mxu0 %v1923
        %v2037 = vpop.f32.mrb[0].mxu0
        %v2038 = vadd.f32 0.0, %v2037
        %v2039 = vpop.f32.mrb[0].mxu0
        %v2040 = vpop.f32.mrb[0].mxu0
        %v2041 = vadd.f32 0.0, %v2040
        %v2042 = vpop.f32.mrb[0].mxu0
        %2043 = vmatprep.mubr.bf16.mxu0 0
        %2044 = vmatmul.mubr.bf16.gmra.mrb[0].mxu0 %v1924
        %v2045 = vpop.f32.mrb[0].mxu0
        %v2046 = vadd.f32 0.0, %v2045
        %v2047 = vpop.f32.mrb[0].mxu0
        %v2048 = vpop.f32.mrb[0].mxu0
        %v2049 = vadd.f32 0.0, %v2048
        %v2050 = vpop.f32.mrb[0].mxu0
        %2051 = vmatprep.mubr.bf16.mxu0 0
        %2052 = vmatmul.mubr.bf16.gmra.mrb[0].mxu0 %v1925
        %v2053 = vpop.f32.mrb[0].mxu0
        %v2054 = vadd.f32 0.0, %v2053
        %v2055 = vpop.f32.mrb[0].mxu0
        %v2056 = vpop.f32.mrb[0].mxu0
        %v2057 = vadd.f32 0.0, %v2056
        %v2058 = vpop.f32.mrb[0].mxu0
        %2059 = vmatprep.mubr.bf16.mxu0 0
        %2060 = vmatmul.mubr.bf16.gmra.mrb[0].mxu0 %v1926
        %v2061 = vpop.f32.mrb[0].mxu0
        %v2062 = vadd.f32 0.0, %v2061
        %v2063 = vpop.f32.mrb[0].mxu0
        %v2064 = vpop.f32.mrb[0].mxu0
        %v2065 = vadd.f32 0.0, %v2064
        %v2066 = vpop.f32.mrb[0].mxu0
        %2067 = vmatprep.mubr.bf16.mxu0 0
        %2068 = vmatmul.mubr.bf16.gmra.mrb[0].mxu0 %v1927
        %v2069 = vpop.f32.mrb[0].mxu0
        %v2070 = vadd.f32 0.0, %v2069
        %v2071 = vpop.f32.mrb[0].mxu0
        %v2072 = vpop.f32.mrb[0].mxu0
        %v2073 = vadd.f32 0.0, %v2072
        %v2074 = vpop.f32.mrb[0].mxu0
        %2075 = vmatprep.mubr.bf16.mxu0 0
        %2076 = vmatmul.mubr.bf16.gmra.mrb[0].mxu0 %v1928
        %v2077 = vpop.f32.mrb[0].mxu0
        %v2078 = vadd.f32 0.0, %v2077
        %v2079 = vpop.f32.mrb[0].mxu0
        %v2080 = vpop.f32.mrb[0].mxu0
        %v2081 = vadd.f32 0.0, %v2080
        %v2082 = vpop.f32.mrb[0].mxu0
        %2083 = vmatprep.mubr.bf16.mxu0 0
        %2084 = vmatmul.mubr.bf16.gmra.mrb[0].mxu0 %v1929
        %v2085 = vpop.f32.mrb[0].mxu0
        %v2086 = vadd.f32 0.0, %v2085
        %v2087 = vpop.f32.mrb[0].mxu0
        %v2088 = vpop.f32.mrb[0].mxu0
        %v2089 = vadd.f32 0.0, %v2088
        %v2090 = vpop.f32.mrb[0].mxu0
        %2091 = vmatprep.mubr.bf16.mxu0 0
        %2092 = vmatmul.mubr.bf16.gmra.mrb[0].mxu0 %v1930
        %v2093 = vpop.f32.mrb[0].mxu0
        %v2094 = vadd.f32 0.0, %v2093
        %v2095 = vpop.f32.mrb[0].mxu0
        %v2096 = vpop.f32.mrb[0].mxu0
        %v2097 = vadd.f32 0.0, %v2096
        %v2098 = vpop.f32.mrb[0].mxu0
        %2099 = vmatprep.mubr.bf16.mxu0 0
        %2100 = vmatmul.mubr.bf16.gmra.mrb[0].mxu0 %v1931
        %v2101 = vpop.f32.mrb[0].mxu0
        %v2102 = vadd.f32 0.0, %v2101
        %v2103 = vpop.f32.mrb[0].mxu0
        %v2104 = vpop.f32.mrb[0].mxu0
        %v2105 = vadd.f32 0.0, %v2104
        %v2106 = vpop.f32.mrb[0].mxu0
        %2107 = vmatprep.mubr.bf16.mxu0 0
        %2108 = vmatmul.mubr.bf16.gmra.mrb[0].mxu0 %v1932
        %v2109 = vpop.f32.mrb[0].mxu0
        %v2110 = vadd.f32 0.0, %v2109
        %v2111 = vpop.f32.mrb[0].mxu0
        %v2112 = vpop.f32.mrb[0].mxu0
        %v2113 = vadd.f32 0.0, %v2112
        %v2114 = vpop.f32.mrb[0].mxu0
        %2115 = vmatprep.mubr.bf16.mxu0 0
        %2116 = vmatmul.mubr.bf16.gmra.mrb[0].mxu0 %v1933
        %v2117 = vpop.f32.mrb[0].mxu0
        %v2118 = vadd.f32 0.0, %v2117
        %v2119 = vpop.f32.mrb[0].mxu0
        %v2120 = vpop.f32.mrb[0].mxu0
        %v2121 = vadd.f32 0.0, %v2120
        %v2122 = vpop.f32.mrb[0].mxu0
        %2123 = vmatprep.mubr.bf16.mxu0 0
        %2124 = vmatmul.mubr.bf16.gmra.mrb[0].mxu0 %v1934
        %v2125 = vpop.f32.mrb[0].mxu0
        %v2126 = vadd.f32 0.0, %v2125
        %v2127 = vpop.f32.mrb[0].mxu0
        %v2128 = vpop.f32.mrb[0].mxu0
        %v2129 = vadd.f32 0.0, %v2128
        %v2130 = vpop.f32.mrb[0].mxu0
        %2131 = vmatprep.mubr.bf16.mxu0 0
        %2132 = vmatmul.mubr.bf16.gmra.mrb[0].mxu0 %v1935
        %v2133 = vpop.f32.mrb[0].mxu0
        %v2134 = vadd.f32 0.0, %v2133
        %v2135 = vpop.f32.mrb[0].mxu0
        %v2136 = vpop.f32.mrb[0].mxu0
        %v2137 = vadd.f32 0.0, %v2136
        %v2138 = vpop.f32.mrb[0].mxu0
        %2139 = vmatprep.mubr.bf16.mxu0 0
        %2140 = vmatmul.mubr.bf16.gmra.mrb[0].mxu0 %v1936
        %v2141 = vpop.f32.mrb[0].mxu0
        %v2142 = vadd.f32 0.0, %v2141
        %v2143 = vpop.f32.mrb[0].mxu0
        %v2144 = vpop.f32.mrb[0].mxu0
        %v2145 = vadd.f32 0.0, %v2144
        %v2146 = vpop.f32.mrb[0].mxu0
        %2147 = vmatprep.mubr.bf16.mxu0 0
        %2148 = vmatmul.mubr.bf16.gmra.mrb[0].mxu0 %v1937
        %v2149 = vpop.f32.mrb[0].mxu0
        %v2150 = vadd.f32 0.0, %v2149
        %v2151 = vpop.f32.mrb[0].mxu0
        %v2152 = vpop.f32.mrb[0].mxu0
        %v2153 = vadd.f32 0.0, %v2152
        %v2154 = vpop.f32.mrb[0].mxu0
        %2155 = vmatprep.mubr.bf16.mxu0 0
        %2156 = vmatmul.mubr.bf16.gmra.mrb[0].mxu0 %v1938
        %v2157 = vpop.f32.mrb[0].mxu0
        %v2158 = vadd.f32 0.0, %v2157
        %v2159 = vpop.f32.mrb[0].mxu0
        %v2160 = vpop.f32.mrb[0].mxu0
        %v2161 = vadd.f32 0.0, %v2160
        %v2162 = vpop.f32.mrb[0].mxu0
        %2163 = vdwg.mxu0
        %v2164 = vadd.f32 %v1777, %v2038
        %v2165 = vadd.f32 %v1778, %v2041
        %v2166 = vadd.f32 %v1779, %v2046
        %v2167 = vadd.f32 %v1780, %v2049
        %v2168 = vadd.f32 %v1781, %v2054
        %v2169 = vadd.f32 %v1782, %v2057
        %v2170 = vadd.f32 %v1783, %v2062
        %v2171 = vadd.f32 %v1784, %v2065
        %v2172 = vadd.f32 %v1785, %v2070
        %v2173 = vadd.f32 %v1786, %v2073
        %v2174 = vadd.f32 %v1787, %v2078
        %v2175 = vadd.f32 %v1788, %v2081
        %v2176 = vadd.f32 %v1789, %v2086
        %v2177 = vadd.f32 %v1790, %v2089
        %v2178 = vadd.f32 %v1791, %v2094
        %v2179 = vadd.f32 %v1792, %v2097
        %v2180 = vadd.f32 %v1793, %v2102
        %v2181 = vadd.f32 %v1794, %v2105
        %v2182 = vadd.f32 %v1795, %v2110
        %v2183 = vadd.f32 %v1796, %v2113
        %v2184 = vadd.f32 %v1797, %v2118
        %v2185 = vadd.f32 %v1798, %v2121
        %v2186 = vadd.f32 %v1799, %v2126
        %v2187 = vadd.f32 %v1800, %v2129
        %v2188 = vadd.f32 %v1801, %v2134
        %v2189 = vadd.f32 %v1802, %v2137
        %v2190 = vadd.f32 %v1803, %v2142
        %v2191 = vadd.f32 %v1804, %v2145
        %v2192 = vadd.f32 %v1805, %v2150
        %v2193 = vadd.f32 %v1806, %v2153
        %v2194 = vadd.f32 %v1807, %v2158
        %v2195 = vadd.f32 %v1808, %v2161
        %v2196 = vld [vmem:[%s1809] sm:$0xf]
        %v2197 = vld [vmem:[%s1809 + $0x4] sm:$0xf]
        %v2198 = vld [vmem:[%s1809 + $0x8] sm:$0x1]
        %v2199 = vld [vmem:[%s1809 + $0xc] sm:$0xf]
        %v2200 = vld [vmem:[%s1809 + $0x10] sm:$0xf]
        %v2201 = vld [vmem:[%s1809 + $0x14] sm:$0x1]
        %v2202 = vld [vmem:[%s1809 + $0x18] sm:$0xf]
        %v2203 = vld [vmem:[%s1809 + $0x1c] sm:$0xf]
        %v2204 = vld [vmem:[%s1809 + $0x20] sm:$0x1]
        %v2205 = vld [vmem:[%s1809 + $0x24] sm:$0xf]
        %v2206 = vld [vmem:[%s1809 + $0x28] sm:$0xf]
        %v2207 = vld [vmem:[%s1809 + $0x2c] sm:$0x1]
        %v2208 = vld [vmem:[%s1809 + $0x30] sm:$0xf]
        %v2209 = vld [vmem:[%s1809 + $0x34] sm:$0xf]
        %v2210 = vld [vmem:[%s1809 + $0x38] sm:$0x1]
        %v2211 = vld [vmem:[%s1809 + $0x3c] sm:$0xf]
        %v2212 = vld [vmem:[%s1809 + $0x40] sm:$0xf]
        %v2213 = vld [vmem:[%s1809 + $0x44] sm:$0x1]
        %v2214 = vld [vmem:[%s1809 + $0x48] sm:$0xf]
        %v2215 = vld [vmem:[%s1809 + $0x4c] sm:$0xf]
        %v2216 = vld [vmem:[%s1809 + $0x50] sm:$0x1]
        %v2217 = vld [vmem:[%s1809 + $0x54] sm:$0xf]
        %v2218 = vld [vmem:[%s1809 + $0x58] sm:$0xf]
        %v2219 = vld [vmem:[%s1809 + $0x5c] sm:$0x1]
        %v2220 = vld [vmem:[%s1809 + $0x60] sm:$0xf]
        %v2221 = vld [vmem:[%s1809 + $0x64] sm:$0xf]
        %v2222 = vld [vmem:[%s1809 + $0x68] sm:$0x1]
        %v2223 = vld [vmem:[%s1809 + $0x6c] sm:$0xf]
        %v2224 = vld [vmem:[%s1809 + $0x70] sm:$0xf]
        %v2225 = vld [vmem:[%s1809 + $0x74] sm:$0x1]
        %v2226 = vld [vmem:[%s1809 + $0x78] sm:$0xf]
        %v2227 = vld [vmem:[%s1809 + $0x7c] sm:$0xf]
        %v2228 = vld [vmem:[%s1809 + $0x80] sm:$0x1]
        %v2229 = vld [vmem:[%s1809 + $0x84] sm:$0xf]
        %v2230 = vld [vmem:[%s1809 + $0x88] sm:$0xf]
        %v2231 = vld [vmem:[%s1809 + $0x8c] sm:$0x1]
        %v2232 = vld [vmem:[%s1809 + $0x90] sm:$0xf]
        %v2233 = vld [vmem:[%s1809 + $0x94] sm:$0xf]
        %v2234 = vld [vmem:[%s1809 + $0x98] sm:$0x1]
        %v2235 = vld [vmem:[%s1809 + $0x9c] sm:$0xf]
        %v2236 = vld [vmem:[%s1809 + $0xa0] sm:$0xf]
        %v2237 = vld [vmem:[%s1809 + $0xa4] sm:$0x1]
        %v2238 = vld [vmem:[%s1809 + $0xa8] sm:$0xf]
        %v2239 = vld [vmem:[%s1809 + $0xac] sm:$0xf]
        %v2240 = vld [vmem:[%s1809 + $0xb0] sm:$0x1]
        %v2241 = vld [vmem:[%s1809 + $0xb4] sm:$0xf]
        %v2242 = vld [vmem:[%s1809 + $0xb8] sm:$0xf]
        %v2243 = vld [vmem:[%s1809 + $0xbc] sm:$0x1]
        %v2245 = vshrl.u32 %v2196, 16
        %v2247 = vrot.slane %v2245, 4
        %v2248 = vshll.u32 %v2196, 16
        %v2250 = vrot.slane %v2248, 5
        %v2251 = vor.u32 %v2247, %v2250
        %v2252 = vrot.slane %v2251, 4
        %v2254 = vshll.u32 %v2197, 16
        %v2256 = vrot.slane %v2254, 5
        %v2257 = vsel %vm344, %v2252, %v2256
        %v2258 = vshrl.u32 %v2197, 16
        %v2260 = vrot.slane %v2258, 4
        %v2261 = vor.u32 %v2260, %v2256
        %v2262 = vrot.slane %v2261, 4
        %v2264 = vshll.u32 %v2198, 16
        %v2266 = vrot.slane %v2264, 5
        %v2267 = vsel %vm344, %v2262, %v2266
        %v2269 = vshrl.u32 %v2199, 16
        %v2271 = vrot.slane %v2269, 4
        %v2272 = vshll.u32 %v2199, 16
        %v2274 = vrot.slane %v2272, 5
        %v2275 = vor.u32 %v2271, %v2274
        %v2276 = vrot.slane %v2275, 4
        %v2278 = vshll.u32 %v2200, 16
        %v2280 = vrot.slane %v2278, 5
        %v2281 = vsel %vm344, %v2276, %v2280
        %v2282 = vshrl.u32 %v2200, 16
        %v2284 = vrot.slane %v2282, 4
        %v2285 = vor.u32 %v2284, %v2280
        %v2286 = vrot.slane %v2285, 4
        %v2288 = vshll.u32 %v2201, 16
        %v2290 = vrot.slane %v2288, 5
        %v2291 = vsel %vm344, %v2286, %v2290
        %v2293 = vshrl.u32 %v2202, 16
        %v2295 = vrot.slane %v2293, 4
        %v2296 = vshll.u32 %v2202, 16
        %v2298 = vrot.slane %v2296, 5
        %v2299 = vor.u32 %v2295, %v2298
        %v2300 = vrot.slane %v2299, 4
        %v2302 = vshll.u32 %v2203, 16
        %v2304 = vrot.slane %v2302, 5
        %v2305 = vsel %vm344, %v2300, %v2304
        %v2306 = vshrl.u32 %v2203, 16
        %v2308 = vrot.slane %v2306, 4
        %v2309 = vor.u32 %v2308, %v2304
        %v2310 = vrot.slane %v2309, 4
        %v2312 = vshll.u32 %v2204, 16
        %v2314 = vrot.slane %v2312, 5
        %v2315 = vsel %vm344, %v2310, %v2314
        %v2317 = vshrl.u32 %v2205, 16
        %v2319 = vrot.slane %v2317, 4
        %v2320 = vshll.u32 %v2205, 16
        %v2322 = vrot.slane %v2320, 5
        %v2323 = vor.u32 %v2319, %v2322
        %v2324 = vrot.slane %v2323, 4
        %v2326 = vshll.u32 %v2206, 16
        %v2328 = vrot.slane %v2326, 5
        %v2329 = vsel %vm344, %v2324, %v2328
        %v2330 = vshrl.u32 %v2206, 16
        %v2332 = vrot.slane %v2330, 4
        %v2333 = vor.u32 %v2332, %v2328
        %v2334 = vrot.slane %v2333, 4
        %v2336 = vshll.u32 %v2207, 16
        %v2338 = vrot.slane %v2336, 5
        %v2339 = vsel %vm344, %v2334, %v2338
        %v2341 = vshrl.u32 %v2208, 16
        %v2343 = vrot.slane %v2341, 4
        %v2344 = vshll.u32 %v2208, 16
        %v2346 = vrot.slane %v2344, 5
        %v2347 = vor.u32 %v2343, %v2346
        %v2348 = vrot.slane %v2347, 4
        %v2350 = vshll.u32 %v2209, 16
        %v2352 = vrot.slane %v2350, 5
        %v2353 = vsel %vm344, %v2348, %v2352
        %v2354 = vshrl.u32 %v2209, 16
        %v2356 = vrot.slane %v2354, 4
        %v2357 = vor.u32 %v2356, %v2352
        %v2358 = vrot.slane %v2357, 4
        %v2360 = vshll.u32 %v2210, 16
        %v2362 = vrot.slane %v2360, 5
        %v2363 = vsel %vm344, %v2358, %v2362
        %v2365 = vshrl.u32 %v2211, 16
        %v2367 = vrot.slane %v2365, 4
        %v2368 = vshll.u32 %v2211, 16
        %v2370 = vrot.slane %v2368, 5
        %v2371 = vor.u32 %v2367, %v2370
        %v2372 = vrot.slane %v2371, 4
        %v2374 = vshll.u32 %v2212, 16
        %v2376 = vrot.slane %v2374, 5
        %v2377 = vsel %vm344, %v2372, %v2376
        %v2378 = vshrl.u32 %v2212, 16
        %v2380 = vrot.slane %v2378, 4
        %v2381 = vor.u32 %v2380, %v2376
        %v2382 = vrot.slane %v2381, 4
        %v2384 = vshll.u32 %v2213, 16
        %v2386 = vrot.slane %v2384, 5
        %v2387 = vsel %vm344, %v2382, %v2386
        %v2389 = vshrl.u32 %v2214, 16
        %v2391 = vrot.slane %v2389, 4
        %v2392 = vshll.u32 %v2214, 16
        %v2394 = vrot.slane %v2392, 5
        %v2395 = vor.u32 %v2391, %v2394
        %v2396 = vrot.slane %v2395, 4
        %v2398 = vshll.u32 %v2215, 16
        %v2400 = vrot.slane %v2398, 5
        %v2401 = vsel %vm344, %v2396, %v2400
        %v2402 = vshrl.u32 %v2215, 16
        %v2404 = vrot.slane %v2402, 4
        %v2405 = vor.u32 %v2404, %v2400
        %v2406 = vrot.slane %v2405, 4
        %v2408 = vshll.u32 %v2216, 16
        %v2410 = vrot.slane %v2408, 5
        %v2411 = vsel %vm344, %v2406, %v2410
        %v2413 = vshrl.u32 %v2217, 16
        %v2415 = vrot.slane %v2413, 4
        %v2416 = vshll.u32 %v2217, 16
        %v2418 = vrot.slane %v2416, 5
        %v2419 = vor.u32 %v2415, %v2418
        %v2420 = vrot.slane %v2419, 4
        %v2422 = vshll.u32 %v2218, 16
        %v2424 = vrot.slane %v2422, 5
        %v2425 = vsel %vm344, %v2420, %v2424
        %v2426 = vshrl.u32 %v2218, 16
        %v2428 = vrot.slane %v2426, 4
        %v2429 = vor.u32 %v2428, %v2424
        %v2430 = vrot.slane %v2429, 4
        %v2432 = vshll.u32 %v2219, 16
        %v2434 = vrot.slane %v2432, 5
        %v2435 = vsel %vm344, %v2430, %v2434
        %v2437 = vshrl.u32 %v2220, 16
        %v2439 = vrot.slane %v2437, 4
        %v2440 = vshll.u32 %v2220, 16
        %v2442 = vrot.slane %v2440, 5
        %v2443 = vor.u32 %v2439, %v2442
        %v2444 = vrot.slane %v2443, 4
        %v2446 = vshll.u32 %v2221, 16
        %v2448 = vrot.slane %v2446, 5
        %v2449 = vsel %vm344, %v2444, %v2448
        %v2450 = vshrl.u32 %v2221, 16
        %v2452 = vrot.slane %v2450, 4
        %v2453 = vor.u32 %v2452, %v2448
        %v2454 = vrot.slane %v2453, 4
        %v2456 = vshll.u32 %v2222, 16
        %v2458 = vrot.slane %v2456, 5
        %v2459 = vsel %vm344, %v2454, %v2458
        %v2461 = vshrl.u32 %v2223, 16
        %v2463 = vrot.slane %v2461, 4
        %v2464 = vshll.u32 %v2223, 16
        %v2466 = vrot.slane %v2464, 5
        %v2467 = vor.u32 %v2463, %v2466
        %v2468 = vrot.slane %v2467, 4
        %v2470 = vshll.u32 %v2224, 16
        %v2472 = vrot.slane %v2470, 5
        %v2473 = vsel %vm344, %v2468, %v2472
        %v2474 = vshrl.u32 %v2224, 16
        %v2476 = vrot.slane %v2474, 4
        %v2477 = vor.u32 %v2476, %v2472
        %v2478 = vrot.slane %v2477, 4
        %v2480 = vshll.u32 %v2225, 16
        %v2482 = vrot.slane %v2480, 5
        %v2483 = vsel %vm344, %v2478, %v2482
        %v2485 = vshrl.u32 %v2226, 16
        %v2487 = vrot.slane %v2485, 4
        %v2488 = vshll.u32 %v2226, 16
        %v2490 = vrot.slane %v2488, 5
        %v2491 = vor.u32 %v2487, %v2490
        %v2492 = vrot.slane %v2491, 4
        %v2494 = vshll.u32 %v2227, 16
        %v2496 = vrot.slane %v2494, 5
        %v2497 = vsel %vm344, %v2492, %v2496
        %v2498 = vshrl.u32 %v2227, 16
        %v2500 = vrot.slane %v2498, 4
        %v2501 = vor.u32 %v2500, %v2496
        %v2502 = vrot.slane %v2501, 4
        %v2504 = vshll.u32 %v2228, 16
        %v2506 = vrot.slane %v2504, 5
        %v2507 = vsel %vm344, %v2502, %v2506
        %v2509 = vshrl.u32 %v2229, 16
        %v2511 = vrot.slane %v2509, 4
        %v2512 = vshll.u32 %v2229, 16
        %v2514 = vrot.slane %v2512, 5
        %v2515 = vor.u32 %v2511, %v2514
        %v2516 = vrot.slane %v2515, 4
        %v2518 = vshll.u32 %v2230, 16
        %v2520 = vrot.slane %v2518, 5
        %v2521 = vsel %vm344, %v2516, %v2520
        %v2522 = vshrl.u32 %v2230, 16
        %v2524 = vrot.slane %v2522, 4
        %v2525 = vor.u32 %v2524, %v2520
        %v2526 = vrot.slane %v2525, 4
        %v2528 = vshll.u32 %v2231, 16
        %v2530 = vrot.slane %v2528, 5
        %v2531 = vsel %vm344, %v2526, %v2530
        %v2533 = vshrl.u32 %v2232, 16
        %v2535 = vrot.slane %v2533, 4
        %v2536 = vshll.u32 %v2232, 16
        %v2538 = vrot.slane %v2536, 5
        %v2539 = vor.u32 %v2535, %v2538
        %v2540 = vrot.slane %v2539, 4
        %v2542 = vshll.u32 %v2233, 16
        %v2544 = vrot.slane %v2542, 5
        %v2545 = vsel %vm344, %v2540, %v2544
        %v2546 = vshrl.u32 %v2233, 16
        %v2548 = vrot.slane %v2546, 4
        %v2549 = vor.u32 %v2548, %v2544
        %v2550 = vrot.slane %v2549, 4
        %v2552 = vshll.u32 %v2234, 16
        %v2554 = vrot.slane %v2552, 5
        %v2555 = vsel %vm344, %v2550, %v2554
        %v2557 = vshrl.u32 %v2235, 16
        %v2559 = vrot.slane %v2557, 4
        %v2560 = vshll.u32 %v2235, 16
        %v2562 = vrot.slane %v2560, 5
        %v2563 = vor.u32 %v2559, %v2562
        %v2564 = vrot.slane %v2563, 4
        %v2566 = vshll.u32 %v2236, 16
        %v2568 = vrot.slane %v2566, 5
        %v2569 = vsel %vm344, %v2564, %v2568
        %v2570 = vshrl.u32 %v2236, 16
        %v2572 = vrot.slane %v2570, 4
        %v2573 = vor.u32 %v2572, %v2568
        %v2574 = vrot.slane %v2573, 4
        %v2576 = vshll.u32 %v2237, 16
        %v2578 = vrot.slane %v2576, 5
        %v2579 = vsel %vm344, %v2574, %v2578
        %v2581 = vshrl.u32 %v2238, 16
        %v2583 = vrot.slane %v2581, 4
        %v2584 = vshll.u32 %v2238, 16
        %v2586 = vrot.slane %v2584, 5
        %v2587 = vor.u32 %v2583, %v2586
        %v2588 = vrot.slane %v2587, 4
        %v2590 = vshll.u32 %v2239, 16
        %v2592 = vrot.slane %v2590, 5
        %v2593 = vsel %vm344, %v2588, %v2592
        %v2594 = vshrl.u32 %v2239, 16
        %v2596 = vrot.slane %v2594, 4
        %v2597 = vor.u32 %v2596, %v2592
        %v2598 = vrot.slane %v2597, 4
        %v2600 = vshll.u32 %v2240, 16
        %v2602 = vrot.slane %v2600, 5
        %v2603 = vsel %vm344, %v2598, %v2602
        %v2605 = vshrl.u32 %v2241, 16
        %v2607 = vrot.slane %v2605, 4
        %v2608 = vshll.u32 %v2241, 16
        %v2610 = vrot.slane %v2608, 5
        %v2611 = vor.u32 %v2607, %v2610
        %v2612 = vrot.slane %v2611, 4
        %v2614 = vshll.u32 %v2242, 16
        %v2616 = vrot.slane %v2614, 5
        %v2617 = vsel %vm344, %v2612, %v2616
        %v2618 = vshrl.u32 %v2242, 16
        %v2620 = vrot.slane %v2618, 4
        %v2621 = vor.u32 %v2620, %v2616
        %v2622 = vrot.slane %v2621, 4
        %v2624 = vshll.u32 %v2243, 16
        %v2626 = vrot.slane %v2624, 5
        %v2627 = vsel %vm344, %v2622, %v2626
        %s2628 = scalar_lea.vmem %s1, 256
        %v2629 = vld [vmem:[%s2628] sm:$0xf]
        %v2630 = vld [vmem:[%s2628 + $0x4] sm:$0xf]
        %v2631 = vld [vmem:[%s2628 + $0x8] sm:$0xf]
        %v2632 = vld [vmem:[%s2628 + $0xc] sm:$0xf]
        %v2633 = vld [vmem:[%s2628 + $0x10] sm:$0xf]
        %v2634 = vld [vmem:[%s2628 + $0x14] sm:$0xf]
        %v2635 = vld [vmem:[%s2628 + $0x18] sm:$0xf]
        %v2636 = vld [vmem:[%s2628 + $0x1c] sm:$0xf]
        %v2637 = vld [vmem:[%s2628 + $0x20] sm:$0xf]
        %v2638 = vld [vmem:[%s2628 + $0x24] sm:$0xf]
        %v2639 = vld [vmem:[%s2628 + $0x28] sm:$0xf]
        %v2640 = vld [vmem:[%s2628 + $0x2c] sm:$0xf]
        %v2641 = vld [vmem:[%s2628 + $0x30] sm:$0xf]
        %v2642 = vld [vmem:[%s2628 + $0x34] sm:$0xf]
        %v2643 = vld [vmem:[%s2628 + $0x38] sm:$0xf]
        %v2644 = vld [vmem:[%s2628 + $0x3c] sm:$0xf]
        %v2645 = vunpack.c.l.b16 %v2257
        %v2646 = vunpack.c.l.b16 %v2267
        %v2647 = vunpack.c.l.b16 %v2281
        %v2648 = vunpack.c.l.b16 %v2291
        %v2649 = vunpack.c.l.b16 %v2305
        %v2650 = vunpack.c.l.b16 %v2315
        %v2651 = vunpack.c.l.b16 %v2329
        %v2652 = vunpack.c.l.b16 %v2339
        %v2653 = vunpack.c.l.b16 %v2353
        %v2654 = vunpack.c.l.b16 %v2363
        %v2655 = vunpack.c.l.b16 %v2377
        %v2656 = vunpack.c.l.b16 %v2387
        %v2657 = vunpack.c.l.b16 %v2401
        %v2658 = vunpack.c.l.b16 %v2411
        %v2659 = vunpack.c.l.b16 %v2425
        %v2660 = vunpack.c.l.b16 %v2435
        %v2661 = vunpack.c.l.b16 %v2449
        %v2662 = vunpack.c.l.b16 %v2459
        %v2663 = vunpack.c.l.b16 %v2473
        %v2664 = vunpack.c.l.b16 %v2483
        %v2665 = vunpack.c.l.b16 %v2497
        %v2666 = vunpack.c.l.b16 %v2507
        %v2667 = vunpack.c.l.b16 %v2521
        %v2668 = vunpack.c.l.b16 %v2531
        %v2669 = vunpack.c.l.b16 %v2545
        %v2670 = vunpack.c.l.b16 %v2555
        %v2671 = vunpack.c.l.b16 %v2569
        %v2672 = vunpack.c.l.b16 %v2579
        %v2673 = vunpack.c.l.b16 %v2593
        %v2674 = vunpack.c.l.b16 %v2603
        %v2675 = vunpack.c.l.b16 %v2617
        %v2676 = vunpack.c.l.b16 %v2627
        %v2677 = vpack.c.b16 %v2646, %v2645
        %v2678 = vpack.c.b16 %v2648, %v2647
        %v2679 = vpack.c.b16 %v2650, %v2649
        %v2680 = vpack.c.b16 %v2652, %v2651
        %v2681 = vpack.c.b16 %v2654, %v2653
        %v2682 = vpack.c.b16 %v2656, %v2655
        %v2683 = vpack.c.b16 %v2658, %v2657
        %v2684 = vpack.c.b16 %v2660, %v2659
        %v2685 = vpack.c.b16 %v2662, %v2661
        %v2686 = vpack.c.b16 %v2664, %v2663
        %v2687 = vpack.c.b16 %v2666, %v2665
        %v2688 = vpack.c.b16 %v2668, %v2667
        %v2689 = vpack.c.b16 %v2670, %v2669
        %v2690 = vpack.c.b16 %v2672, %v2671
        %v2691 = vpack.c.b16 %v2674, %v2673
        %v2692 = vpack.c.b16 %v2676, %v2675
        %v2725 = vunpack.c.l.b16 %v2629
        %v2726 = vunpack.c.l.b16 %v2630
        %v2727 = vunpack.c.l.b16 %v2631
        %v2728 = vunpack.c.l.b16 %v2632
        %v2729 = vunpack.c.l.b16 %v2633
        %v2730 = vunpack.c.l.b16 %v2634
        %v2731 = vunpack.c.l.b16 %v2635
        %v2732 = vunpack.c.l.b16 %v2636
        %v2733 = vunpack.c.l.b16 %v2637
        %v2734 = vunpack.c.l.b16 %v2638
        %v2735 = vunpack.c.l.b16 %v2639
        %v2736 = vunpack.c.l.b16 %v2640
        %v2737 = vunpack.c.l.b16 %v2641
        %v2738 = vunpack.c.l.b16 %v2642
        %v2739 = vunpack.c.l.b16 %v2643
        %v2740 = vunpack.c.l.b16 %v2644
        %v2741 = vpack.c.b16 %v2726, %v2725
        %v2742 = vpack.c.b16 %v2728, %v2727
        %v2743 = vpack.c.b16 %v2730, %v2729
        %v2744 = vpack.c.b16 %v2732, %v2731
        %v2745 = vpack.c.b16 %v2734, %v2733
        %v2746 = vpack.c.b16 %v2736, %v2735
        %v2747 = vpack.c.b16 %v2738, %v2737
        %v2748 = vpack.c.b16 %v2740, %v2739
        %2757 = vmatprep.subr.bf16.mxu0 0
        %2758 = vmatpush1.bf16.msra.mxu0 %v2741
        %2759 = vmatprep.subr.bf16.mxu0 0
        %2760 = vmatpush1.bf16.msra.mxu0 %v2742
        %2761 = vmatprep.subr.bf16.mxu0 0
        %2762 = vmatpush1.bf16.msra.mxu0 %v2743
        %2763 = vmatprep.subr.bf16.mxu0 0
        %2764 = vmatpush1.bf16.msra.mxu0 %v2744
        %2765 = vmatprep.subr.bf16.mxu0 0
        %2766 = vmatpush1.bf16.msra.mxu0 %v2745
        %2767 = vmatprep.subr.bf16.mxu0 0
        %2768 = vmatpush1.bf16.msra.mxu0 %v2746
        %2769 = vmatprep.subr.bf16.mxu0 0
        %2770 = vmatpush1.bf16.msra.mxu0 %v2747
        %2771 = vmatprep.subr.bf16.mxu0 0
        %2772 = vmatpush1.bf16.msra.mxu0 %v2748
        %2773 = vmatprep.subr.bf16.mxu0 0
        %2774 = vmatpush1.bf16.msra.mxu0 0
        %2775 = vmatprep.subr.bf16.mxu0 0
        %2776 = vmatpush1.bf16.msra.mxu0 0
        %2777 = vmatprep.subr.bf16.mxu0 0
        %2778 = vmatpush1.bf16.msra.mxu0 0
        %2779 = vmatprep.subr.bf16.mxu0 0
        %2780 = vmatpush1.bf16.msra.mxu0 0
        %2781 = vmatprep.subr.bf16.mxu0 0
        %2782 = vmatpush1.bf16.msra.mxu0 0
        %2783 = vmatprep.subr.bf16.mxu0 0
        %2784 = vmatpush1.bf16.msra.mxu0 0
        %2785 = vmatprep.subr.bf16.mxu0 0
        %2786 = vmatpush1.bf16.msra.mxu0 0
        %2787 = vmatprep.subr.bf16.mxu0 0
        %2788 = vmatpush1.bf16.msra.mxu0 0
        %2789 = vmatprep.mubr.bf16.mxu0 0
        %2790 = vmatmul.mubr.bf16.gmra.mrb[0].mxu0 %v2677
        %v2791 = vpop.f32.mrb[0].mxu0
        %v2792 = vadd.f32 0.0, %v2791
        %v2793 = vpop.f32.mrb[0].mxu0
        %v2794 = vpop.f32.mrb[0].mxu0
        %v2795 = vadd.f32 0.0, %v2794
        %v2796 = vpop.f32.mrb[0].mxu0
        %2797 = vmatprep.mubr.bf16.mxu0 0
        %2798 = vmatmul.mubr.bf16.gmra.mrb[0].mxu0 %v2678
        %v2799 = vpop.f32.mrb[0].mxu0
        %v2800 = vadd.f32 0.0, %v2799
        %v2801 = vpop.f32.mrb[0].mxu0
        %v2802 = vpop.f32.mrb[0].mxu0
        %v2803 = vadd.f32 0.0, %v2802
        %v2804 = vpop.f32.mrb[0].mxu0
        %2805 = vmatprep.mubr.bf16.mxu0 0
        %2806 = vmatmul.mubr.bf16.gmra.mrb[0].mxu0 %v2679
        %v2807 = vpop.f32.mrb[0].mxu0
        %v2808 = vadd.f32 0.0, %v2807
        %v2809 = vpop.f32.mrb[0].mxu0
        %v2810 = vpop.f32.mrb[0].mxu0
        %v2811 = vadd.f32 0.0, %v2810
        %v2812 = vpop.f32.mrb[0].mxu0
        %2813 = vmatprep.mubr.bf16.mxu0 0
        %2814 = vmatmul.mubr.bf16.gmra.mrb[0].mxu0 %v2680
        %v2815 = vpop.f32.mrb[0].mxu0
        %v2816 = vadd.f32 0.0, %v2815
        %v2817 = vpop.f32.mrb[0].mxu0
        %v2818 = vpop.f32.mrb[0].mxu0
        %v2819 = vadd.f32 0.0, %v2818
        %v2820 = vpop.f32.mrb[0].mxu0
        %2821 = vmatprep.mubr.bf16.mxu0 0
        %2822 = vmatmul.mubr.bf16.gmra.mrb[0].mxu0 %v2681
        %v2823 = vpop.f32.mrb[0].mxu0
        %v2824 = vadd.f32 0.0, %v2823
        %v2825 = vpop.f32.mrb[0].mxu0
        %v2826 = vpop.f32.mrb[0].mxu0
        %v2827 = vadd.f32 0.0, %v2826
        %v2828 = vpop.f32.mrb[0].mxu0
        %2829 = vmatprep.mubr.bf16.mxu0 0
        %2830 = vmatmul.mubr.bf16.gmra.mrb[0].mxu0 %v2682
        %v2831 = vpop.f32.mrb[0].mxu0
        %v2832 = vadd.f32 0.0, %v2831
        %v2833 = vpop.f32.mrb[0].mxu0
        %v2834 = vpop.f32.mrb[0].mxu0
        %v2835 = vadd.f32 0.0, %v2834
        %v2836 = vpop.f32.mrb[0].mxu0
        %2837 = vmatprep.mubr.bf16.mxu0 0
        %2838 = vmatmul.mubr.bf16.gmra.mrb[0].mxu0 %v2683
        %v2839 = vpop.f32.mrb[0].mxu0
        %v2840 = vadd.f32 0.0, %v2839
        %v2841 = vpop.f32.mrb[0].mxu0
        %v2842 = vpop.f32.mrb[0].mxu0
        %v2843 = vadd.f32 0.0, %v2842
        %v2844 = vpop.f32.mrb[0].mxu0
        %2845 = vmatprep.mubr.bf16.mxu0 0
        %2846 = vmatmul.mubr.bf16.gmra.mrb[0].mxu0 %v2684
        %v2847 = vpop.f32.mrb[0].mxu0
        %v2848 = vadd.f32 0.0, %v2847
        %v2849 = vpop.f32.mrb[0].mxu0
        %v2850 = vpop.f32.mrb[0].mxu0
        %v2851 = vadd.f32 0.0, %v2850
        %v2852 = vpop.f32.mrb[0].mxu0
        %2853 = vmatprep.mubr.bf16.mxu0 0
        %2854 = vmatmul.mubr.bf16.gmra.mrb[0].mxu0 %v2685
        %v2855 = vpop.f32.mrb[0].mxu0
        %v2856 = vadd.f32 0.0, %v2855
        %v2857 = vpop.f32.mrb[0].mxu0
        %v2858 = vpop.f32.mrb[0].mxu0
        %v2859 = vadd.f32 0.0, %v2858
        %v2860 = vpop.f32.mrb[0].mxu0
        %2861 = vmatprep.mubr.bf16.mxu0 0
        %2862 = vmatmul.mubr.bf16.gmra.mrb[0].mxu0 %v2686
        %v2863 = vpop.f32.mrb[0].mxu0
        %v2864 = vadd.f32 0.0, %v2863
        %v2865 = vpop.f32.mrb[0].mxu0
        %v2866 = vpop.f32.mrb[0].mxu0
        %v2867 = vadd.f32 0.0, %v2866
        %v2868 = vpop.f32.mrb[0].mxu0
        %2869 = vmatprep.mubr.bf16.mxu0 0
        %2870 = vmatmul.mubr.bf16.gmra.mrb[0].mxu0 %v2687
        %v2871 = vpop.f32.mrb[0].mxu0
        %v2872 = vadd.f32 0.0, %v2871
        %v2873 = vpop.f32.mrb[0].mxu0
        %v2874 = vpop.f32.mrb[0].mxu0
        %v2875 = vadd.f32 0.0, %v2874
        %v2876 = vpop.f32.mrb[0].mxu0
        %2877 = vmatprep.mubr.bf16.mxu0 0
        %2878 = vmatmul.mubr.bf16.gmra.mrb[0].mxu0 %v2688
        %v2879 = vpop.f32.mrb[0].mxu0
        %v2880 = vadd.f32 0.0, %v2879
        %v2881 = vpop.f32.mrb[0].mxu0
        %v2882 = vpop.f32.mrb[0].mxu0
        %v2883 = vadd.f32 0.0, %v2882
        %v2884 = vpop.f32.mrb[0].mxu0
        %2885 = vmatprep.mubr.bf16.mxu0 0
        %2886 = vmatmul.mubr.bf16.gmra.mrb[0].mxu0 %v2689
        %v2887 = vpop.f32.mrb[0].mxu0
        %v2888 = vadd.f32 0.0, %v2887
        %v2889 = vpop.f32.mrb[0].mxu0
        %v2890 = vpop.f32.mrb[0].mxu0
        %v2891 = vadd.f32 0.0, %v2890
        %v2892 = vpop.f32.mrb[0].mxu0
        %2893 = vmatprep.mubr.bf16.mxu0 0
        %2894 = vmatmul.mubr.bf16.gmra.mrb[0].mxu0 %v2690
        %v2895 = vpop.f32.mrb[0].mxu0
        %v2896 = vadd.f32 0.0, %v2895
        %v2897 = vpop.f32.mrb[0].mxu0
        %v2898 = vpop.f32.mrb[0].mxu0
        %v2899 = vadd.f32 0.0, %v2898
        %v2900 = vpop.f32.mrb[0].mxu0
        %2901 = vmatprep.mubr.bf16.mxu0 0
        %2902 = vmatmul.mubr.bf16.gmra.mrb[0].mxu0 %v2691
        %v2903 = vpop.f32.mrb[0].mxu0
        %v2904 = vadd.f32 0.0, %v2903
        %v2905 = vpop.f32.mrb[0].mxu0
        %v2906 = vpop.f32.mrb[0].mxu0
        %v2907 = vadd.f32 0.0, %v2906
        %v2908 = vpop.f32.mrb[0].mxu0
        %2909 = vmatprep.mubr.bf16.mxu0 0
        %2910 = vmatmul.mubr.bf16.gmra.mrb[0].mxu0 %v2692
        %v2911 = vpop.f32.mrb[0].mxu0
        %v2912 = vadd.f32 0.0, %v2911
        %v2913 = vpop.f32.mrb[0].mxu0
        %v2914 = vpop.f32.mrb[0].mxu0
        %v2915 = vadd.f32 0.0, %v2914
        %v2916 = vpop.f32.mrb[0].mxu0
        %2917 = vdwg.mxu0
        %v2918 = vadd.f32 %v2164, %v2792
        %v2919 = vadd.f32 %v2165, %v2795
        %v2920 = vadd.f32 %v2166, %v2800
        %v2921 = vadd.f32 %v2167, %v2803
        %v2922 = vadd.f32 %v2168, %v2808
        %v2923 = vadd.f32 %v2169, %v2811
        %v2924 = vadd.f32 %v2170, %v2816
        %v2925 = vadd.f32 %v2171, %v2819
        %v2926 = vadd.f32 %v2172, %v2824
        %v2927 = vadd.f32 %v2173, %v2827
        %v2928 = vadd.f32 %v2174, %v2832
        %v2929 = vadd.f32 %v2175, %v2835
        %v2930 = vadd.f32 %v2176, %v2840
        %v2931 = vadd.f32 %v2177, %v2843
        %v2932 = vadd.f32 %v2178, %v2848
        %v2933 = vadd.f32 %v2179, %v2851
        %v2934 = vadd.f32 %v2180, %v2856
        %v2935 = vadd.f32 %v2181, %v2859
        %v2936 = vadd.f32 %v2182, %v2864
        %v2937 = vadd.f32 %v2183, %v2867
        %v2938 = vadd.f32 %v2184, %v2872
        %v2939 = vadd.f32 %v2185, %v2875
        %v2940 = vadd.f32 %v2186, %v2880
        %v2941 = vadd.f32 %v2187, %v2883
        %v2942 = vadd.f32 %v2188, %v2888
        %v2943 = vadd.f32 %v2189, %v2891
        %v2944 = vadd.f32 %v2190, %v2896
        %v2945 = vadd.f32 %v2191, %v2899
        %v2946 = vadd.f32 %v2192, %v2904
        %v2947 = vadd.f32 %v2193, %v2907
        %v2948 = vadd.f32 %v2194, %v2912
        %v2949 = vadd.f32 %v2195, %v2915
        %v2950 = vld [vmem:[%s1809] sm:$0xe]
        %v2951 = vld [vmem:[%s1809 + $0xc] sm:$0xe]
        %v2952 = vld [vmem:[%s1809 + $0x18] sm:$0xe]
        %v2953 = vld [vmem:[%s1809 + $0x24] sm:$0xe]
        %v2954 = vld [vmem:[%s1809 + $0x30] sm:$0xe]
        %v2955 = vld [vmem:[%s1809 + $0x3c] sm:$0xe]
        %v2956 = vld [vmem:[%s1809 + $0x48] sm:$0xe]
        %v2957 = vld [vmem:[%s1809 + $0x54] sm:$0xe]
        %v2958 = vld [vmem:[%s1809 + $0x60] sm:$0xe]
        %v2959 = vld [vmem:[%s1809 + $0x6c] sm:$0xe]
        %v2960 = vld [vmem:[%s1809 + $0x78] sm:$0xe]
        %v2961 = vld [vmem:[%s1809 + $0x84] sm:$0xe]
        %v2962 = vld [vmem:[%s1809 + $0x90] sm:$0xe]
        %v2963 = vld [vmem:[%s1809 + $0x9c] sm:$0xe]
        %v2964 = vld [vmem:[%s1809 + $0xa8] sm:$0xe]
        %v2965 = vld [vmem:[%s1809 + $0xb4] sm:$0xe]
        %v3014 = vrot.slane %v2950, 5
        %v3015 = vrot.slane %v3014, 4
        %v3016 = vrot.slane %v2197, 5
        %v3017 = vsel %vm1374, %v3015, %v3016
        %v3018 = vrot.slane %v3016, 4
        %v3019 = vrot.slane %v2198, 5
        %v3020 = vsel %vm1374, %v3018, %v3019
        %v3021 = vrot.slane %v2951, 5
        %v3022 = vrot.slane %v3021, 4
        %v3023 = vrot.slane %v2200, 5
        %v3024 = vsel %vm1374, %v3022, %v3023
        %v3025 = vrot.slane %v3023, 4
        %v3026 = vrot.slane %v2201, 5
        %v3027 = vsel %vm1374, %v3025, %v3026
        %v3028 = vrot.slane %v2952, 5
        %v3029 = vrot.slane %v3028, 4
        %v3030 = vrot.slane %v2203, 5
        %v3031 = vsel %vm1374, %v3029, %v3030
        %v3032 = vrot.slane %v3030, 4
        %v3033 = vrot.slane %v2204, 5
        %v3034 = vsel %vm1374, %v3032, %v3033
        %v3035 = vrot.slane %v2953, 5
        %v3036 = vrot.slane %v3035, 4
        %v3037 = vrot.slane %v2206, 5
        %v3038 = vsel %vm1374, %v3036, %v3037
        %v3039 = vrot.slane %v3037, 4
        %v3040 = vrot.slane %v2207, 5
        %v3041 = vsel %vm1374, %v3039, %v3040
        %v3042 = vrot.slane %v2954, 5
        %v3043 = vrot.slane %v3042, 4
        %v3044 = vrot.slane %v2209, 5
        %v3045 = vsel %vm1374, %v3043, %v3044
        %v3046 = vrot.slane %v3044, 4
        %v3047 = vrot.slane %v2210, 5
        %v3048 = vsel %vm1374, %v3046, %v3047
        %v3049 = vrot.slane %v2955, 5
        %v3050 = vrot.slane %v3049, 4
        %v3051 = vrot.slane %v2212, 5
        %v3052 = vsel %vm1374, %v3050, %v3051
        %v3053 = vrot.slane %v3051, 4
        %v3054 = vrot.slane %v2213, 5
        %v3055 = vsel %vm1374, %v3053, %v3054
        %v3056 = vrot.slane %v2956, 5
        %v3057 = vrot.slane %v3056, 4
        %v3058 = vrot.slane %v2215, 5
        %v3059 = vsel %vm1374, %v3057, %v3058
        %v3060 = vrot.slane %v3058, 4
        %v3061 = vrot.slane %v2216, 5
        %v3062 = vsel %vm1374, %v3060, %v3061
        %v3063 = vrot.slane %v2957, 5
        %v3064 = vrot.slane %v3063, 4
        %v3065 = vrot.slane %v2218, 5
        %v3066 = vsel %vm1374, %v3064, %v3065
        %v3067 = vrot.slane %v3065, 4
        %v3068 = vrot.slane %v2219, 5
        %v3069 = vsel %vm1374, %v3067, %v3068
        %v3070 = vrot.slane %v2958, 5
        %v3071 = vrot.slane %v3070, 4
        %v3072 = vrot.slane %v2221, 5
        %v3073 = vsel %vm1374, %v3071, %v3072
        %v3074 = vrot.slane %v3072, 4
        %v3075 = vrot.slane %v2222, 5
        %v3076 = vsel %vm1374, %v3074, %v3075
        %v3077 = vrot.slane %v2959, 5
        %v3078 = vrot.slane %v3077, 4
        %v3079 = vrot.slane %v2224, 5
        %v3080 = vsel %vm1374, %v3078, %v3079
        %v3081 = vrot.slane %v3079, 4
        %v3082 = vrot.slane %v2225, 5
        %v3083 = vsel %vm1374, %v3081, %v3082
        %v3084 = vrot.slane %v2960, 5
        %v3085 = vrot.slane %v3084, 4
        %v3086 = vrot.slane %v2227, 5
        %v3087 = vsel %vm1374, %v3085, %v3086
        %v3088 = vrot.slane %v3086, 4
        %v3089 = vrot.slane %v2228, 5
        %v3090 = vsel %vm1374, %v3088, %v3089
        %v3091 = vrot.slane %v2961, 5
        %v3092 = vrot.slane %v3091, 4
        %v3093 = vrot.slane %v2230, 5
        %v3094 = vsel %vm1374, %v3092, %v3093
        %v3095 = vrot.slane %v3093, 4
        %v3096 = vrot.slane %v2231, 5
        %v3097 = vsel %vm1374, %v3095, %v3096
        %v3098 = vrot.slane %v2962, 5
        %v3099 = vrot.slane %v3098, 4
        %v3100 = vrot.slane %v2233, 5
        %v3101 = vsel %vm1374, %v3099, %v3100
        %v3102 = vrot.slane %v3100, 4
        %v3103 = vrot.slane %v2234, 5
        %v3104 = vsel %vm1374, %v3102, %v3103
        %v3105 = vrot.slane %v2963, 5
        %v3106 = vrot.slane %v3105, 4
        %v3107 = vrot.slane %v2236, 5
        %v3108 = vsel %vm1374, %v3106, %v3107
        %v3109 = vrot.slane %v3107, 4
        %v3110 = vrot.slane %v2237, 5
        %v3111 = vsel %vm1374, %v3109, %v3110
        %v3112 = vrot.slane %v2964, 5
        %v3113 = vrot.slane %v3112, 4
        %v3114 = vrot.slane %v2239, 5
        %v3115 = vsel %vm1374, %v3113, %v3114
        %v3116 = vrot.slane %v3114, 4
        %v3117 = vrot.slane %v2240, 5
        %v3118 = vsel %vm1374, %v3116, %v3117
        %v3119 = vrot.slane %v2965, 5
        %v3120 = vrot.slane %v3119, 4
        %v3121 = vrot.slane %v2242, 5
        %v3122 = vsel %vm1374, %v3120, %v3121
        %v3123 = vrot.slane %v3121, 4
        %v3124 = vrot.slane %v2243, 5
        %v3125 = vsel %vm1374, %v3123, %v3124
        %s3126 = scalar_lea.vmem %s1, 320
        %v3127 = vld [vmem:[%s3126] sm:$0xf]
        %v3128 = vld [vmem:[%s3126 + $0x4] sm:$0xf]
        %v3129 = vld [vmem:[%s3126 + $0x8] sm:$0xf]
        %v3130 = vld [vmem:[%s3126 + $0xc] sm:$0xf]
        %v3131 = vld [vmem:[%s3126 + $0x10] sm:$0xf]
        %v3132 = vld [vmem:[%s3126 + $0x14] sm:$0xf]
        %v3133 = vld [vmem:[%s3126 + $0x18] sm:$0xf]
        %v3134 = vld [vmem:[%s3126 + $0x1c] sm:$0xf]
        %v3135 = vld [vmem:[%s3126 + $0x20] sm:$0xf]
        %v3136 = vld [vmem:[%s3126 + $0x24] sm:$0xf]
        %v3137 = vld [vmem:[%s3126 + $0x28] sm:$0xf]
        %v3138 = vld [vmem:[%s3126 + $0x2c] sm:$0xf]
        %v3139 = vld [vmem:[%s3126 + $0x30] sm:$0xf]
        %v3140 = vld [vmem:[%s3126 + $0x34] sm:$0xf]
        %v3141 = vld [vmem:[%s3126 + $0x38] sm:$0xf]
        %v3142 = vld [vmem:[%s3126 + $0x3c] sm:$0xf]
        %v3143 = vunpack.c.l.b16 %v3017
        %v3144 = vunpack.c.l.b16 %v3020
        %v3145 = vunpack.c.l.b16 %v3024
        %v3146 = vunpack.c.l.b16 %v3027
        %v3147 = vunpack.c.l.b16 %v3031
        %v3148 = vunpack.c.l.b16 %v3034
        %v3149 = vunpack.c.l.b16 %v3038
        %v3150 = vunpack.c.l.b16 %v3041
        %v3151 = vunpack.c.l.b16 %v3045
        %v3152 = vunpack.c.l.b16 %v3048
        %v3153 = vunpack.c.l.b16 %v3052
        %v3154 = vunpack.c.l.b16 %v3055
        %v3155 = vunpack.c.l.b16 %v3059
        %v3156 = vunpack.c.l.b16 %v3062
        %v3157 = vunpack.c.l.b16 %v3066
        %v3158 = vunpack.c.l.b16 %v3069
        %v3159 = vunpack.c.l.b16 %v3073
        %v3160 = vunpack.c.l.b16 %v3076
        %v3161 = vunpack.c.l.b16 %v3080
        %v3162 = vunpack.c.l.b16 %v3083
        %v3163 = vunpack.c.l.b16 %v3087
        %v3164 = vunpack.c.l.b16 %v3090
        %v3165 = vunpack.c.l.b16 %v3094
        %v3166 = vunpack.c.l.b16 %v3097
        %v3167 = vunpack.c.l.b16 %v3101
        %v3168 = vunpack.c.l.b16 %v3104
        %v3169 = vunpack.c.l.b16 %v3108
        %v3170 = vunpack.c.l.b16 %v3111
        %v3171 = vunpack.c.l.b16 %v3115
        %v3172 = vunpack.c.l.b16 %v3118
        %v3173 = vunpack.c.l.b16 %v3122
        %v3174 = vunpack.c.l.b16 %v3125
        %v3175 = vpack.c.b16 %v3144, %v3143
        %v3176 = vpack.c.b16 %v3146, %v3145
        %v3177 = vpack.c.b16 %v3148, %v3147
        %v3178 = vpack.c.b16 %v3150, %v3149
        %v3179 = vpack.c.b16 %v3152, %v3151
        %v3180 = vpack.c.b16 %v3154, %v3153
        %v3181 = vpack.c.b16 %v3156, %v3155
        %v3182 = vpack.c.b16 %v3158, %v3157
        %v3183 = vpack.c.b16 %v3160, %v3159
        %v3184 = vpack.c.b16 %v3162, %v3161
        %v3185 = vpack.c.b16 %v3164, %v3163
        %v3186 = vpack.c.b16 %v3166, %v3165
        %v3187 = vpack.c.b16 %v3168, %v3167
        %v3188 = vpack.c.b16 %v3170, %v3169
        %v3189 = vpack.c.b16 %v3172, %v3171
        %v3190 = vpack.c.b16 %v3174, %v3173
        %v3223 = vunpack.c.l.b16 %v3127
        %v3224 = vunpack.c.l.b16 %v3128
        %v3225 = vunpack.c.l.b16 %v3129
        %v3226 = vunpack.c.l.b16 %v3130
        %v3227 = vunpack.c.l.b16 %v3131
        %v3228 = vunpack.c.l.b16 %v3132
        %v3229 = vunpack.c.l.b16 %v3133
        %v3230 = vunpack.c.l.b16 %v3134
        %v3231 = vunpack.c.l.b16 %v3135
        %v3232 = vunpack.c.l.b16 %v3136
        %v3233 = vunpack.c.l.b16 %v3137
        %v3234 = vunpack.c.l.b16 %v3138
        %v3235 = vunpack.c.l.b16 %v3139
        %v3236 = vunpack.c.l.b16 %v3140
        %v3237 = vunpack.c.l.b16 %v3141
        %v3238 = vunpack.c.l.b16 %v3142
        %v3239 = vpack.c.b16 %v3224, %v3223
        %v3240 = vpack.c.b16 %v3226, %v3225
        %v3241 = vpack.c.b16 %v3228, %v3227
        %v3242 = vpack.c.b16 %v3230, %v3229
        %v3243 = vpack.c.b16 %v3232, %v3231
        %v3244 = vpack.c.b16 %v3234, %v3233
        %v3245 = vpack.c.b16 %v3236, %v3235
        %v3246 = vpack.c.b16 %v3238, %v3237
        %3255 = vmatprep.subr.bf16.mxu0 0
        %3256 = vmatpush1.bf16.msra.mxu0 %v3239
        %3257 = vmatprep.subr.bf16.mxu0 0
        %3258 = vmatpush1.bf16.msra.mxu0 %v3240
        %3259 = vmatprep.subr.bf16.mxu0 0
        %3260 = vmatpush1.bf16.msra.mxu0 %v3241
        %3261 = vmatprep.subr.bf16.mxu0 0
        %3262 = vmatpush1.bf16.msra.mxu0 %v3242
        %3263 = vmatprep.subr.bf16.mxu0 0
        %3264 = vmatpush1.bf16.msra.mxu0 %v3243
        %3265 = vmatprep.subr.bf16.mxu0 0
        %3266 = vmatpush1.bf16.msra.mxu0 %v3244
        %3267 = vmatprep.subr.bf16.mxu0 0
        %3268 = vmatpush1.bf16.msra.mxu0 %v3245
        %3269 = vmatprep.subr.bf16.mxu0 0
        %3270 = vmatpush1.bf16.msra.mxu0 %v3246
        %3271 = vmatprep.subr.bf16.mxu0 0
        %3272 = vmatpush1.bf16.msra.mxu0 0
        %3273 = vmatprep.subr.bf16.mxu0 0
        %3274 = vmatpush1.bf16.msra.mxu0 0
        %3275 = vmatprep.subr.bf16.mxu0 0
        %3276 = vmatpush1.bf16.msra.mxu0 0
        %3277 = vmatprep.subr.bf16.mxu0 0
        %3278 = vmatpush1.bf16.msra.mxu0 0
        %3279 = vmatprep.subr.bf16.mxu0 0
        %3280 = vmatpush1.bf16.msra.mxu0 0
        %3281 = vmatprep.subr.bf16.mxu0 0
        %3282 = vmatpush1.bf16.msra.mxu0 0
        %3283 = vmatprep.subr.bf16.mxu0 0
        %3284 = vmatpush1.bf16.msra.mxu0 0
        %3285 = vmatprep.subr.bf16.mxu0 0
        %3286 = vmatpush1.bf16.msra.mxu0 0
        %3287 = vmatprep.mubr.bf16.mxu0 0
        %3288 = vmatmul.mubr.bf16.gmra.mrb[0].mxu0 %v3175
        %v3289 = vpop.f32.mrb[0].mxu0
        %v3290 = vadd.f32 0.0, %v3289
        %v3291 = vpop.f32.mrb[0].mxu0
        %v3292 = vpop.f32.mrb[0].mxu0
        %v3293 = vadd.f32 0.0, %v3292
        %v3294 = vpop.f32.mrb[0].mxu0
        %3295 = vmatprep.mubr.bf16.mxu0 0
        %3296 = vmatmul.mubr.bf16.gmra.mrb[0].mxu0 %v3176
        %v3297 = vpop.f32.mrb[0].mxu0
        %v3298 = vadd.f32 0.0, %v3297
        %v3299 = vpop.f32.mrb[0].mxu0
        %v3300 = vpop.f32.mrb[0].mxu0
        %v3301 = vadd.f32 0.0, %v3300
        %v3302 = vpop.f32.mrb[0].mxu0
        %3303 = vmatprep.mubr.bf16.mxu0 0
        %3304 = vmatmul.mubr.bf16.gmra.mrb[0].mxu0 %v3177
        %v3305 = vpop.f32.mrb[0].mxu0
        %v3306 = vadd.f32 0.0, %v3305
        %v3307 = vpop.f32.mrb[0].mxu0
        %v3308 = vpop.f32.mrb[0].mxu0
        %v3309 = vadd.f32 0.0, %v3308
        %v3310 = vpop.f32.mrb[0].mxu0
        %3311 = vmatprep.mubr.bf16.mxu0 0
        %3312 = vmatmul.mubr.bf16.gmra.mrb[0].mxu0 %v3178
        %v3313 = vpop.f32.mrb[0].mxu0
        %v3314 = vadd.f32 0.0, %v3313
        %v3315 = vpop.f32.mrb[0].mxu0
        %v3316 = vpop.f32.mrb[0].mxu0
        %v3317 = vadd.f32 0.0, %v3316
        %v3318 = vpop.f32.mrb[0].mxu0
        %3319 = vmatprep.mubr.bf16.mxu0 0
        %3320 = vmatmul.mubr.bf16.gmra.mrb[0].mxu0 %v3179
        %v3321 = vpop.f32.mrb[0].mxu0
        %v3322 = vadd.f32 0.0, %v3321
        %v3323 = vpop.f32.mrb[0].mxu0
        %v3324 = vpop.f32.mrb[0].mxu0
        %v3325 = vadd.f32 0.0, %v3324
        %v3326 = vpop.f32.mrb[0].mxu0
        %3327 = vmatprep.mubr.bf16.mxu0 0
        %3328 = vmatmul.mubr.bf16.gmra.mrb[0].mxu0 %v3180
        %v3329 = vpop.f32.mrb[0].mxu0
        %v3330 = vadd.f32 0.0, %v3329
        %v3331 = vpop.f32.mrb[0].mxu0
        %v3332 = vpop.f32.mrb[0].mxu0
        %v3333 = vadd.f32 0.0, %v3332
        %v3334 = vpop.f32.mrb[0].mxu0
        %3335 = vmatprep.mubr.bf16.mxu0 0
        %3336 = vmatmul.mubr.bf16.gmra.mrb[0].mxu0 %v3181
        %v3337 = vpop.f32.mrb[0].mxu0
        %v3338 = vadd.f32 0.0, %v3337
        %v3339 = vpop.f32.mrb[0].mxu0
        %v3340 = vpop.f32.mrb[0].mxu0
        %v3341 = vadd.f32 0.0, %v3340
        %v3342 = vpop.f32.mrb[0].mxu0
        %3343 = vmatprep.mubr.bf16.mxu0 0
        %3344 = vmatmul.mubr.bf16.gmra.mrb[0].mxu0 %v3182
        %v3345 = vpop.f32.mrb[0].mxu0
        %v3346 = vadd.f32 0.0, %v3345
        %v3347 = vpop.f32.mrb[0].mxu0
        %v3348 = vpop.f32.mrb[0].mxu0
        %v3349 = vadd.f32 0.0, %v3348
        %v3350 = vpop.f32.mrb[0].mxu0
        %3351 = vmatprep.mubr.bf16.mxu0 0
        %3352 = vmatmul.mubr.bf16.gmra.mrb[0].mxu0 %v3183
        %v3353 = vpop.f32.mrb[0].mxu0
        %v3354 = vadd.f32 0.0, %v3353
        %v3355 = vpop.f32.mrb[0].mxu0
        %v3356 = vpop.f32.mrb[0].mxu0
        %v3357 = vadd.f32 0.0, %v3356
        %v3358 = vpop.f32.mrb[0].mxu0
        %3359 = vmatprep.mubr.bf16.mxu0 0
        %3360 = vmatmul.mubr.bf16.gmra.mrb[0].mxu0 %v3184
        %v3361 = vpop.f32.mrb[0].mxu0
        %v3362 = vadd.f32 0.0, %v3361
        %v3363 = vpop.f32.mrb[0].mxu0
        %v3364 = vpop.f32.mrb[0].mxu0
        %v3365 = vadd.f32 0.0, %v3364
        %v3366 = vpop.f32.mrb[0].mxu0
        %3367 = vmatprep.mubr.bf16.mxu0 0
        %3368 = vmatmul.mubr.bf16.gmra.mrb[0].mxu0 %v3185
        %v3369 = vpop.f32.mrb[0].mxu0
        %v3370 = vadd.f32 0.0, %v3369
        %v3371 = vpop.f32.mrb[0].mxu0
        %v3372 = vpop.f32.mrb[0].mxu0
        %v3373 = vadd.f32 0.0, %v3372
        %v3374 = vpop.f32.mrb[0].mxu0
        %3375 = vmatprep.mubr.bf16.mxu0 0
        %3376 = vmatmul.mubr.bf16.gmra.mrb[0].mxu0 %v3186
        %v3377 = vpop.f32.mrb[0].mxu0
        %v3378 = vadd.f32 0.0, %v3377
        %v3379 = vpop.f32.mrb[0].mxu0
        %v3380 = vpop.f32.mrb[0].mxu0
        %v3381 = vadd.f32 0.0, %v3380
        %v3382 = vpop.f32.mrb[0].mxu0
        %3383 = vmatprep.mubr.bf16.mxu0 0
        %3384 = vmatmul.mubr.bf16.gmra.mrb[0].mxu0 %v3187
        %v3385 = vpop.f32.mrb[0].mxu0
        %v3386 = vadd.f32 0.0, %v3385
        %v3387 = vpop.f32.mrb[0].mxu0
        %v3388 = vpop.f32.mrb[0].mxu0
        %v3389 = vadd.f32 0.0, %v3388
        %v3390 = vpop.f32.mrb[0].mxu0
        %3391 = vmatprep.mubr.bf16.mxu0 0
        %3392 = vmatmul.mubr.bf16.gmra.mrb[0].mxu0 %v3188
        %v3393 = vpop.f32.mrb[0].mxu0
        %v3394 = vadd.f32 0.0, %v3393
        %v3395 = vpop.f32.mrb[0].mxu0
        %v3396 = vpop.f32.mrb[0].mxu0
        %v3397 = vadd.f32 0.0, %v3396
        %v3398 = vpop.f32.mrb[0].mxu0
        %3399 = vmatprep.mubr.bf16.mxu0 0
        %3400 = vmatmul.mubr.bf16.gmra.mrb[0].mxu0 %v3189
        %v3401 = vpop.f32.mrb[0].mxu0
        %v3402 = vadd.f32 0.0, %v3401
        %v3403 = vpop.f32.mrb[0].mxu0
        %v3404 = vpop.f32.mrb[0].mxu0
        %v3405 = vadd.f32 0.0, %v3404
        %v3406 = vpop.f32.mrb[0].mxu0
        %3407 = vmatprep.mubr.bf16.mxu0 0
        %3408 = vmatmul.mubr.bf16.gmra.mrb[0].mxu0 %v3190
        %v3409 = vpop.f32.mrb[0].mxu0
        %v3410 = vadd.f32 0.0, %v3409
        %v3411 = vpop.f32.mrb[0].mxu0
        %v3412 = vpop.f32.mrb[0].mxu0
        %v3413 = vadd.f32 0.0, %v3412
        %v3414 = vpop.f32.mrb[0].mxu0
        %3415 = vdwg.mxu0
        %v3416 = vadd.f32 %v2918, %v3290
        %v3417 = vadd.f32 %v2919, %v3293
        %v3418 = vadd.f32 %v2920, %v3298
        %v3419 = vadd.f32 %v2921, %v3301
        %v3420 = vadd.f32 %v2922, %v3306
        %v3421 = vadd.f32 %v2923, %v3309
        %v3422 = vadd.f32 %v2924, %v3314
        %v3423 = vadd.f32 %v2925, %v3317
        %v3424 = vadd.f32 %v2926, %v3322
        %v3425 = vadd.f32 %v2927, %v3325
        %v3426 = vadd.f32 %v2928, %v3330
        %v3427 = vadd.f32 %v2929, %v3333
        %v3428 = vadd.f32 %v2930, %v3338
        %v3429 = vadd.f32 %v2931, %v3341
        %v3430 = vadd.f32 %v2932, %v3346
        %v3431 = vadd.f32 %v2933, %v3349
        %v3432 = vadd.f32 %v2934, %v3354
        %v3433 = vadd.f32 %v2935, %v3357
        %v3434 = vadd.f32 %v2936, %v3362
        %v3435 = vadd.f32 %v2937, %v3365
        %v3436 = vadd.f32 %v2938, %v3370
        %v3437 = vadd.f32 %v2939, %v3373
        %v3438 = vadd.f32 %v2940, %v3378
        %v3439 = vadd.f32 %v2941, %v3381
        %v3440 = vadd.f32 %v2942, %v3386
        %v3441 = vadd.f32 %v2943, %v3389
        %v3442 = vadd.f32 %v2944, %v3394
        %v3443 = vadd.f32 %v2945, %v3397
        %v3444 = vadd.f32 %v2946, %v3402
        %v3445 = vadd.f32 %v2947, %v3405
        %v3446 = vadd.f32 %v2948, %v3410
        %v3447 = vadd.f32 %v2949, %v3413
        %s3448 = scalar_lea.vmem %s276, 24
        %v3449 = vld [vmem:[%s3448] sm:$0xf]
        %v3450 = vld [vmem:[%s3448 + $0x4] sm:$0xf]
        %v3451 = vld [vmem:[%s3448 + $0xc] sm:$0xf]
        %v3452 = vld [vmem:[%s3448 + $0x10] sm:$0xf]
        %v3453 = vld [vmem:[%s3448 + $0x18] sm:$0xf]
        %v3454 = vld [vmem:[%s3448 + $0x1c] sm:$0xf]
        %v3455 = vld [vmem:[%s3448 + $0x24] sm:$0xf]
        %v3456 = vld [vmem:[%s3448 + $0x28] sm:$0xf]
        %v3457 = vld [vmem:[%s3448 + $0x30] sm:$0xf]
        %v3458 = vld [vmem:[%s3448 + $0x34] sm:$0xf]
        %v3459 = vld [vmem:[%s3448 + $0x3c] sm:$0xf]
        %v3460 = vld [vmem:[%s3448 + $0x40] sm:$0xf]
        %v3461 = vld [vmem:[%s3448 + $0x48] sm:$0xf]
        %v3462 = vld [vmem:[%s3448 + $0x4c] sm:$0xf]
        %v3463 = vld [vmem:[%s3448 + $0x54] sm:$0xf]
        %v3464 = vld [vmem:[%s3448 + $0x58] sm:$0xf]
        %v3465 = vld [vmem:[%s3448 + $0x60] sm:$0xf]
        %v3466 = vld [vmem:[%s3448 + $0x64] sm:$0xf]
        %v3467 = vld [vmem:[%s3448 + $0x6c] sm:$0xf]
        %v3468 = vld [vmem:[%s3448 + $0x70] sm:$0xf]
        %v3469 = vld [vmem:[%s3448 + $0x78] sm:$0xf]
        %v3470 = vld [vmem:[%s3448 + $0x7c] sm:$0xf]
        %v3471 = vld [vmem:[%s3448 + $0x84] sm:$0xf]
        %v3472 = vld [vmem:[%s3448 + $0x88] sm:$0xf]
        %v3473 = vld [vmem:[%s3448 + $0x90] sm:$0xf]
        %v3474 = vld [vmem:[%s3448 + $0x94] sm:$0xf]
        %v3475 = vld [vmem:[%s3448 + $0x9c] sm:$0xf]
        %v3476 = vld [vmem:[%s3448 + $0xa0] sm:$0xf]
        %v3477 = vld [vmem:[%s3448 + $0xa8] sm:$0xf]
        %v3478 = vld [vmem:[%s3448 + $0xac] sm:$0xf]
        %v3479 = vld [vmem:[%s3448 + $0xb4] sm:$0xf]
        %v3480 = vld [vmem:[%s3448 + $0xb8] sm:$0xf]
        %s3481 = scalar_lea.vmem %s1, 384
        %v3482 = vld [vmem:[%s3481] sm:$0xf]
        %v3483 = vld [vmem:[%s3481 + $0x4] sm:$0xf]
        %v3484 = vld [vmem:[%s3481 + $0x8] sm:$0xf]
        %v3485 = vld [vmem:[%s3481 + $0xc] sm:$0xf]
        %v3486 = vld [vmem:[%s3481 + $0x10] sm:$0xf]
        %v3487 = vld [vmem:[%s3481 + $0x14] sm:$0xf]
        %v3488 = vld [vmem:[%s3481 + $0x18] sm:$0xf]
        %v3489 = vld [vmem:[%s3481 + $0x1c] sm:$0xf]
        %v3490 = vld [vmem:[%s3481 + $0x20] sm:$0xf]
        %v3491 = vld [vmem:[%s3481 + $0x24] sm:$0xf]
        %v3492 = vld [vmem:[%s3481 + $0x28] sm:$0xf]
        %v3493 = vld [vmem:[%s3481 + $0x2c] sm:$0xf]
        %v3494 = vld [vmem:[%s3481 + $0x30] sm:$0xf]
        %v3495 = vld [vmem:[%s3481 + $0x34] sm:$0xf]
        %v3496 = vld [vmem:[%s3481 + $0x38] sm:$0xf]
        %v3497 = vld [vmem:[%s3481 + $0x3c] sm:$0xf]
        %v3530 = vunpack.c.l.b16 %v3449
        %v3531 = vunpack.c.l.b16 %v3450
        %v3532 = vunpack.c.l.b16 %v3451
        %v3533 = vunpack.c.l.b16 %v3452
        %v3534 = vunpack.c.l.b16 %v3453
        %v3535 = vunpack.c.l.b16 %v3454
        %v3536 = vunpack.c.l.b16 %v3455
        %v3537 = vunpack.c.l.b16 %v3456
        %v3538 = vunpack.c.l.b16 %v3457
        %v3539 = vunpack.c.l.b16 %v3458
        %v3540 = vunpack.c.l.b16 %v3459
        %v3541 = vunpack.c.l.b16 %v3460
        %v3542 = vunpack.c.l.b16 %v3461
        %v3543 = vunpack.c.l.b16 %v3462
        %v3544 = vunpack.c.l.b16 %v3463
        %v3545 = vunpack.c.l.b16 %v3464
        %v3546 = vunpack.c.l.b16 %v3465
        %v3547 = vunpack.c.l.b16 %v3466
        %v3548 = vunpack.c.l.b16 %v3467
        %v3549 = vunpack.c.l.b16 %v3468
        %v3550 = vunpack.c.l.b16 %v3469
        %v3551 = vunpack.c.l.b16 %v3470
        %v3552 = vunpack.c.l.b16 %v3471
        %v3553 = vunpack.c.l.b16 %v3472
        %v3554 = vunpack.c.l.b16 %v3473
        %v3555 = vunpack.c.l.b16 %v3474
        %v3556 = vunpack.c.l.b16 %v3475
        %v3557 = vunpack.c.l.b16 %v3476
        %v3558 = vunpack.c.l.b16 %v3477
        %v3559 = vunpack.c.l.b16 %v3478
        %v3560 = vunpack.c.l.b16 %v3479
        %v3561 = vunpack.c.l.b16 %v3480
        %v3562 = vpack.c.b16 %v3531, %v3530
        %v3563 = vpack.c.b16 %v3533, %v3532
        %v3564 = vpack.c.b16 %v3535, %v3534
        %v3565 = vpack.c.b16 %v3537, %v3536
        %v3566 = vpack.c.b16 %v3539, %v3538
        %v3567 = vpack.c.b16 %v3541, %v3540
        %v3568 = vpack.c.b16 %v3543, %v3542
        %v3569 = vpack.c.b16 %v3545, %v3544
        %v3570 = vpack.c.b16 %v3547, %v3546
        %v3571 = vpack.c.b16 %v3549, %v3548
        %v3572 = vpack.c.b16 %v3551, %v3550
        %v3573 = vpack.c.b16 %v3553, %v3552
        %v3574 = vpack.c.b16 %v3555, %v3554
        %v3575 = vpack.c.b16 %v3557, %v3556
        %v3576 = vpack.c.b16 %v3559, %v3558
        %v3577 = vpack.c.b16 %v3561, %v3560
        %v3610 = vunpack.c.l.b16 %v3482
        %v3611 = vunpack.c.l.b16 %v3483
        %v3612 = vunpack.c.l.b16 %v3484
        %v3613 = vunpack.c.l.b16 %v3485
        %v3614 = vunpack.c.l.b16 %v3486
        %v3615 = vunpack.c.l.b16 %v3487
        %v3616 = vunpack.c.l.b16 %v3488
        %v3617 = vunpack.c.l.b16 %v3489
        %v3618 = vunpack.c.l.b16 %v3490
        %v3619 = vunpack.c.l.b16 %v3491
        %v3620 = vunpack.c.l.b16 %v3492
        %v3621 = vunpack.c.l.b16 %v3493
        %v3622 = vunpack.c.l.b16 %v3494
        %v3623 = vunpack.c.l.b16 %v3495
        %v3624 = vunpack.c.l.b16 %v3496
        %v3625 = vunpack.c.l.b16 %v3497
        %v3626 = vpack.c.b16 %v3611, %v3610
        %v3627 = vpack.c.b16 %v3613, %v3612
        %v3628 = vpack.c.b16 %v3615, %v3614
        %v3629 = vpack.c.b16 %v3617, %v3616
        %v3630 = vpack.c.b16 %v3619, %v3618
        %v3631 = vpack.c.b16 %v3621, %v3620
        %v3632 = vpack.c.b16 %v3623, %v3622
        %v3633 = vpack.c.b16 %v3625, %v3624
        %3642 = vmatprep.subr.bf16.mxu0 0
        %3643 = vmatpush1.bf16.msra.mxu0 %v3626
        %3644 = vmatprep.subr.bf16.mxu0 0
        %3645 = vmatpush1.bf16.msra.mxu0 %v3627
        %3646 = vmatprep.subr.bf16.mxu0 0
        %3647 = vmatpush1.bf16.msra.mxu0 %v3628
        %3648 = vmatprep.subr.bf16.mxu0 0
        %3649 = vmatpush1.bf16.msra.mxu0 %v3629
        %3650 = vmatprep.subr.bf16.mxu0 0
        %3651 = vmatpush1.bf16.msra.mxu0 %v3630
        %3652 = vmatprep.subr.bf16.mxu0 0
        %3653 = vmatpush1.bf16.msra.mxu0 %v3631
        %3654 = vmatprep.subr.bf16.mxu0 0
        %3655 = vmatpush1.bf16.msra.mxu0 %v3632
        %3656 = vmatprep.subr.bf16.mxu0 0
        %3657 = vmatpush1.bf16.msra.mxu0 %v3633
        %3658 = vmatprep.subr.bf16.mxu0 0
        %3659 = vmatpush1.bf16.msra.mxu0 0
        %3660 = vmatprep.subr.bf16.mxu0 0
        %3661 = vmatpush1.bf16.msra.mxu0 0
        %3662 = vmatprep.subr.bf16.mxu0 0
        %3663 = vmatpush1.bf16.msra.mxu0 0
        %3664 = vmatprep.subr.bf16.mxu0 0
        %3665 = vmatpush1.bf16.msra.mxu0 0
        %3666 = vmatprep.subr.bf16.mxu0 0
        %3667 = vmatpush1.bf16.msra.mxu0 0
        %3668 = vmatprep.subr.bf16.mxu0 0
        %3669 = vmatpush1.bf16.msra.mxu0 0
        %3670 = vmatprep.subr.bf16.mxu0 0
        %3671 = vmatpush1.bf16.msra.mxu0 0
        %3672 = vmatprep.subr.bf16.mxu0 0
        %3673 = vmatpush1.bf16.msra.mxu0 0
        %3674 = vmatprep.mubr.bf16.mxu0 0
        %3675 = vmatmul.mubr.bf16.gmra.mrb[0].mxu0 %v3562
        %v3676 = vpop.f32.mrb[0].mxu0
        %v3677 = vadd.f32 0.0, %v3676
        %v3678 = vpop.f32.mrb[0].mxu0
        %v3679 = vpop.f32.mrb[0].mxu0
        %v3680 = vadd.f32 0.0, %v3679
        %v3681 = vpop.f32.mrb[0].mxu0
        %3682 = vmatprep.mubr.bf16.mxu0 0
        %3683 = vmatmul.mubr.bf16.gmra.mrb[0].mxu0 %v3563
        %v3684 = vpop.f32.mrb[0].mxu0
        %v3685 = vadd.f32 0.0, %v3684
        %v3686 = vpop.f32.mrb[0].mxu0
        %v3687 = vpop.f32.mrb[0].mxu0
        %v3688 = vadd.f32 0.0, %v3687
        %v3689 = vpop.f32.mrb[0].mxu0
        %3690 = vmatprep.mubr.bf16.mxu0 0
        %3691 = vmatmul.mubr.bf16.gmra.mrb[0].mxu0 %v3564
        %v3692 = vpop.f32.mrb[0].mxu0
        %v3693 = vadd.f32 0.0, %v3692
        %v3694 = vpop.f32.mrb[0].mxu0
        %v3695 = vpop.f32.mrb[0].mxu0
        %v3696 = vadd.f32 0.0, %v3695
        %v3697 = vpop.f32.mrb[0].mxu0
        %3698 = vmatprep.mubr.bf16.mxu0 0
        %3699 = vmatmul.mubr.bf16.gmra.mrb[0].mxu0 %v3565
        %v3700 = vpop.f32.mrb[0].mxu0
        %v3701 = vadd.f32 0.0, %v3700
        %v3702 = vpop.f32.mrb[0].mxu0
        %v3703 = vpop.f32.mrb[0].mxu0
        %v3704 = vadd.f32 0.0, %v3703
        %v3705 = vpop.f32.mrb[0].mxu0
        %3706 = vmatprep.mubr.bf16.mxu0 0
        %3707 = vmatmul.mubr.bf16.gmra.mrb[0].mxu0 %v3566
        %v3708 = vpop.f32.mrb[0].mxu0
        %v3709 = vadd.f32 0.0, %v3708
        %v3710 = vpop.f32.mrb[0].mxu0
        %v3711 = vpop.f32.mrb[0].mxu0
        %v3712 = vadd.f32 0.0, %v3711
        %v3713 = vpop.f32.mrb[0].mxu0
        %3714 = vmatprep.mubr.bf16.mxu0 0
        %3715 = vmatmul.mubr.bf16.gmra.mrb[0].mxu0 %v3567
        %v3716 = vpop.f32.mrb[0].mxu0
        %v3717 = vadd.f32 0.0, %v3716
        %v3718 = vpop.f32.mrb[0].mxu0
        %v3719 = vpop.f32.mrb[0].mxu0
        %v3720 = vadd.f32 0.0, %v3719
        %v3721 = vpop.f32.mrb[0].mxu0
        %3722 = vmatprep.mubr.bf16.mxu0 0
        %3723 = vmatmul.mubr.bf16.gmra.mrb[0].mxu0 %v3568
        %v3724 = vpop.f32.mrb[0].mxu0
        %v3725 = vadd.f32 0.0, %v3724
        %v3726 = vpop.f32.mrb[0].mxu0
        %v3727 = vpop.f32.mrb[0].mxu0
        %v3728 = vadd.f32 0.0, %v3727
        %v3729 = vpop.f32.mrb[0].mxu0
        %3730 = vmatprep.mubr.bf16.mxu0 0
        %3731 = vmatmul.mubr.bf16.gmra.mrb[0].mxu0 %v3569
        %v3732 = vpop.f32.mrb[0].mxu0
        %v3733 = vadd.f32 0.0, %v3732
        %v3734 = vpop.f32.mrb[0].mxu0
        %v3735 = vpop.f32.mrb[0].mxu0
        %v3736 = vadd.f32 0.0, %v3735
        %v3737 = vpop.f32.mrb[0].mxu0
        %3738 = vmatprep.mubr.bf16.mxu0 0
        %3739 = vmatmul.mubr.bf16.gmra.mrb[0].mxu0 %v3570
        %v3740 = vpop.f32.mrb[0].mxu0
        %v3741 = vadd.f32 0.0, %v3740
        %v3742 = vpop.f32.mrb[0].mxu0
        %v3743 = vpop.f32.mrb[0].mxu0
        %v3744 = vadd.f32 0.0, %v3743
        %v3745 = vpop.f32.mrb[0].mxu0
        %3746 = vmatprep.mubr.bf16.mxu0 0
        %3747 = vmatmul.mubr.bf16.gmra.mrb[0].mxu0 %v3571
        %v3748 = vpop.f32.mrb[0].mxu0
        %v3749 = vadd.f32 0.0, %v3748
        %v3750 = vpop.f32.mrb[0].mxu0
        %v3751 = vpop.f32.mrb[0].mxu0
        %v3752 = vadd.f32 0.0, %v3751
        %v3753 = vpop.f32.mrb[0].mxu0
        %3754 = vmatprep.mubr.bf16.mxu0 0
        %3755 = vmatmul.mubr.bf16.gmra.mrb[0].mxu0 %v3572
        %v3756 = vpop.f32.mrb[0].mxu0
        %v3757 = vadd.f32 0.0, %v3756
        %v3758 = vpop.f32.mrb[0].mxu0
        %v3759 = vpop.f32.mrb[0].mxu0
        %v3760 = vadd.f32 0.0, %v3759
        %v3761 = vpop.f32.mrb[0].mxu0
        %3762 = vmatprep.mubr.bf16.mxu0 0
        %3763 = vmatmul.mubr.bf16.gmra.mrb[0].mxu0 %v3573
        %v3764 = vpop.f32.mrb[0].mxu0
        %v3765 = vadd.f32 0.0, %v3764
        %v3766 = vpop.f32.mrb[0].mxu0
        %v3767 = vpop.f32.mrb[0].mxu0
        %v3768 = vadd.f32 0.0, %v3767
        %v3769 = vpop.f32.mrb[0].mxu0
        %3770 = vmatprep.mubr.bf16.mxu0 0
        %3771 = vmatmul.mubr.bf16.gmra.mrb[0].mxu0 %v3574
        %v3772 = vpop.f32.mrb[0].mxu0
        %v3773 = vadd.f32 0.0, %v3772
        %v3774 = vpop.f32.mrb[0].mxu0
        %v3775 = vpop.f32.mrb[0].mxu0
        %v3776 = vadd.f32 0.0, %v3775
        %v3777 = vpop.f32.mrb[0].mxu0
        %3778 = vmatprep.mubr.bf16.mxu0 0
        %3779 = vmatmul.mubr.bf16.gmra.mrb[0].mxu0 %v3575
        %v3780 = vpop.f32.mrb[0].mxu0
        %v3781 = vadd.f32 0.0, %v3780
        %v3782 = vpop.f32.mrb[0].mxu0
        %v3783 = vpop.f32.mrb[0].mxu0
        %v3784 = vadd.f32 0.0, %v3783
        %v3785 = vpop.f32.mrb[0].mxu0
        %3786 = vmatprep.mubr.bf16.mxu0 0
        %3787 = vmatmul.mubr.bf16.gmra.mrb[0].mxu0 %v3576
        %v3788 = vpop.f32.mrb[0].mxu0
        %v3789 = vadd.f32 0.0, %v3788
        %v3790 = vpop.f32.mrb[0].mxu0
        %v3791 = vpop.f32.mrb[0].mxu0
        %v3792 = vadd.f32 0.0, %v3791
        %v3793 = vpop.f32.mrb[0].mxu0
        %3794 = vmatprep.mubr.bf16.mxu0 0
        %3795 = vmatmul.mubr.bf16.gmra.mrb[0].mxu0 %v3577
        %v3796 = vpop.f32.mrb[0].mxu0
        %v3797 = vadd.f32 0.0, %v3796
        %v3798 = vpop.f32.mrb[0].mxu0
        %v3799 = vpop.f32.mrb[0].mxu0
        %v3800 = vadd.f32 0.0, %v3799
        %v3801 = vpop.f32.mrb[0].mxu0
        %3802 = vdwg.mxu0
        %v3803 = vadd.f32 %v3416, %v3677
        %v3804 = vadd.f32 %v3417, %v3680
        %v3805 = vadd.f32 %v3418, %v3685
        %v3806 = vadd.f32 %v3419, %v3688
        %v3807 = vadd.f32 %v3420, %v3693
        %v3808 = vadd.f32 %v3421, %v3696
        %v3809 = vadd.f32 %v3422, %v3701
        %v3810 = vadd.f32 %v3423, %v3704
        %v3811 = vadd.f32 %v3424, %v3709
        %v3812 = vadd.f32 %v3425, %v3712
        %v3813 = vadd.f32 %v3426, %v3717
        %v3814 = vadd.f32 %v3427, %v3720
        %v3815 = vadd.f32 %v3428, %v3725
        %v3816 = vadd.f32 %v3429, %v3728
        %v3817 = vadd.f32 %v3430, %v3733
        %v3818 = vadd.f32 %v3431, %v3736
        %v3819 = vadd.f32 %v3432, %v3741
        %v3820 = vadd.f32 %v3433, %v3744
        %v3821 = vadd.f32 %v3434, %v3749
        %v3822 = vadd.f32 %v3435, %v3752
        %v3823 = vadd.f32 %v3436, %v3757
        %v3824 = vadd.f32 %v3437, %v3760
        %v3825 = vadd.f32 %v3438, %v3765
        %v3826 = vadd.f32 %v3439, %v3768
        %v3827 = vadd.f32 %v3440, %v3773
        %v3828 = vadd.f32 %v3441, %v3776
        %v3829 = vadd.f32 %v3442, %v3781
        %v3830 = vadd.f32 %v3443, %v3784
        %v3831 = vadd.f32 %v3444, %v3789
        %v3832 = vadd.f32 %v3445, %v3792
        %v3833 = vadd.f32 %v3446, %v3797
        %v3834 = vadd.f32 %v3447, %v3800
        %v3835 = vld [vmem:[%s3448] sm:$0xf]
        %v3836 = vld [vmem:[%s3448 + $0x4] sm:$0xf]
        %v3837 = vld [vmem:[%s3448 + $0x8] sm:$0x1]
        %v3838 = vld [vmem:[%s3448 + $0xc] sm:$0xf]
        %v3839 = vld [vmem:[%s3448 + $0x10] sm:$0xf]
        %v3840 = vld [vmem:[%s3448 + $0x14] sm:$0x1]
        %v3841 = vld [vmem:[%s3448 + $0x18] sm:$0xf]
        %v3842 = vld [vmem:[%s3448 + $0x1c] sm:$0xf]
        %v3843 = vld [vmem:[%s3448 + $0x20] sm:$0x1]
        %v3844 = vld [vmem:[%s3448 + $0x24] sm:$0xf]
        %v3845 = vld [vmem:[%s3448 + $0x28] sm:$0xf]
        %v3846 = vld [vmem:[%s3448 + $0x2c] sm:$0x1]
        %v3847 = vld [vmem:[%s3448 + $0x30] sm:$0xf]
        %v3848 = vld [vmem:[%s3448 + $0x34] sm:$0xf]
        %v3849 = vld [vmem:[%s3448 + $0x38] sm:$0x1]
        %v3850 = vld [vmem:[%s3448 + $0x3c] sm:$0xf]
        %v3851 = vld [vmem:[%s3448 + $0x40] sm:$0xf]
        %v3852 = vld [vmem:[%s3448 + $0x44] sm:$0x1]
        %v3853 = vld [vmem:[%s3448 + $0x48] sm:$0xf]
        %v3854 = vld [vmem:[%s3448 + $0x4c] sm:$0xf]
        %v3855 = vld [vmem:[%s3448 + $0x50] sm:$0x1]
        %v3856 = vld [vmem:[%s3448 + $0x54] sm:$0xf]
        %v3857 = vld [vmem:[%s3448 + $0x58] sm:$0xf]
        %v3858 = vld [vmem:[%s3448 + $0x5c] sm:$0x1]
        %v3859 = vld [vmem:[%s3448 + $0x60] sm:$0xf]
        %v3860 = vld [vmem:[%s3448 + $0x64] sm:$0xf]
        %v3861 = vld [vmem:[%s3448 + $0x68] sm:$0x1]
        %v3862 = vld [vmem:[%s3448 + $0x6c] sm:$0xf]
        %v3863 = vld [vmem:[%s3448 + $0x70] sm:$0xf]
        %v3864 = vld [vmem:[%s3448 + $0x74] sm:$0x1]
        %v3865 = vld [vmem:[%s3448 + $0x78] sm:$0xf]
        %v3866 = vld [vmem:[%s3448 + $0x7c] sm:$0xf]
        %v3867 = vld [vmem:[%s3448 + $0x80] sm:$0x1]
        %v3868 = vld [vmem:[%s3448 + $0x84] sm:$0xf]
        %v3869 = vld [vmem:[%s3448 + $0x88] sm:$0xf]
        %v3870 = vld [vmem:[%s3448 + $0x8c] sm:$0x1]
        %v3871 = vld [vmem:[%s3448 + $0x90] sm:$0xf]
        %v3872 = vld [vmem:[%s3448 + $0x94] sm:$0xf]
        %v3873 = vld [vmem:[%s3448 + $0x98] sm:$0x1]
        %v3874 = vld [vmem:[%s3448 + $0x9c] sm:$0xf]
        %v3875 = vld [vmem:[%s3448 + $0xa0] sm:$0xf]
        %v3876 = vld [vmem:[%s3448 + $0xa4] sm:$0x1]
        %v3877 = vld [vmem:[%s3448 + $0xa8] sm:$0xf]
        %v3878 = vld [vmem:[%s3448 + $0xac] sm:$0xf]
        %v3879 = vld [vmem:[%s3448 + $0xb0] sm:$0x1]
        %v3880 = vld [vmem:[%s3448 + $0xb4] sm:$0xf]
        %v3881 = vld [vmem:[%s3448 + $0xb8] sm:$0xf]
        %v3882 = vld [vmem:[%s3448 + $0xbc] sm:$0x1]
        %v3884 = vshrl.u32 %v3835, 16
        %v3886 = vrot.slane %v3884, 4
        %v3887 = vshll.u32 %v3835, 16
        %v3889 = vrot.slane %v3887, 5
        %v3890 = vor.u32 %v3886, %v3889
        %v3891 = vrot.slane %v3890, 4
        %v3893 = vshll.u32 %v3836, 16
        %v3895 = vrot.slane %v3893, 5
        %v3896 = vsel %vm344, %v3891, %v3895
        %v3897 = vshrl.u32 %v3836, 16
        %v3899 = vrot.slane %v3897, 4
        %v3900 = vor.u32 %v3899, %v3895
        %v3901 = vrot.slane %v3900, 4
        %v3903 = vshll.u32 %v3837, 16
        %v3905 = vrot.slane %v3903, 5
        %v3906 = vsel %vm344, %v3901, %v3905
        %v3908 = vshrl.u32 %v3838, 16
        %v3910 = vrot.slane %v3908, 4
        %v3911 = vshll.u32 %v3838, 16
        %v3913 = vrot.slane %v3911, 5
        %v3914 = vor.u32 %v3910, %v3913
        %v3915 = vrot.slane %v3914, 4
        %v3917 = vshll.u32 %v3839, 16
        %v3919 = vrot.slane %v3917, 5
        %v3920 = vsel %vm344, %v3915, %v3919
        %v3921 = vshrl.u32 %v3839, 16
        %v3923 = vrot.slane %v3921, 4
        %v3924 = vor.u32 %v3923, %v3919
        %v3925 = vrot.slane %v3924, 4
        %v3927 = vshll.u32 %v3840, 16
        %v3929 = vrot.slane %v3927, 5
        %v3930 = vsel %vm344, %v3925, %v3929
        %v3932 = vshrl.u32 %v3841, 16
        %v3934 = vrot.slane %v3932, 4
        %v3935 = vshll.u32 %v3841, 16
        %v3937 = vrot.slane %v3935, 5
        %v3938 = vor.u32 %v3934, %v3937
        %v3939 = vrot.slane %v3938, 4
        %v3941 = vshll.u32 %v3842, 16
        %v3943 = vrot.slane %v3941, 5
        %v3944 = vsel %vm344, %v3939, %v3943
        %v3945 = vshrl.u32 %v3842, 16
        %v3947 = vrot.slane %v3945, 4
        %v3948 = vor.u32 %v3947, %v3943
        %v3949 = vrot.slane %v3948, 4
        %v3951 = vshll.u32 %v3843, 16
        %v3953 = vrot.slane %v3951, 5
        %v3954 = vsel %vm344, %v3949, %v3953
        %v3956 = vshrl.u32 %v3844, 16
        %v3958 = vrot.slane %v3956, 4
        %v3959 = vshll.u32 %v3844, 16
        %v3961 = vrot.slane %v3959, 5
        %v3962 = vor.u32 %v3958, %v3961
        %v3963 = vrot.slane %v3962, 4
        %v3965 = vshll.u32 %v3845, 16
        %v3967 = vrot.slane %v3965, 5
        %v3968 = vsel %vm344, %v3963, %v3967
        %v3969 = vshrl.u32 %v3845, 16
        %v3971 = vrot.slane %v3969, 4
        %v3972 = vor.u32 %v3971, %v3967
        %v3973 = vrot.slane %v3972, 4
        %v3975 = vshll.u32 %v3846, 16
        %v3977 = vrot.slane %v3975, 5
        %v3978 = vsel %vm344, %v3973, %v3977
        %v3980 = vshrl.u32 %v3847, 16
        %v3982 = vrot.slane %v3980, 4
        %v3983 = vshll.u32 %v3847, 16
        %v3985 = vrot.slane %v3983, 5
        %v3986 = vor.u32 %v3982, %v3985
        %v3987 = vrot.slane %v3986, 4
        %v3989 = vshll.u32 %v3848, 16
        %v3991 = vrot.slane %v3989, 5
        %v3992 = vsel %vm344, %v3987, %v3991
        %v3993 = vshrl.u32 %v3848, 16
        %v3995 = vrot.slane %v3993, 4
        %v3996 = vor.u32 %v3995, %v3991
        %v3997 = vrot.slane %v3996, 4
        %v3999 = vshll.u32 %v3849, 16
        %v4001 = vrot.slane %v3999, 5
        %v4002 = vsel %vm344, %v3997, %v4001
        %v4004 = vshrl.u32 %v3850, 16
        %v4006 = vrot.slane %v4004, 4
        %v4007 = vshll.u32 %v3850, 16
        %v4009 = vrot.slane %v4007, 5
        %v4010 = vor.u32 %v4006, %v4009
        %v4011 = vrot.slane %v4010, 4
        %v4013 = vshll.u32 %v3851, 16
        %v4015 = vrot.slane %v4013, 5
        %v4016 = vsel %vm344, %v4011, %v4015
        %v4017 = vshrl.u32 %v3851, 16
        %v4019 = vrot.slane %v4017, 4
        %v4020 = vor.u32 %v4019, %v4015
        %v4021 = vrot.slane %v4020, 4
        %v4023 = vshll.u32 %v3852, 16
        %v4025 = vrot.slane %v4023, 5
        %v4026 = vsel %vm344, %v4021, %v4025
        %v4028 = vshrl.u32 %v3853, 16
        %v4030 = vrot.slane %v4028, 4
        %v4031 = vshll.u32 %v3853, 16
        %v4033 = vrot.slane %v4031, 5
        %v4034 = vor.u32 %v4030, %v4033
        %v4035 = vrot.slane %v4034, 4
        %v4037 = vshll.u32 %v3854, 16
        %v4039 = vrot.slane %v4037, 5
        %v4040 = vsel %vm344, %v4035, %v4039
        %v4041 = vshrl.u32 %v3854, 16
        %v4043 = vrot.slane %v4041, 4
        %v4044 = vor.u32 %v4043, %v4039
        %v4045 = vrot.slane %v4044, 4
        %v4047 = vshll.u32 %v3855, 16
        %v4049 = vrot.slane %v4047, 5
        %v4050 = vsel %vm344, %v4045, %v4049
        %v4052 = vshrl.u32 %v3856, 16
        %v4054 = vrot.slane %v4052, 4
        %v4055 = vshll.u32 %v3856, 16
        %v4057 = vrot.slane %v4055, 5
        %v4058 = vor.u32 %v4054, %v4057
        %v4059 = vrot.slane %v4058, 4
        %v4061 = vshll.u32 %v3857, 16
        %v4063 = vrot.slane %v4061, 5
        %v4064 = vsel %vm344, %v4059, %v4063
        %v4065 = vshrl.u32 %v3857, 16
        %v4067 = vrot.slane %v4065, 4
        %v4068 = vor.u32 %v4067, %v4063
        %v4069 = vrot.slane %v4068, 4
        %v4071 = vshll.u32 %v3858, 16
        %v4073 = vrot.slane %v4071, 5
        %v4074 = vsel %vm344, %v4069, %v4073
        %v4076 = vshrl.u32 %v3859, 16
        %v4078 = vrot.slane %v4076, 4
        %v4079 = vshll.u32 %v3859, 16
        %v4081 = vrot.slane %v4079, 5
        %v4082 = vor.u32 %v4078, %v4081
        %v4083 = vrot.slane %v4082, 4
        %v4085 = vshll.u32 %v3860, 16
        %v4087 = vrot.slane %v4085, 5
        %v4088 = vsel %vm344, %v4083, %v4087
        %v4089 = vshrl.u32 %v3860, 16
        %v4091 = vrot.slane %v4089, 4
        %v4092 = vor.u32 %v4091, %v4087
        %v4093 = vrot.slane %v4092, 4
        %v4095 = vshll.u32 %v3861, 16
        %v4097 = vrot.slane %v4095, 5
        %v4098 = vsel %vm344, %v4093, %v4097
        %v4100 = vshrl.u32 %v3862, 16
        %v4102 = vrot.slane %v4100, 4
        %v4103 = vshll.u32 %v3862, 16
        %v4105 = vrot.slane %v4103, 5
        %v4106 = vor.u32 %v4102, %v4105
        %v4107 = vrot.slane %v4106, 4
        %v4109 = vshll.u32 %v3863, 16
        %v4111 = vrot.slane %v4109, 5
        %v4112 = vsel %vm344, %v4107, %v4111
        %v4113 = vshrl.u32 %v3863, 16
        %v4115 = vrot.slane %v4113, 4
        %v4116 = vor.u32 %v4115, %v4111
        %v4117 = vrot.slane %v4116, 4
        %v4119 = vshll.u32 %v3864, 16
        %v4121 = vrot.slane %v4119, 5
        %v4122 = vsel %vm344, %v4117, %v4121
        %v4124 = vshrl.u32 %v3865, 16
        %v4126 = vrot.slane %v4124, 4
        %v4127 = vshll.u32 %v3865, 16
        %v4129 = vrot.slane %v4127, 5
        %v4130 = vor.u32 %v4126, %v4129
        %v4131 = vrot.slane %v4130, 4
        %v4133 = vshll.u32 %v3866, 16
        %v4135 = vrot.slane %v4133, 5
        %v4136 = vsel %vm344, %v4131, %v4135
        %v4137 = vshrl.u32 %v3866, 16
        %v4139 = vrot.slane %v4137, 4
        %v4140 = vor.u32 %v4139, %v4135
        %v4141 = vrot.slane %v4140, 4
        %v4143 = vshll.u32 %v3867, 16
        %v4145 = vrot.slane %v4143, 5
        %v4146 = vsel %vm344, %v4141, %v4145
        %v4148 = vshrl.u32 %v3868, 16
        %v4150 = vrot.slane %v4148, 4
        %v4151 = vshll.u32 %v3868, 16
        %v4153 = vrot.slane %v4151, 5
        %v4154 = vor.u32 %v4150, %v4153
        %v4155 = vrot.slane %v4154, 4
        %v4157 = vshll.u32 %v3869, 16
        %v4159 = vrot.slane %v4157, 5
        %v4160 = vsel %vm344, %v4155, %v4159
        %v4161 = vshrl.u32 %v3869, 16
        %v4163 = vrot.slane %v4161, 4
        %v4164 = vor.u32 %v4163, %v4159
        %v4165 = vrot.slane %v4164, 4
        %v4167 = vshll.u32 %v3870, 16
        %v4169 = vrot.slane %v4167, 5
        %v4170 = vsel %vm344, %v4165, %v4169
        %v4172 = vshrl.u32 %v3871, 16
        %v4174 = vrot.slane %v4172, 4
        %v4175 = vshll.u32 %v3871, 16
        %v4177 = vrot.slane %v4175, 5
        %v4178 = vor.u32 %v4174, %v4177
        %v4179 = vrot.slane %v4178, 4
        %v4181 = vshll.u32 %v3872, 16
        %v4183 = vrot.slane %v4181, 5
        %v4184 = vsel %vm344, %v4179, %v4183
        %v4185 = vshrl.u32 %v3872, 16
        %v4187 = vrot.slane %v4185, 4
        %v4188 = vor.u32 %v4187, %v4183
        %v4189 = vrot.slane %v4188, 4
        %v4191 = vshll.u32 %v3873, 16
        %v4193 = vrot.slane %v4191, 5
        %v4194 = vsel %vm344, %v4189, %v4193
        %v4196 = vshrl.u32 %v3874, 16
        %v4198 = vrot.slane %v4196, 4
        %v4199 = vshll.u32 %v3874, 16
        %v4201 = vrot.slane %v4199, 5
        %v4202 = vor.u32 %v4198, %v4201
        %v4203 = vrot.slane %v4202, 4
        %v4205 = vshll.u32 %v3875, 16
        %v4207 = vrot.slane %v4205, 5
        %v4208 = vsel %vm344, %v4203, %v4207
        %v4209 = vshrl.u32 %v3875, 16
        %v4211 = vrot.slane %v4209, 4
        %v4212 = vor.u32 %v4211, %v4207
        %v4213 = vrot.slane %v4212, 4
        %v4215 = vshll.u32 %v3876, 16
        %v4217 = vrot.slane %v4215, 5
        %v4218 = vsel %vm344, %v4213, %v4217
        %v4220 = vshrl.u32 %v3877, 16
        %v4222 = vrot.slane %v4220, 4
        %v4223 = vshll.u32 %v3877, 16
        %v4225 = vrot.slane %v4223, 5
        %v4226 = vor.u32 %v4222, %v4225
        %v4227 = vrot.slane %v4226, 4
        %v4229 = vshll.u32 %v3878, 16
        %v4231 = vrot.slane %v4229, 5
        %v4232 = vsel %vm344, %v4227, %v4231
        %v4233 = vshrl.u32 %v3878, 16
        %v4235 = vrot.slane %v4233, 4
        %v4236 = vor.u32 %v4235, %v4231
        %v4237 = vrot.slane %v4236, 4
        %v4239 = vshll.u32 %v3879, 16
        %v4241 = vrot.slane %v4239, 5
        %v4242 = vsel %vm344, %v4237, %v4241
        %v4244 = vshrl.u32 %v3880, 16
        %v4246 = vrot.slane %v4244, 4
        %v4247 = vshll.u32 %v3880, 16
        %v4249 = vrot.slane %v4247, 5
        %v4250 = vor.u32 %v4246, %v4249
        %v4251 = vrot.slane %v4250, 4
        %v4253 = vshll.u32 %v3881, 16
        %v4255 = vrot.slane %v4253, 5
        %v4256 = vsel %vm344, %v4251, %v4255
        %v4257 = vshrl.u32 %v3881, 16
        %v4259 = vrot.slane %v4257, 4
        %v4260 = vor.u32 %v4259, %v4255
        %v4261 = vrot.slane %v4260, 4
        %v4263 = vshll.u32 %v3882, 16
        %v4265 = vrot.slane %v4263, 5
        %v4266 = vsel %vm344, %v4261, %v4265
        %s4267 = scalar_lea.vmem %s1, 448
        %v4268 = vld [vmem:[%s4267] sm:$0xf]
        %v4269 = vld [vmem:[%s4267 + $0x4] sm:$0xf]
        %v4270 = vld [vmem:[%s4267 + $0x8] sm:$0xf]
        %v4271 = vld [vmem:[%s4267 + $0xc] sm:$0xf]
        %v4272 = vld [vmem:[%s4267 + $0x10] sm:$0xf]
        %v4273 = vld [vmem:[%s4267 + $0x14] sm:$0xf]
        %v4274 = vld [vmem:[%s4267 + $0x18] sm:$0xf]
        %v4275 = vld [vmem:[%s4267 + $0x1c] sm:$0xf]
        %v4276 = vld [vmem:[%s4267 + $0x20] sm:$0xf]
        %v4277 = vld [vmem:[%s4267 + $0x24] sm:$0xf]
        %v4278 = vld [vmem:[%s4267 + $0x28] sm:$0xf]
        %v4279 = vld [vmem:[%s4267 + $0x2c] sm:$0xf]
        %v4280 = vld [vmem:[%s4267 + $0x30] sm:$0xf]
        %v4281 = vld [vmem:[%s4267 + $0x34] sm:$0xf]
        %v4282 = vld [vmem:[%s4267 + $0x38] sm:$0xf]
        %v4283 = vld [vmem:[%s4267 + $0x3c] sm:$0xf]
        %v4284 = vunpack.c.l.b16 %v3896
        %v4285 = vunpack.c.l.b16 %v3906
        %v4286 = vunpack.c.l.b16 %v3920
        %v4287 = vunpack.c.l.b16 %v3930
        %v4288 = vunpack.c.l.b16 %v3944
        %v4289 = vunpack.c.l.b16 %v3954
        %v4290 = vunpack.c.l.b16 %v3968
        %v4291 = vunpack.c.l.b16 %v3978
        %v4292 = vunpack.c.l.b16 %v3992
        %v4293 = vunpack.c.l.b16 %v4002
        %v4294 = vunpack.c.l.b16 %v4016
        %v4295 = vunpack.c.l.b16 %v4026
        %v4296 = vunpack.c.l.b16 %v4040
        %v4297 = vunpack.c.l.b16 %v4050
        %v4298 = vunpack.c.l.b16 %v4064
        %v4299 = vunpack.c.l.b16 %v4074
        %v4300 = vunpack.c.l.b16 %v4088
        %v4301 = vunpack.c.l.b16 %v4098
        %v4302 = vunpack.c.l.b16 %v4112
        %v4303 = vunpack.c.l.b16 %v4122
        %v4304 = vunpack.c.l.b16 %v4136
        %v4305 = vunpack.c.l.b16 %v4146
        %v4306 = vunpack.c.l.b16 %v4160
        %v4307 = vunpack.c.l.b16 %v4170
        %v4308 = vunpack.c.l.b16 %v4184
        %v4309 = vunpack.c.l.b16 %v4194
        %v4310 = vunpack.c.l.b16 %v4208
        %v4311 = vunpack.c.l.b16 %v4218
        %v4312 = vunpack.c.l.b16 %v4232
        %v4313 = vunpack.c.l.b16 %v4242
        %v4314 = vunpack.c.l.b16 %v4256
        %v4315 = vunpack.c.l.b16 %v4266
        %v4316 = vpack.c.b16 %v4285, %v4284
        %v4317 = vpack.c.b16 %v4287, %v4286
        %v4318 = vpack.c.b16 %v4289, %v4288
        %v4319 = vpack.c.b16 %v4291, %v4290
        %v4320 = vpack.c.b16 %v4293, %v4292
        %v4321 = vpack.c.b16 %v4295, %v4294
        %v4322 = vpack.c.b16 %v4297, %v4296
        %v4323 = vpack.c.b16 %v4299, %v4298
        %v4324 = vpack.c.b16 %v4301, %v4300
        %v4325 = vpack.c.b16 %v4303, %v4302
        %v4326 = vpack.c.b16 %v4305, %v4304
        %v4327 = vpack.c.b16 %v4307, %v4306
        %v4328 = vpack.c.b16 %v4309, %v4308
        %v4329 = vpack.c.b16 %v4311, %v4310
        %v4330 = vpack.c.b16 %v4313, %v4312
        %v4331 = vpack.c.b16 %v4315, %v4314
        %v4364 = vunpack.c.l.b16 %v4268
        %v4365 = vunpack.c.l.b16 %v4269
        %v4366 = vunpack.c.l.b16 %v4270
        %v4367 = vunpack.c.l.b16 %v4271
        %v4368 = vunpack.c.l.b16 %v4272
        %v4369 = vunpack.c.l.b16 %v4273
        %v4370 = vunpack.c.l.b16 %v4274
        %v4371 = vunpack.c.l.b16 %v4275
        %v4372 = vunpack.c.l.b16 %v4276
        %v4373 = vunpack.c.l.b16 %v4277
        %v4374 = vunpack.c.l.b16 %v4278
        %v4375 = vunpack.c.l.b16 %v4279
        %v4376 = vunpack.c.l.b16 %v4280
        %v4377 = vunpack.c.l.b16 %v4281
        %v4378 = vunpack.c.l.b16 %v4282
        %v4379 = vunpack.c.l.b16 %v4283
        %v4380 = vpack.c.b16 %v4365, %v4364
        %v4381 = vpack.c.b16 %v4367, %v4366
        %v4382 = vpack.c.b16 %v4369, %v4368
        %v4383 = vpack.c.b16 %v4371, %v4370
        %v4384 = vpack.c.b16 %v4373, %v4372
        %v4385 = vpack.c.b16 %v4375, %v4374
        %v4386 = vpack.c.b16 %v4377, %v4376
        %v4387 = vpack.c.b16 %v4379, %v4378
        %4396 = vmatprep.subr.bf16.mxu0 0
        %4397 = vmatpush1.bf16.msra.mxu0 %v4380
        %4398 = vmatprep.subr.bf16.mxu0 0
        %4399 = vmatpush1.bf16.msra.mxu0 %v4381
        %4400 = vmatprep.subr.bf16.mxu0 0
        %4401 = vmatpush1.bf16.msra.mxu0 %v4382
        %4402 = vmatprep.subr.bf16.mxu0 0
        %4403 = vmatpush1.bf16.msra.mxu0 %v4383
        %4404 = vmatprep.subr.bf16.mxu0 0
        %4405 = vmatpush1.bf16.msra.mxu0 %v4384
        %4406 = vmatprep.subr.bf16.mxu0 0
        %4407 = vmatpush1.bf16.msra.mxu0 %v4385
        %4408 = vmatprep.subr.bf16.mxu0 0
        %4409 = vmatpush1.bf16.msra.mxu0 %v4386
        %4410 = vmatprep.subr.bf16.mxu0 0
        %4411 = vmatpush1.bf16.msra.mxu0 %v4387
        %4412 = vmatprep.subr.bf16.mxu0 0
        %4413 = vmatpush1.bf16.msra.mxu0 0
        %4414 = vmatprep.subr.bf16.mxu0 0
        %4415 = vmatpush1.bf16.msra.mxu0 0
        %4416 = vmatprep.subr.bf16.mxu0 0
        %4417 = vmatpush1.bf16.msra.mxu0 0
        %4418 = vmatprep.subr.bf16.mxu0 0
        %4419 = vmatpush1.bf16.msra.mxu0 0
        %4420 = vmatprep.subr.bf16.mxu0 0
        %4421 = vmatpush1.bf16.msra.mxu0 0
        %4422 = vmatprep.subr.bf16.mxu0 0
        %4423 = vmatpush1.bf16.msra.mxu0 0
        %4424 = vmatprep.subr.bf16.mxu0 0
        %4425 = vmatpush1.bf16.msra.mxu0 0
        %4426 = vmatprep.subr.bf16.mxu0 0
        %4427 = vmatpush1.bf16.msra.mxu0 0
        %4428 = vmatprep.mubr.bf16.mxu0 0
        %4429 = vmatmul.mubr.bf16.gmra.mrb[0].mxu0 %v4316
        %v4430 = vpop.f32.mrb[0].mxu0
        %v4431 = vadd.f32 0.0, %v4430
        %v4432 = vpop.f32.mrb[0].mxu0
        %v4433 = vpop.f32.mrb[0].mxu0
        %v4434 = vadd.f32 0.0, %v4433
        %v4435 = vpop.f32.mrb[0].mxu0
        %4436 = vmatprep.mubr.bf16.mxu0 0
        %4437 = vmatmul.mubr.bf16.gmra.mrb[0].mxu0 %v4317
        %v4438 = vpop.f32.mrb[0].mxu0
        %v4439 = vadd.f32 0.0, %v4438
        %v4440 = vpop.f32.mrb[0].mxu0
        %v4441 = vpop.f32.mrb[0].mxu0
        %v4442 = vadd.f32 0.0, %v4441
        %v4443 = vpop.f32.mrb[0].mxu0
        %4444 = vmatprep.mubr.bf16.mxu0 0
        %4445 = vmatmul.mubr.bf16.gmra.mrb[0].mxu0 %v4318
        %v4446 = vpop.f32.mrb[0].mxu0
        %v4447 = vadd.f32 0.0, %v4446
        %v4448 = vpop.f32.mrb[0].mxu0
        %v4449 = vpop.f32.mrb[0].mxu0
        %v4450 = vadd.f32 0.0, %v4449
        %v4451 = vpop.f32.mrb[0].mxu0
        %4452 = vmatprep.mubr.bf16.mxu0 0
        %4453 = vmatmul.mubr.bf16.gmra.mrb[0].mxu0 %v4319
        %v4454 = vpop.f32.mrb[0].mxu0
        %v4455 = vadd.f32 0.0, %v4454
        %v4456 = vpop.f32.mrb[0].mxu0
        %v4457 = vpop.f32.mrb[0].mxu0
        %v4458 = vadd.f32 0.0, %v4457
        %v4459 = vpop.f32.mrb[0].mxu0
        %4460 = vmatprep.mubr.bf16.mxu0 0
        %4461 = vmatmul.mubr.bf16.gmra.mrb[0].mxu0 %v4320
        %v4462 = vpop.f32.mrb[0].mxu0
        %v4463 = vadd.f32 0.0, %v4462
        %v4464 = vpop.f32.mrb[0].mxu0
        %v4465 = vpop.f32.mrb[0].mxu0
        %v4466 = vadd.f32 0.0, %v4465
        %v4467 = vpop.f32.mrb[0].mxu0
        %4468 = vmatprep.mubr.bf16.mxu0 0
        %4469 = vmatmul.mubr.bf16.gmra.mrb[0].mxu0 %v4321
        %v4470 = vpop.f32.mrb[0].mxu0
        %v4471 = vadd.f32 0.0, %v4470
        %v4472 = vpop.f32.mrb[0].mxu0
        %v4473 = vpop.f32.mrb[0].mxu0
        %v4474 = vadd.f32 0.0, %v4473
        %v4475 = vpop.f32.mrb[0].mxu0
        %4476 = vmatprep.mubr.bf16.mxu0 0
        %4477 = vmatmul.mubr.bf16.gmra.mrb[0].mxu0 %v4322
        %v4478 = vpop.f32.mrb[0].mxu0
        %v4479 = vadd.f32 0.0, %v4478
        %v4480 = vpop.f32.mrb[0].mxu0
        %v4481 = vpop.f32.mrb[0].mxu0
        %v4482 = vadd.f32 0.0, %v4481
        %v4483 = vpop.f32.mrb[0].mxu0
        %4484 = vmatprep.mubr.bf16.mxu0 0
        %4485 = vmatmul.mubr.bf16.gmra.mrb[0].mxu0 %v4323
        %v4486 = vpop.f32.mrb[0].mxu0
        %v4487 = vadd.f32 0.0, %v4486
        %v4488 = vpop.f32.mrb[0].mxu0
        %v4489 = vpop.f32.mrb[0].mxu0
        %v4490 = vadd.f32 0.0, %v4489
        %v4491 = vpop.f32.mrb[0].mxu0
        %4492 = vmatprep.mubr.bf16.mxu0 0
        %4493 = vmatmul.mubr.bf16.gmra.mrb[0].mxu0 %v4324
        %v4494 = vpop.f32.mrb[0].mxu0
        %v4495 = vadd.f32 0.0, %v4494
        %v4496 = vpop.f32.mrb[0].mxu0
        %v4497 = vpop.f32.mrb[0].mxu0
        %v4498 = vadd.f32 0.0, %v4497
        %v4499 = vpop.f32.mrb[0].mxu0
        %4500 = vmatprep.mubr.bf16.mxu0 0
        %4501 = vmatmul.mubr.bf16.gmra.mrb[0].mxu0 %v4325
        %v4502 = vpop.f32.mrb[0].mxu0
        %v4503 = vadd.f32 0.0, %v4502
        %v4504 = vpop.f32.mrb[0].mxu0
        %v4505 = vpop.f32.mrb[0].mxu0
        %v4506 = vadd.f32 0.0, %v4505
        %v4507 = vpop.f32.mrb[0].mxu0
        %4508 = vmatprep.mubr.bf16.mxu0 0
        %4509 = vmatmul.mubr.bf16.gmra.mrb[0].mxu0 %v4326
        %v4510 = vpop.f32.mrb[0].mxu0
        %v4511 = vadd.f32 0.0, %v4510
        %v4512 = vpop.f32.mrb[0].mxu0
        %v4513 = vpop.f32.mrb[0].mxu0
        %v4514 = vadd.f32 0.0, %v4513
        %v4515 = vpop.f32.mrb[0].mxu0
        %4516 = vmatprep.mubr.bf16.mxu0 0
        %4517 = vmatmul.mubr.bf16.gmra.mrb[0].mxu0 %v4327
        %v4518 = vpop.f32.mrb[0].mxu0
        %v4519 = vadd.f32 0.0, %v4518
        %v4520 = vpop.f32.mrb[0].mxu0
        %v4521 = vpop.f32.mrb[0].mxu0
        %v4522 = vadd.f32 0.0, %v4521
        %v4523 = vpop.f32.mrb[0].mxu0
        %4524 = vmatprep.mubr.bf16.mxu0 0
        %4525 = vmatmul.mubr.bf16.gmra.mrb[0].mxu0 %v4328
        %v4526 = vpop.f32.mrb[0].mxu0
        %v4527 = vadd.f32 0.0, %v4526
        %v4528 = vpop.f32.mrb[0].mxu0
        %v4529 = vpop.f32.mrb[0].mxu0
        %v4530 = vadd.f32 0.0, %v4529
        %v4531 = vpop.f32.mrb[0].mxu0
        %4532 = vmatprep.mubr.bf16.mxu0 0
        %4533 = vmatmul.mubr.bf16.gmra.mrb[0].mxu0 %v4329
        %v4534 = vpop.f32.mrb[0].mxu0
        %v4535 = vadd.f32 0.0, %v4534
        %v4536 = vpop.f32.mrb[0].mxu0
        %v4537 = vpop.f32.mrb[0].mxu0
        %v4538 = vadd.f32 0.0, %v4537
        %v4539 = vpop.f32.mrb[0].mxu0
        %4540 = vmatprep.mubr.bf16.mxu0 0
        %4541 = vmatmul.mubr.bf16.gmra.mrb[0].mxu0 %v4330
        %v4542 = vpop.f32.mrb[0].mxu0
        %v4543 = vadd.f32 0.0, %v4542
        %v4544 = vpop.f32.mrb[0].mxu0
        %v4545 = vpop.f32.mrb[0].mxu0
        %v4546 = vadd.f32 0.0, %v4545
        %v4547 = vpop.f32.mrb[0].mxu0
        %4548 = vmatprep.mubr.bf16.mxu0 0
        %4549 = vmatmul.mubr.bf16.gmra.mrb[0].mxu0 %v4331
        %v4550 = vpop.f32.mrb[0].mxu0
        %v4551 = vadd.f32 0.0, %v4550
        %v4552 = vpop.f32.mrb[0].mxu0
        %v4553 = vpop.f32.mrb[0].mxu0
        %v4554 = vadd.f32 0.0, %v4553
        %v4555 = vpop.f32.mrb[0].mxu0
        %4556 = vdwg.mxu0
        %v4557 = vadd.f32 %v3803, %v4431
        %v4558 = vadd.f32 %v3804, %v4434
        %v4559 = vadd.f32 %v3805, %v4439
        %v4560 = vadd.f32 %v3806, %v4442
        %v4561 = vadd.f32 %v3807, %v4447
        %v4562 = vadd.f32 %v3808, %v4450
        %v4563 = vadd.f32 %v3809, %v4455
        %v4564 = vadd.f32 %v3810, %v4458
        %v4565 = vadd.f32 %v3811, %v4463
        %v4566 = vadd.f32 %v3812, %v4466
        %v4567 = vadd.f32 %v3813, %v4471
        %v4568 = vadd.f32 %v3814, %v4474
        %v4569 = vadd.f32 %v3815, %v4479
        %v4570 = vadd.f32 %v3816, %v4482
        %v4571 = vadd.f32 %v3817, %v4487
        %v4572 = vadd.f32 %v3818, %v4490
        %v4573 = vadd.f32 %v3819, %v4495
        %v4574 = vadd.f32 %v3820, %v4498
        %v4575 = vadd.f32 %v3821, %v4503
        %v4576 = vadd.f32 %v3822, %v4506
        %v4577 = vadd.f32 %v3823, %v4511
        %v4578 = vadd.f32 %v3824, %v4514
        %v4579 = vadd.f32 %v3825, %v4519
        %v4580 = vadd.f32 %v3826, %v4522
        %v4581 = vadd.f32 %v3827, %v4527
        %v4582 = vadd.f32 %v3828, %v4530
        %v4583 = vadd.f32 %v3829, %v4535
        %v4584 = vadd.f32 %v3830, %v4538
        %v4585 = vadd.f32 %v3831, %v4543
        %v4586 = vadd.f32 %v3832, %v4546
        %v4587 = vadd.f32 %v3833, %v4551
        %v4588 = vadd.f32 %v3834, %v4554
        %v4589 = vld [vmem:[%s3448] sm:$0xe]
        %v4590 = vld [vmem:[%s3448 + $0xc] sm:$0xe]
        %v4591 = vld [vmem:[%s3448 + $0x18] sm:$0xe]
        %v4592 = vld [vmem:[%s3448 + $0x24] sm:$0xe]
        %v4593 = vld [vmem:[%s3448 + $0x30] sm:$0xe]
        %v4594 = vld [vmem:[%s3448 + $0x3c] sm:$0xe]
        %v4595 = vld [vmem:[%s3448 + $0x48] sm:$0xe]
        %v4596 = vld [vmem:[%s3448 + $0x54] sm:$0xe]
        %v4597 = vld [vmem:[%s3448 + $0x60] sm:$0xe]
        %v4598 = vld [vmem:[%s3448 + $0x6c] sm:$0xe]
        %v4599 = vld [vmem:[%s3448 + $0x78] sm:$0xe]
        %v4600 = vld [vmem:[%s3448 + $0x84] sm:$0xe]
        %v4601 = vld [vmem:[%s3448 + $0x90] sm:$0xe]
        %v4602 = vld [vmem:[%s3448 + $0x9c] sm:$0xe]
        %v4603 = vld [vmem:[%s3448 + $0xa8] sm:$0xe]
        %v4604 = vld [vmem:[%s3448 + $0xb4] sm:$0xe]
        %v4653 = vrot.slane %v4589, 5
        %v4654 = vrot.slane %v4653, 4
        %v4655 = vrot.slane %v3836, 5
        %v4656 = vsel %vm1374, %v4654, %v4655
        %v4657 = vrot.slane %v4655, 4
        %v4658 = vrot.slane %v3837, 5
        %v4659 = vsel %vm1374, %v4657, %v4658
        %v4660 = vrot.slane %v4590, 5
        %v4661 = vrot.slane %v4660, 4
        %v4662 = vrot.slane %v3839, 5
        %v4663 = vsel %vm1374, %v4661, %v4662
        %v4664 = vrot.slane %v4662, 4
        %v4665 = vrot.slane %v3840, 5
        %v4666 = vsel %vm1374, %v4664, %v4665
        %v4667 = vrot.slane %v4591, 5
        %v4668 = vrot.slane %v4667, 4
        %v4669 = vrot.slane %v3842, 5
        %v4670 = vsel %vm1374, %v4668, %v4669
        %v4671 = vrot.slane %v4669, 4
        %v4672 = vrot.slane %v3843, 5
        %v4673 = vsel %vm1374, %v4671, %v4672
        %v4674 = vrot.slane %v4592, 5
        %v4675 = vrot.slane %v4674, 4
        %v4676 = vrot.slane %v3845, 5
        %v4677 = vsel %vm1374, %v4675, %v4676
        %v4678 = vrot.slane %v4676, 4
        %v4679 = vrot.slane %v3846, 5
        %v4680 = vsel %vm1374, %v4678, %v4679
        %v4681 = vrot.slane %v4593, 5
        %v4682 = vrot.slane %v4681, 4
        %v4683 = vrot.slane %v3848, 5
        %v4684 = vsel %vm1374, %v4682, %v4683
        %v4685 = vrot.slane %v4683, 4
        %v4686 = vrot.slane %v3849, 5
        %v4687 = vsel %vm1374, %v4685, %v4686
        %v4688 = vrot.slane %v4594, 5
        %v4689 = vrot.slane %v4688, 4
        %v4690 = vrot.slane %v3851, 5
        %v4691 = vsel %vm1374, %v4689, %v4690
        %v4692 = vrot.slane %v4690, 4
        %v4693 = vrot.slane %v3852, 5
        %v4694 = vsel %vm1374, %v4692, %v4693
        %v4695 = vrot.slane %v4595, 5
        %v4696 = vrot.slane %v4695, 4
        %v4697 = vrot.slane %v3854, 5
        %v4698 = vsel %vm1374, %v4696, %v4697
        %v4699 = vrot.slane %v4697, 4
        %v4700 = vrot.slane %v3855, 5
        %v4701 = vsel %vm1374, %v4699, %v4700
        %v4702 = vrot.slane %v4596, 5
        %v4703 = vrot.slane %v4702, 4
        %v4704 = vrot.slane %v3857, 5
        %v4705 = vsel %vm1374, %v4703, %v4704
        %v4706 = vrot.slane %v4704, 4
        %v4707 = vrot.slane %v3858, 5
        %v4708 = vsel %vm1374, %v4706, %v4707
        %v4709 = vrot.slane %v4597, 5
        %v4710 = vrot.slane %v4709, 4
        %v4711 = vrot.slane %v3860, 5
        %v4712 = vsel %vm1374, %v4710, %v4711
        %v4713 = vrot.slane %v4711, 4
        %v4714 = vrot.slane %v3861, 5
        %v4715 = vsel %vm1374, %v4713, %v4714
        %v4716 = vrot.slane %v4598, 5
        %v4717 = vrot.slane %v4716, 4
        %v4718 = vrot.slane %v3863, 5
        %v4719 = vsel %vm1374, %v4717, %v4718
        %v4720 = vrot.slane %v4718, 4
        %v4721 = vrot.slane %v3864, 5
        %v4722 = vsel %vm1374, %v4720, %v4721
        %v4723 = vrot.slane %v4599, 5
        %v4724 = vrot.slane %v4723, 4
        %v4725 = vrot.slane %v3866, 5
        %v4726 = vsel %vm1374, %v4724, %v4725
        %v4727 = vrot.slane %v4725, 4
        %v4728 = vrot.slane %v3867, 5
        %v4729 = vsel %vm1374, %v4727, %v4728
        %v4730 = vrot.slane %v4600, 5
        %v4731 = vrot.slane %v4730, 4
        %v4732 = vrot.slane %v3869, 5
        %v4733 = vsel %vm1374, %v4731, %v4732
        %v4734 = vrot.slane %v4732, 4
        %v4735 = vrot.slane %v3870, 5
        %v4736 = vsel %vm1374, %v4734, %v4735
        %v4737 = vrot.slane %v4601, 5
        %v4738 = vrot.slane %v4737, 4
        %v4739 = vrot.slane %v3872, 5
        %v4740 = vsel %vm1374, %v4738, %v4739
        %v4741 = vrot.slane %v4739, 4
        %v4742 = vrot.slane %v3873, 5
        %v4743 = vsel %vm1374, %v4741, %v4742
        %v4744 = vrot.slane %v4602, 5
        %v4745 = vrot.slane %v4744, 4
        %v4746 = vrot.slane %v3875, 5
        %v4747 = vsel %vm1374, %v4745, %v4746
        %v4748 = vrot.slane %v4746, 4
        %v4749 = vrot.slane %v3876, 5
        %v4750 = vsel %vm1374, %v4748, %v4749
        %v4751 = vrot.slane %v4603, 5
        %v4752 = vrot.slane %v4751, 4
        %v4753 = vrot.slane %v3878, 5
        %v4754 = vsel %vm1374, %v4752, %v4753
        %v4755 = vrot.slane %v4753, 4
        %v4756 = vrot.slane %v3879, 5
        %v4757 = vsel %vm1374, %v4755, %v4756
        %v4758 = vrot.slane %v4604, 5
        %v4759 = vrot.slane %v4758, 4
        %v4760 = vrot.slane %v3881, 5
        %v4761 = vsel %vm1374, %v4759, %v4760
        %v4762 = vrot.slane %v4760, 4
        %v4763 = vrot.slane %v3882, 5
        %v4764 = vsel %vm1374, %v4762, %v4763
        %s4765 = scalar_lea.vmem %s1, 512
        %v4766 = vld [vmem:[%s4765] sm:$0xf]
        %v4767 = vld [vmem:[%s4765 + $0x4] sm:$0xf]
        %v4768 = vld [vmem:[%s4765 + $0x8] sm:$0xf]
        %v4769 = vld [vmem:[%s4765 + $0xc] sm:$0xf]
        %v4770 = vld [vmem:[%s4765 + $0x10] sm:$0xf]
        %v4771 = vld [vmem:[%s4765 + $0x14] sm:$0xf]
        %v4772 = vld [vmem:[%s4765 + $0x18] sm:$0xf]
        %v4773 = vld [vmem:[%s4765 + $0x1c] sm:$0xf]
        %v4774 = vld [vmem:[%s4765 + $0x20] sm:$0xf]
        %v4775 = vld [vmem:[%s4765 + $0x24] sm:$0xf]
        %v4776 = vld [vmem:[%s4765 + $0x28] sm:$0xf]
        %v4777 = vld [vmem:[%s4765 + $0x2c] sm:$0xf]
        %v4778 = vld [vmem:[%s4765 + $0x30] sm:$0xf]
        %v4779 = vld [vmem:[%s4765 + $0x34] sm:$0xf]
        %v4780 = vld [vmem:[%s4765 + $0x38] sm:$0xf]
        %v4781 = vld [vmem:[%s4765 + $0x3c] sm:$0xf]
        %v4782 = vunpack.c.l.b16 %v4656
        %v4783 = vunpack.c.l.b16 %v4659
        %v4784 = vunpack.c.l.b16 %v4663
        %v4785 = vunpack.c.l.b16 %v4666
        %v4786 = vunpack.c.l.b16 %v4670
        %v4787 = vunpack.c.l.b16 %v4673
        %v4788 = vunpack.c.l.b16 %v4677
        %v4789 = vunpack.c.l.b16 %v4680
        %v4790 = vunpack.c.l.b16 %v4684
        %v4791 = vunpack.c.l.b16 %v4687
        %v4792 = vunpack.c.l.b16 %v4691
        %v4793 = vunpack.c.l.b16 %v4694
        %v4794 = vunpack.c.l.b16 %v4698
        %v4795 = vunpack.c.l.b16 %v4701
        %v4796 = vunpack.c.l.b16 %v4705
        %v4797 = vunpack.c.l.b16 %v4708
        %v4798 = vunpack.c.l.b16 %v4712
        %v4799 = vunpack.c.l.b16 %v4715
        %v4800 = vunpack.c.l.b16 %v4719
        %v4801 = vunpack.c.l.b16 %v4722
        %v4802 = vunpack.c.l.b16 %v4726
        %v4803 = vunpack.c.l.b16 %v4729
        %v4804 = vunpack.c.l.b16 %v4733
        %v4805 = vunpack.c.l.b16 %v4736
        %v4806 = vunpack.c.l.b16 %v4740
        %v4807 = vunpack.c.l.b16 %v4743
        %v4808 = vunpack.c.l.b16 %v4747
        %v4809 = vunpack.c.l.b16 %v4750
        %v4810 = vunpack.c.l.b16 %v4754
        %v4811 = vunpack.c.l.b16 %v4757
        %v4812 = vunpack.c.l.b16 %v4761
        %v4813 = vunpack.c.l.b16 %v4764
        %v4814 = vpack.c.b16 %v4783, %v4782
        %v4815 = vpack.c.b16 %v4785, %v4784
        %v4816 = vpack.c.b16 %v4787, %v4786
        %v4817 = vpack.c.b16 %v4789, %v4788
        %v4818 = vpack.c.b16 %v4791, %v4790
        %v4819 = vpack.c.b16 %v4793, %v4792
        %v4820 = vpack.c.b16 %v4795, %v4794
        %v4821 = vpack.c.b16 %v4797, %v4796
        %v4822 = vpack.c.b16 %v4799, %v4798
        %v4823 = vpack.c.b16 %v4801, %v4800
        %v4824 = vpack.c.b16 %v4803, %v4802
        %v4825 = vpack.c.b16 %v4805, %v4804
        %v4826 = vpack.c.b16 %v4807, %v4806
        %v4827 = vpack.c.b16 %v4809, %v4808
        %v4828 = vpack.c.b16 %v4811, %v4810
        %v4829 = vpack.c.b16 %v4813, %v4812
        %v4862 = vunpack.c.l.b16 %v4766
        %v4863 = vunpack.c.l.b16 %v4767
        %v4864 = vunpack.c.l.b16 %v4768
        %v4865 = vunpack.c.l.b16 %v4769
        %v4866 = vunpack.c.l.b16 %v4770
        %v4867 = vunpack.c.l.b16 %v4771
        %v4868 = vunpack.c.l.b16 %v4772
        %v4869 = vunpack.c.l.b16 %v4773
        %v4870 = vunpack.c.l.b16 %v4774
        %v4871 = vunpack.c.l.b16 %v4775
        %v4872 = vunpack.c.l.b16 %v4776
        %v4873 = vunpack.c.l.b16 %v4777
        %v4874 = vunpack.c.l.b16 %v4778
        %v4875 = vunpack.c.l.b16 %v4779
        %v4876 = vunpack.c.l.b16 %v4780
        %v4877 = vunpack.c.l.b16 %v4781
        %v4878 = vpack.c.b16 %v4863, %v4862
        %v4879 = vpack.c.b16 %v4865, %v4864
        %v4880 = vpack.c.b16 %v4867, %v4866
        %v4881 = vpack.c.b16 %v4869, %v4868
        %v4882 = vpack.c.b16 %v4871, %v4870
        %v4883 = vpack.c.b16 %v4873, %v4872
        %v4884 = vpack.c.b16 %v4875, %v4874
        %v4885 = vpack.c.b16 %v4877, %v4876
        %4894 = vmatprep.subr.bf16.mxu0 0
        %4895 = vmatpush1.bf16.msra.mxu0 %v4878
        %4896 = vmatprep.subr.bf16.mxu0 0
        %4897 = vmatpush1.bf16.msra.mxu0 %v4879
        %4898 = vmatprep.subr.bf16.mxu0 0
        %4899 = vmatpush1.bf16.msra.mxu0 %v4880
        %4900 = vmatprep.subr.bf16.mxu0 0
        %4901 = vmatpush1.bf16.msra.mxu0 %v4881
        %4902 = vmatprep.subr.bf16.mxu0 0
        %4903 = vmatpush1.bf16.msra.mxu0 %v4882
        %4904 = vmatprep.subr.bf16.mxu0 0
        %4905 = vmatpush1.bf16.msra.mxu0 %v4883
        %4906 = vmatprep.subr.bf16.mxu0 0
        %4907 = vmatpush1.bf16.msra.mxu0 %v4884
        %4908 = vmatprep.subr.bf16.mxu0 0
        %4909 = vmatpush1.bf16.msra.mxu0 %v4885
        %4910 = vmatprep.subr.bf16.mxu0 0
        %4911 = vmatpush1.bf16.msra.mxu0 0
        %4912 = vmatprep.subr.bf16.mxu0 0
        %4913 = vmatpush1.bf16.msra.mxu0 0
        %4914 = vmatprep.subr.bf16.mxu0 0
        %4915 = vmatpush1.bf16.msra.mxu0 0
        %4916 = vmatprep.subr.bf16.mxu0 0
        %4917 = vmatpush1.bf16.msra.mxu0 0
        %4918 = vmatprep.subr.bf16.mxu0 0
        %4919 = vmatpush1.bf16.msra.mxu0 0
        %4920 = vmatprep.subr.bf16.mxu0 0
        %4921 = vmatpush1.bf16.msra.mxu0 0
        %4922 = vmatprep.subr.bf16.mxu0 0
        %4923 = vmatpush1.bf16.msra.mxu0 0
        %4924 = vmatprep.subr.bf16.mxu0 0
        %4925 = vmatpush1.bf16.msra.mxu0 0
        %4926 = vmatprep.mubr.bf16.mxu0 0
        %4927 = vmatmul.mubr.bf16.gmra.mrb[0].mxu0 %v4814
        %v4928 = vpop.f32.mrb[0].mxu0
        %v4929 = vadd.f32 0.0, %v4928
        %v4930 = vpop.f32.mrb[0].mxu0
        %v4931 = vpop.f32.mrb[0].mxu0
        %v4932 = vadd.f32 0.0, %v4931
        %v4933 = vpop.f32.mrb[0].mxu0
        %4934 = vmatprep.mubr.bf16.mxu0 0
        %4935 = vmatmul.mubr.bf16.gmra.mrb[0].mxu0 %v4815
        %v4936 = vpop.f32.mrb[0].mxu0
        %v4937 = vadd.f32 0.0, %v4936
        %v4938 = vpop.f32.mrb[0].mxu0
        %v4939 = vpop.f32.mrb[0].mxu0
        %v4940 = vadd.f32 0.0, %v4939
        %v4941 = vpop.f32.mrb[0].mxu0
        %4942 = vmatprep.mubr.bf16.mxu0 0
        %4943 = vmatmul.mubr.bf16.gmra.mrb[0].mxu0 %v4816
        %v4944 = vpop.f32.mrb[0].mxu0
        %v4945 = vadd.f32 0.0, %v4944
        %v4946 = vpop.f32.mrb[0].mxu0
        %v4947 = vpop.f32.mrb[0].mxu0
        %v4948 = vadd.f32 0.0, %v4947
        %v4949 = vpop.f32.mrb[0].mxu0
        %4950 = vmatprep.mubr.bf16.mxu0 0
        %4951 = vmatmul.mubr.bf16.gmra.mrb[0].mxu0 %v4817
        %v4952 = vpop.f32.mrb[0].mxu0
        %v4953 = vadd.f32 0.0, %v4952
        %v4954 = vpop.f32.mrb[0].mxu0
        %v4955 = vpop.f32.mrb[0].mxu0
        %v4956 = vadd.f32 0.0, %v4955
        %v4957 = vpop.f32.mrb[0].mxu0
        %4958 = vmatprep.mubr.bf16.mxu0 0
        %4959 = vmatmul.mubr.bf16.gmra.mrb[0].mxu0 %v4818
        %v4960 = vpop.f32.mrb[0].mxu0
        %v4961 = vadd.f32 0.0, %v4960
        %v4962 = vpop.f32.mrb[0].mxu0
        %v4963 = vpop.f32.mrb[0].mxu0
        %v4964 = vadd.f32 0.0, %v4963
        %v4965 = vpop.f32.mrb[0].mxu0
        %4966 = vmatprep.mubr.bf16.mxu0 0
        %4967 = vmatmul.mubr.bf16.gmra.mrb[0].mxu0 %v4819
        %v4968 = vpop.f32.mrb[0].mxu0
        %v4969 = vadd.f32 0.0, %v4968
        %v4970 = vpop.f32.mrb[0].mxu0
        %v4971 = vpop.f32.mrb[0].mxu0
        %v4972 = vadd.f32 0.0, %v4971
        %v4973 = vpop.f32.mrb[0].mxu0
        %4974 = vmatprep.mubr.bf16.mxu0 0
        %4975 = vmatmul.mubr.bf16.gmra.mrb[0].mxu0 %v4820
        %v4976 = vpop.f32.mrb[0].mxu0
        %v4977 = vadd.f32 0.0, %v4976
        %v4978 = vpop.f32.mrb[0].mxu0
        %v4979 = vpop.f32.mrb[0].mxu0
        %v4980 = vadd.f32 0.0, %v4979
        %v4981 = vpop.f32.mrb[0].mxu0
        %4982 = vmatprep.mubr.bf16.mxu0 0
        %4983 = vmatmul.mubr.bf16.gmra.mrb[0].mxu0 %v4821
        %v4984 = vpop.f32.mrb[0].mxu0
        %v4985 = vadd.f32 0.0, %v4984
        %v4986 = vpop.f32.mrb[0].mxu0
        %v4987 = vpop.f32.mrb[0].mxu0
        %v4988 = vadd.f32 0.0, %v4987
        %v4989 = vpop.f32.mrb[0].mxu0
        %4990 = vmatprep.mubr.bf16.mxu0 0
        %4991 = vmatmul.mubr.bf16.gmra.mrb[0].mxu0 %v4822
        %v4992 = vpop.f32.mrb[0].mxu0
        %v4993 = vadd.f32 0.0, %v4992
        %v4994 = vpop.f32.mrb[0].mxu0
        %v4995 = vpop.f32.mrb[0].mxu0
        %v4996 = vadd.f32 0.0, %v4995
        %v4997 = vpop.f32.mrb[0].mxu0
        %4998 = vmatprep.mubr.bf16.mxu0 0
        %4999 = vmatmul.mubr.bf16.gmra.mrb[0].mxu0 %v4823
        %v5000 = vpop.f32.mrb[0].mxu0
        %v5001 = vadd.f32 0.0, %v5000
        %v5002 = vpop.f32.mrb[0].mxu0
        %v5003 = vpop.f32.mrb[0].mxu0
        %v5004 = vadd.f32 0.0, %v5003
        %v5005 = vpop.f32.mrb[0].mxu0
        %5006 = vmatprep.mubr.bf16.mxu0 0
        %5007 = vmatmul.mubr.bf16.gmra.mrb[0].mxu0 %v4824
        %v5008 = vpop.f32.mrb[0].mxu0
        %v5009 = vadd.f32 0.0, %v5008
        %v5010 = vpop.f32.mrb[0].mxu0
        %v5011 = vpop.f32.mrb[0].mxu0
        %v5012 = vadd.f32 0.0, %v5011
        %v5013 = vpop.f32.mrb[0].mxu0
        %5014 = vmatprep.mubr.bf16.mxu0 0
        %5015 = vmatmul.mubr.bf16.gmra.mrb[0].mxu0 %v4825
        %v5016 = vpop.f32.mrb[0].mxu0
        %v5017 = vadd.f32 0.0, %v5016
        %v5018 = vpop.f32.mrb[0].mxu0
        %v5019 = vpop.f32.mrb[0].mxu0
        %v5020 = vadd.f32 0.0, %v5019
        %v5021 = vpop.f32.mrb[0].mxu0
        %5022 = vmatprep.mubr.bf16.mxu0 0
        %5023 = vmatmul.mubr.bf16.gmra.mrb[0].mxu0 %v4826
        %v5024 = vpop.f32.mrb[0].mxu0
        %v5025 = vadd.f32 0.0, %v5024
        %v5026 = vpop.f32.mrb[0].mxu0
        %v5027 = vpop.f32.mrb[0].mxu0
        %v5028 = vadd.f32 0.0, %v5027
        %v5029 = vpop.f32.mrb[0].mxu0
        %5030 = vmatprep.mubr.bf16.mxu0 0
        %5031 = vmatmul.mubr.bf16.gmra.mrb[0].mxu0 %v4827
        %v5032 = vpop.f32.mrb[0].mxu0
        %v5033 = vadd.f32 0.0, %v5032
        %v5034 = vpop.f32.mrb[0].mxu0
        %v5035 = vpop.f32.mrb[0].mxu0
        %v5036 = vadd.f32 0.0, %v5035
        %v5037 = vpop.f32.mrb[0].mxu0
        %5038 = vmatprep.mubr.bf16.mxu0 0
        %5039 = vmatmul.mubr.bf16.gmra.mrb[0].mxu0 %v4828
        %v5040 = vpop.f32.mrb[0].mxu0
        %v5041 = vadd.f32 0.0, %v5040
        %v5042 = vpop.f32.mrb[0].mxu0
        %v5043 = vpop.f32.mrb[0].mxu0
        %v5044 = vadd.f32 0.0, %v5043
        %v5045 = vpop.f32.mrb[0].mxu0
        %5046 = vmatprep.mubr.bf16.mxu0 0
        %5047 = vmatmul.mubr.bf16.gmra.mrb[0].mxu0 %v4829
        %v5048 = vpop.f32.mrb[0].mxu0
        %v5049 = vadd.f32 0.0, %v5048
        %v5050 = vpop.f32.mrb[0].mxu0
        %v5051 = vpop.f32.mrb[0].mxu0
        %v5052 = vadd.f32 0.0, %v5051
        %v5053 = vpop.f32.mrb[0].mxu0
        %5054 = vdwg.mxu0
        %v5055 = vadd.f32 %v4557, %v4929
        %v5056 = vadd.f32 %v4558, %v4932
        %v5057 = vadd.f32 %v4559, %v4937
        %v5058 = vadd.f32 %v4560, %v4940
        %v5059 = vadd.f32 %v4561, %v4945
        %v5060 = vadd.f32 %v4562, %v4948
        %v5061 = vadd.f32 %v4563, %v4953
        %v5062 = vadd.f32 %v4564, %v4956
        %v5063 = vadd.f32 %v4565, %v4961
        %v5064 = vadd.f32 %v4566, %v4964
        %v5065 = vadd.f32 %v4567, %v4969
        %v5066 = vadd.f32 %v4568, %v4972
        %v5067 = vadd.f32 %v4569, %v4977
        %v5068 = vadd.f32 %v4570, %v4980
        %v5069 = vadd.f32 %v4571, %v4985
        %v5070 = vadd.f32 %v4572, %v4988
        %v5071 = vadd.f32 %v4573, %v4993
        %v5072 = vadd.f32 %v4574, %v4996
        %v5073 = vadd.f32 %v4575, %v5001
        %v5074 = vadd.f32 %v4576, %v5004
        %v5075 = vadd.f32 %v4577, %v5009
        %v5076 = vadd.f32 %v4578, %v5012
        %v5077 = vadd.f32 %v4579, %v5017
        %v5078 = vadd.f32 %v4580, %v5020
        %v5079 = vadd.f32 %v4581, %v5025
        %v5080 = vadd.f32 %v4582, %v5028
        %v5081 = vadd.f32 %v4583, %v5033
        %v5082 = vadd.f32 %v4584, %v5036
        %v5083 = vadd.f32 %v4585, %v5041
        %v5084 = vadd.f32 %v4586, %v5044
        %v5085 = vadd.f32 %v4587, %v5049
        %v5086 = vadd.f32 %v4588, %v5052
        %v5087 = vld [vmem:[%s2] sm:$0x1]
        %v5089 = vlaneseq
        %v5090 = vshrl.u32 %v5089, 7
        %v5091 = vsub.s32 0, %v5090
        %v5092 = vrot.slane %v5087, %v5091
        %v5094 = vadd.f32 %v5055, %v5092
        %v5095 = vadd.f32 %v5056, %v5092
        %v5096 = vadd.f32 %v5057, %v5092
        %v5097 = vadd.f32 %v5058, %v5092
        %v5098 = vadd.f32 %v5059, %v5092
        %v5099 = vadd.f32 %v5060, %v5092
        %v5100 = vadd.f32 %v5061, %v5092
        %v5101 = vadd.f32 %v5062, %v5092
        %v5102 = vadd.f32 %v5063, %v5092
        %v5103 = vadd.f32 %v5064, %v5092
        %v5104 = vadd.f32 %v5065, %v5092
        %v5105 = vadd.f32 %v5066, %v5092
        %v5106 = vadd.f32 %v5067, %v5092
        %v5107 = vadd.f32 %v5068, %v5092
        %v5108 = vadd.f32 %v5069, %v5092
        %v5109 = vadd.f32 %v5070, %v5092
        %v5110 = vadd.f32 %v5071, %v5092
        %v5111 = vadd.f32 %v5072, %v5092
        %v5112 = vadd.f32 %v5073, %v5092
        %v5113 = vadd.f32 %v5074, %v5092
        %v5114 = vadd.f32 %v5075, %v5092
        %v5115 = vadd.f32 %v5076, %v5092
        %v5116 = vadd.f32 %v5077, %v5092
        %v5117 = vadd.f32 %v5078, %v5092
        %v5118 = vadd.f32 %v5079, %v5092
        %v5119 = vadd.f32 %v5080, %v5092
        %v5120 = vadd.f32 %v5081, %v5092
        %v5121 = vadd.f32 %v5082, %v5092
        %v5122 = vadd.f32 %v5083, %v5092
        %v5123 = vadd.f32 %v5084, %v5092
        %v5124 = vadd.f32 %v5085, %v5092
        %v5125 = vadd.f32 %v5086, %v5092
        %v5126 = vmax.f32 %v5094, 0.0
        %v5127 = vmax.f32 %v5095, 0.0
        %v5128 = vmax.f32 %v5096, 0.0
        %v5129 = vmax.f32 %v5097, 0.0
        %v5130 = vmax.f32 %v5098, 0.0
        %v5131 = vmax.f32 %v5099, 0.0
        %v5132 = vmax.f32 %v5100, 0.0
        %v5133 = vmax.f32 %v5101, 0.0
        %v5134 = vmax.f32 %v5102, 0.0
        %v5135 = vmax.f32 %v5103, 0.0
        %v5136 = vmax.f32 %v5104, 0.0
        %v5137 = vmax.f32 %v5105, 0.0
        %v5138 = vmax.f32 %v5106, 0.0
        %v5139 = vmax.f32 %v5107, 0.0
        %v5140 = vmax.f32 %v5108, 0.0
        %v5141 = vmax.f32 %v5109, 0.0
        %v5142 = vmax.f32 %v5110, 0.0
        %v5143 = vmax.f32 %v5111, 0.0
        %v5144 = vmax.f32 %v5112, 0.0
        %v5145 = vmax.f32 %v5113, 0.0
        %v5146 = vmax.f32 %v5114, 0.0
        %v5147 = vmax.f32 %v5115, 0.0
        %v5148 = vmax.f32 %v5116, 0.0
        %v5149 = vmax.f32 %v5117, 0.0
        %v5150 = vmax.f32 %v5118, 0.0
        %v5151 = vmax.f32 %v5119, 0.0
        %v5152 = vmax.f32 %v5120, 0.0
        %v5153 = vmax.f32 %v5121, 0.0
        %v5154 = vmax.f32 %v5122, 0.0
        %v5155 = vmax.f32 %v5123, 0.0
        %v5156 = vmax.f32 %v5124, 0.0
        %v5157 = vmax.f32 %v5125, 0.0
        %5158 = vst [vmem:[#allocation2] sm:$0xff] 0.0
        %5159 = vst [vmem:[#allocation2 + $0x8] sm:$0xff] 0.0
        %5160 = vst [vmem:[#allocation2 + $0x10] sm:$0xff] 0.0
        %5161 = vst [vmem:[#allocation2 + $0x18] sm:$0xff] 0.0
        %s5162 = scalar_lea.vmem [#allocation2], 544
        %5163 = vst [vmem:[%s5162] sm:$0xff] 0.0
        %5164 = vst [vmem:[%s5162 + $0x8] sm:$0xff] 0.0
        %5165 = vst [vmem:[%s5162 + $0x10] sm:$0xff] 0.0
        %5166 = vst [vmem:[%s5162 + $0x18] sm:$0xff] 0.0
        %5167 = vst [vmem:[#allocation2] sm:$0xff] 0.0
        %5168 = vst [vmem:[#allocation2 + $0x20] sm:$0xff] 0.0
        %5169 = vst [vmem:[#allocation2 + $0x40] sm:$0xff] 0.0
        %5170 = vst [vmem:[#allocation2 + $0x60] sm:$0xff] 0.0
        %5171 = vst [vmem:[#allocation2 + $0x80] sm:$0xff] 0.0
        %5172 = vst [vmem:[#allocation2 + $0xa0] sm:$0xff] 0.0
        %5173 = vst [vmem:[#allocation2 + $0xc0] sm:$0xff] 0.0
        %5174 = vst [vmem:[#allocation2 + $0xe0] sm:$0xff] 0.0
        %5175 = vst [vmem:[#allocation2 + $0x100] sm:$0xff] 0.0
        %5176 = vst [vmem:[#allocation2 + $0x120] sm:$0xff] 0.0
        %5177 = vst [vmem:[#allocation2 + $0x140] sm:$0xff] 0.0
        %5178 = vst [vmem:[#allocation2 + $0x160] sm:$0xff] 0.0
        %5179 = vst [vmem:[#allocation2 + $0x180] sm:$0xff] 0.0
        %5180 = vst [vmem:[#allocation2 + $0x1a0] sm:$0xff] 0.0
        %5181 = vst [vmem:[#allocation2 + $0x1c0] sm:$0xff] 0.0
        %5182 = vst [vmem:[#allocation2 + $0x1e0] sm:$0xff] 0.0
        %5183 = vst [vmem:[#allocation2 + $0x200] sm:$0xff] 0.0
        %5184 = vst [vmem:[#allocation2 + $0x220] sm:$0xff] 0.0
        %5185 = vst [vmem:[#allocation2 + $0x18] sm:$0xff] 0.0
        %5186 = vst [vmem:[#allocation2 + $0x38] sm:$0xff] 0.0
        %5187 = vst [vmem:[#allocation2 + $0x58] sm:$0xff] 0.0
        %5188 = vst [vmem:[#allocation2 + $0x78] sm:$0xff] 0.0
        %5189 = vst [vmem:[#allocation2 + $0x98] sm:$0xff] 0.0
        %5190 = vst [vmem:[#allocation2 + $0xb8] sm:$0xff] 0.0
        %5191 = vst [vmem:[#allocation2 + $0xd8] sm:$0xff] 0.0
        %5192 = vst [vmem:[#allocation2 + $0xf8] sm:$0xff] 0.0
        %5193 = vst [vmem:[#allocation2 + $0x118] sm:$0xff] 0.0
        %5194 = vst [vmem:[#allocation2 + $0x138] sm:$0xff] 0.0
        %5195 = vst [vmem:[#allocation2 + $0x158] sm:$0xff] 0.0
        %5196 = vst [vmem:[#allocation2 + $0x178] sm:$0xff] 0.0
        %5197 = vst [vmem:[#allocation2 + $0x198] sm:$0xff] 0.0
        %5198 = vst [vmem:[#allocation2 + $0x1b8] sm:$0xff] 0.0
        %5199 = vst [vmem:[#allocation2 + $0x1d8] sm:$0xff] 0.0
        %5200 = vst [vmem:[#allocation2 + $0x1f8] sm:$0xff] 0.0
        %5201 = vst [vmem:[#allocation2 + $0x218] sm:$0xff] 0.0
        %5202 = vst [vmem:[#allocation2 + $0x238] sm:$0xff] 0.0
        %s5203 = scalar_lea.vmem [#allocation2], 32
        %5204 = vst [vmem:[%s5203 + $0x8] sm:$0xff] %v5126
        %5205 = vst [vmem:[%s5203 + $0x10] sm:$0xff] %v5127
        %5206 = vst [vmem:[%s5203 + $0x28] sm:$0xff] %v5128
        %5207 = vst [vmem:[%s5203 + $0x30] sm:$0xff] %v5129
        %5208 = vst [vmem:[%s5203 + $0x48] sm:$0xff] %v5130
        %5209 = vst [vmem:[%s5203 + $0x50] sm:$0xff] %v5131
        %5210 = vst [vmem:[%s5203 + $0x68] sm:$0xff] %v5132
        %5211 = vst [vmem:[%s5203 + $0x70] sm:$0xff] %v5133
        %5212 = vst [vmem:[%s5203 + $0x88] sm:$0xff] %v5134
        %5213 = vst [vmem:[%s5203 + $0x90] sm:$0xff] %v5135
        %5214 = vst [vmem:[%s5203 + $0xa8] sm:$0xff] %v5136
        %5215 = vst [vmem:[%s5203 + $0xb0] sm:$0xff] %v5137
        %5216 = vst [vmem:[%s5203 + $0xc8] sm:$0xff] %v5138
        %5217 = vst [vmem:[%s5203 + $0xd0] sm:$0xff] %v5139
        %5218 = vst [vmem:[%s5203 + $0xe8] sm:$0xff] %v5140
        %5219 = vst [vmem:[%s5203 + $0xf0] sm:$0xff] %v5141
        %5220 = vst [vmem:[%s5203 + $0x108] sm:$0xff] %v5142
        %5221 = vst [vmem:[%s5203 + $0x110] sm:$0xff] %v5143
        %5222 = vst [vmem:[%s5203 + $0x128] sm:$0xff] %v5144
        %5223 = vst [vmem:[%s5203 + $0x130] sm:$0xff] %v5145
        %5224 = vst [vmem:[%s5203 + $0x148] sm:$0xff] %v5146
        %5225 = vst [vmem:[%s5203 + $0x150] sm:$0xff] %v5147
        %5226 = vst [vmem:[%s5203 + $0x168] sm:$0xff] %v5148
        %5227 = vst [vmem:[%s5203 + $0x170] sm:$0xff] %v5149
        %5228 = vst [vmem:[%s5203 + $0x188] sm:$0xff] %v5150
        %5229 = vst [vmem:[%s5203 + $0x190] sm:$0xff] %v5151
        %5230 = vst [vmem:[%s5203 + $0x1a8] sm:$0xff] %v5152
        %5231 = vst [vmem:[%s5203 + $0x1b0] sm:$0xff] %v5153
        %5232 = vst [vmem:[%s5203 + $0x1c8] sm:$0xff] %v5154
        %5233 = vst [vmem:[%s5203 + $0x1d0] sm:$0xff] %v5155
        %5234 = vst [vmem:[%s5203 + $0x1e8] sm:$0xff] %v5156
        %5235 = vst [vmem:[%s5203 + $0x1f0] sm:$0xff] %v5157
        %v5236 = vld [vmem:[#allocation2 + $0x7] sm:$0xff]
        %v5237 = vld [vmem:[#allocation2 + $0xf] sm:$0xff]
        %v5238 = vld [vmem:[#allocation2 + $0x27] sm:$0xff]
        %v5239 = vld [vmem:[#allocation2 + $0x2f] sm:$0xff]
        %v5240 = vld [vmem:[#allocation2 + $0x47] sm:$0xff]
        %v5241 = vld [vmem:[#allocation2 + $0x4f] sm:$0xff]
        %v5242 = vld [vmem:[#allocation2 + $0x67] sm:$0xff]
        %v5243 = vld [vmem:[#allocation2 + $0x6f] sm:$0xff]
        %v5244 = vld [vmem:[#allocation2 + $0x87] sm:$0xff]
        %v5245 = vld [vmem:[#allocation2 + $0x8f] sm:$0xff]
        %v5246 = vld [vmem:[#allocation2 + $0xa7] sm:$0xff]
        %v5247 = vld [vmem:[#allocation2 + $0xaf] sm:$0xff]
        %v5248 = vld [vmem:[#allocation2 + $0xc7] sm:$0xff]
        %v5249 = vld [vmem:[#allocation2 + $0xcf] sm:$0xff]
        %v5250 = vld [vmem:[#allocation2 + $0xe7] sm:$0xff]
        %v5251 = vld [vmem:[#allocation2 + $0xef] sm:$0xff]
        %v5252 = vld [vmem:[#allocation2 + $0x107] sm:$0xff]
        %v5253 = vld [vmem:[#allocation2 + $0x10f] sm:$0xff]
        %v5254 = vld [vmem:[#allocation2 + $0x127] sm:$0xff]
        %v5255 = vld [vmem:[#allocation2 + $0x12f] sm:$0xff]
        %v5256 = vld [vmem:[#allocation2 + $0x147] sm:$0xff]
        %v5257 = vld [vmem:[#allocation2 + $0x14f] sm:$0xff]
        %v5258 = vld [vmem:[#allocation2 + $0x167] sm:$0xff]
        %v5259 = vld [vmem:[#allocation2 + $0x16f] sm:$0xff]
        %v5260 = vld [vmem:[#allocation2 + $0x187] sm:$0xff]
        %v5261 = vld [vmem:[#allocation2 + $0x18f] sm:$0xff]
        %v5262 = vld [vmem:[#allocation2 + $0x1a7] sm:$0xff]
        %v5263 = vld [vmem:[#allocation2 + $0x1af] sm:$0xff]
        %v5264 = vld [vmem:[#allocation2 + $0x1c7] sm:$0xff]
        %v5265 = vld [vmem:[#allocation2 + $0x1cf] sm:$0xff]
        %v5266 = vld [vmem:[#allocation2 + $0x1e7] sm:$0xff]
        %v5267 = vld [vmem:[#allocation2 + $0x1ef] sm:$0xff]
        %v5268 = vld [vmem:[%s3] sm:$0x1]
        %v5269 = vlaneseq
        %v5270 = vshrl.u32 %v5269, 7
        %v5271 = vsub.s32 0, %v5270
        %v5272 = vrot.slane %v5268, %v5271
        %v5273 = vmul.f32 %v5236, %v5272
        %v5274 = vmul.f32 %v5237, %v5272
        %v5275 = vmul.f32 %v5238, %v5272
        %v5276 = vmul.f32 %v5239, %v5272
        %v5277 = vmul.f32 %v5240, %v5272
        %v5278 = vmul.f32 %v5241, %v5272
        %v5279 = vmul.f32 %v5242, %v5272
        %v5280 = vmul.f32 %v5243, %v5272
        %v5281 = vmul.f32 %v5244, %v5272
        %v5282 = vmul.f32 %v5245, %v5272
        %v5283 = vmul.f32 %v5246, %v5272
        %v5284 = vmul.f32 %v5247, %v5272
        %v5285 = vmul.f32 %v5248, %v5272
        %v5286 = vmul.f32 %v5249, %v5272
        %v5287 = vmul.f32 %v5250, %v5272
        %v5288 = vmul.f32 %v5251, %v5272
        %v5289 = vmul.f32 %v5252, %v5272
        %v5290 = vmul.f32 %v5253, %v5272
        %v5291 = vmul.f32 %v5254, %v5272
        %v5292 = vmul.f32 %v5255, %v5272
        %v5293 = vmul.f32 %v5256, %v5272
        %v5294 = vmul.f32 %v5257, %v5272
        %v5295 = vmul.f32 %v5258, %v5272
        %v5296 = vmul.f32 %v5259, %v5272
        %v5297 = vmul.f32 %v5260, %v5272
        %v5298 = vmul.f32 %v5261, %v5272
        %v5299 = vmul.f32 %v5262, %v5272
        %v5300 = vmul.f32 %v5263, %v5272
        %v5301 = vmul.f32 %v5264, %v5272
        %v5302 = vmul.f32 %v5265, %v5272
        %v5303 = vmul.f32 %v5266, %v5272
        %v5304 = vmul.f32 %v5267, %v5272
        %v5305 = vld [vmem:[#allocation2 + $0x8] sm:$0xff]
        %v5306 = vld [vmem:[#allocation2 + $0x10] sm:$0xff]
        %v5307 = vld [vmem:[#allocation2 + $0x28] sm:$0xff]
        %v5308 = vld [vmem:[#allocation2 + $0x30] sm:$0xff]
        %v5309 = vld [vmem:[#allocation2 + $0x48] sm:$0xff]
        %v5310 = vld [vmem:[#allocation2 + $0x50] sm:$0xff]
        %v5311 = vld [vmem:[#allocation2 + $0x68] sm:$0xff]
        %v5312 = vld [vmem:[#allocation2 + $0x70] sm:$0xff]
        %v5313 = vld [vmem:[#allocation2 + $0x88] sm:$0xff]
        %v5314 = vld [vmem:[#allocation2 + $0x90] sm:$0xff]
        %v5315 = vld [vmem:[#allocation2 + $0xa8] sm:$0xff]
        %v5316 = vld [vmem:[#allocation2 + $0xb0] sm:$0xff]
        %v5317 = vld [vmem:[#allocation2 + $0xc8] sm:$0xff]
        %v5318 = vld [vmem:[#allocation2 + $0xd0] sm:$0xff]
        %v5319 = vld [vmem:[#allocation2 + $0xe8] sm:$0xff]
        %v5320 = vld [vmem:[#allocation2 + $0xf0] sm:$0xff]
        %v5321 = vld [vmem:[#allocation2 + $0x108] sm:$0xff]
        %v5322 = vld [vmem:[#allocation2 + $0x110] sm:$0xff]
        %v5323 = vld [vmem:[#allocation2 + $0x128] sm:$0xff]
        %v5324 = vld [vmem:[#allocation2 + $0x130] sm:$0xff]
        %v5325 = vld [vmem:[#allocation2 + $0x148] sm:$0xff]
        %v5326 = vld [vmem:[#allocation2 + $0x150] sm:$0xff]
        %v5327 = vld [vmem:[#allocation2 + $0x168] sm:$0xff]
        %v5328 = vld [vmem:[#allocation2 + $0x170] sm:$0xff]
        %v5329 = vld [vmem:[#allocation2 + $0x188] sm:$0xff]
        %v5330 = vld [vmem:[#allocation2 + $0x190] sm:$0xff]
        %v5331 = vld [vmem:[#allocation2 + $0x1a8] sm:$0xff]
        %v5332 = vld [vmem:[#allocation2 + $0x1b0] sm:$0xff]
        %v5333 = vld [vmem:[#allocation2 + $0x1c8] sm:$0xff]
        %v5334 = vld [vmem:[#allocation2 + $0x1d0] sm:$0xff]
        %v5335 = vld [vmem:[#allocation2 + $0x1e8] sm:$0xff]
        %v5336 = vld [vmem:[#allocation2 + $0x1f0] sm:$0xff]
        %v5337 = vld [vmem:[%s3 + $0x1] sm:$0x1]
        %v5338 = vlaneseq
        %v5339 = vshrl.u32 %v5338, 7
        %v5340 = vsub.s32 0, %v5339
        %v5341 = vrot.slane %v5337, %v5340
        %v5342 = vmul.f32 %v5305, %v5341
        %v5343 = vmul.f32 %v5306, %v5341
        %v5344 = vmul.f32 %v5307, %v5341
        %v5345 = vmul.f32 %v5308, %v5341
        %v5346 = vmul.f32 %v5309, %v5341
        %v5347 = vmul.f32 %v5310, %v5341
        %v5348 = vmul.f32 %v5311, %v5341
        %v5349 = vmul.f32 %v5312, %v5341
        %v5350 = vmul.f32 %v5313, %v5341
        %v5351 = vmul.f32 %v5314, %v5341
        %v5352 = vmul.f32 %v5315, %v5341
        %v5353 = vmul.f32 %v5316, %v5341
        %v5354 = vmul.f32 %v5317, %v5341
        %v5355 = vmul.f32 %v5318, %v5341
        %v5356 = vmul.f32 %v5319, %v5341
        %v5357 = vmul.f32 %v5320, %v5341
        %v5358 = vmul.f32 %v5321, %v5341
        %v5359 = vmul.f32 %v5322, %v5341
        %v5360 = vmul.f32 %v5323, %v5341
        %v5361 = vmul.f32 %v5324, %v5341
        %v5362 = vmul.f32 %v5325, %v5341
        %v5363 = vmul.f32 %v5326, %v5341
        %v5364 = vmul.f32 %v5327, %v5341
        %v5365 = vmul.f32 %v5328, %v5341
        %v5366 = vmul.f32 %v5329, %v5341
        %v5367 = vmul.f32 %v5330, %v5341
        %v5368 = vmul.f32 %v5331, %v5341
        %v5369 = vmul.f32 %v5332, %v5341
        %v5370 = vmul.f32 %v5333, %v5341
        %v5371 = vmul.f32 %v5334, %v5341
        %v5372 = vmul.f32 %v5335, %v5341
        %v5373 = vmul.f32 %v5336, %v5341
        %v5374 = vadd.f32 %v5273, %v5342
        %v5375 = vadd.f32 %v5274, %v5343
        %v5376 = vadd.f32 %v5275, %v5344
        %v5377 = vadd.f32 %v5276, %v5345
        %v5378 = vadd.f32 %v5277, %v5346
        %v5379 = vadd.f32 %v5278, %v5347
        %v5380 = vadd.f32 %v5279, %v5348
        %v5381 = vadd.f32 %v5280, %v5349
        %v5382 = vadd.f32 %v5281, %v5350
        %v5383 = vadd.f32 %v5282, %v5351
        %v5384 = vadd.f32 %v5283, %v5352
        %v5385 = vadd.f32 %v5284, %v5353
        %v5386 = vadd.f32 %v5285, %v5354
        %v5387 = vadd.f32 %v5286, %v5355
        %v5388 = vadd.f32 %v5287, %v5356
        %v5389 = vadd.f32 %v5288, %v5357
        %v5390 = vadd.f32 %v5289, %v5358
        %v5391 = vadd.f32 %v5290, %v5359
        %v5392 = vadd.f32 %v5291, %v5360
        %v5393 = vadd.f32 %v5292, %v5361
        %v5394 = vadd.f32 %v5293, %v5362
        %v5395 = vadd.f32 %v5294, %v5363
        %v5396 = vadd.f32 %v5295, %v5364
        %v5397 = vadd.f32 %v5296, %v5365
        %v5398 = vadd.f32 %v5297, %v5366
        %v5399 = vadd.f32 %v5298, %v5367
        %v5400 = vadd.f32 %v5299, %v5368
        %v5401 = vadd.f32 %v5300, %v5369
        %v5402 = vadd.f32 %v5301, %v5370
        %v5403 = vadd.f32 %v5302, %v5371
        %v5404 = vadd.f32 %v5303, %v5372
        %v5405 = vadd.f32 %v5304, %v5373
        %v5406 = vld [vmem:[#allocation2 + $0x9] sm:$0xff]
        %v5407 = vld [vmem:[#allocation2 + $0x11] sm:$0xff]
        %v5408 = vld [vmem:[#allocation2 + $0x29] sm:$0xff]
        %v5409 = vld [vmem:[#allocation2 + $0x31] sm:$0xff]
        %v5410 = vld [vmem:[#allocation2 + $0x49] sm:$0xff]
        %v5411 = vld [vmem:[#allocation2 + $0x51] sm:$0xff]
        %v5412 = vld [vmem:[#allocation2 + $0x69] sm:$0xff]
        %v5413 = vld [vmem:[#allocation2 + $0x71] sm:$0xff]
        %v5414 = vld [vmem:[#allocation2 + $0x89] sm:$0xff]
        %v5415 = vld [vmem:[#allocation2 + $0x91] sm:$0xff]
        %v5416 = vld [vmem:[#allocation2 + $0xa9] sm:$0xff]
        %v5417 = vld [vmem:[#allocation2 + $0xb1] sm:$0xff]
        %v5418 = vld [vmem:[#allocation2 + $0xc9] sm:$0xff]
        %v5419 = vld [vmem:[#allocation2 + $0xd1] sm:$0xff]
        %v5420 = vld [vmem:[#allocation2 + $0xe9] sm:$0xff]
        %v5421 = vld [vmem:[#allocation2 + $0xf1] sm:$0xff]
        %v5422 = vld [vmem:[#allocation2 + $0x109] sm:$0xff]
        %v5423 = vld [vmem:[#allocation2 + $0x111] sm:$0xff]
        %v5424 = vld [vmem:[#allocation2 + $0x129] sm:$0xff]
        %v5425 = vld [vmem:[#allocation2 + $0x131] sm:$0xff]
        %v5426 = vld [vmem:[#allocation2 + $0x149] sm:$0xff]
        %v5427 = vld [vmem:[#allocation2 + $0x151] sm:$0xff]
        %v5428 = vld [vmem:[#allocation2 + $0x169] sm:$0xff]
        %v5429 = vld [vmem:[#allocation2 + $0x171] sm:$0xff]
        %v5430 = vld [vmem:[#allocation2 + $0x189] sm:$0xff]
        %v5431 = vld [vmem:[#allocation2 + $0x191] sm:$0xff]
        %v5432 = vld [vmem:[#allocation2 + $0x1a9] sm:$0xff]
        %v5433 = vld [vmem:[#allocation2 + $0x1b1] sm:$0xff]
        %v5434 = vld [vmem:[#allocation2 + $0x1c9] sm:$0xff]
        %v5435 = vld [vmem:[#allocation2 + $0x1d1] sm:$0xff]
        %v5436 = vld [vmem:[#allocation2 + $0x1e9] sm:$0xff]
        %v5437 = vld [vmem:[#allocation2 + $0x1f1] sm:$0xff]
        %v5438 = vld [vmem:[%s3 + $0x2] sm:$0x1]
        %v5439 = vlaneseq
        %v5440 = vshrl.u32 %v5439, 7
        %v5441 = vsub.s32 0, %v5440
        %v5442 = vrot.slane %v5438, %v5441
        %v5443 = vmul.f32 %v5406, %v5442
        %v5444 = vmul.f32 %v5407, %v5442
        %v5445 = vmul.f32 %v5408, %v5442
        %v5446 = vmul.f32 %v5409, %v5442
        %v5447 = vmul.f32 %v5410, %v5442
        %v5448 = vmul.f32 %v5411, %v5442
        %v5449 = vmul.f32 %v5412, %v5442
        %v5450 = vmul.f32 %v5413, %v5442
        %v5451 = vmul.f32 %v5414, %v5442
        %v5452 = vmul.f32 %v5415, %v5442
        %v5453 = vmul.f32 %v5416, %v5442
        %v5454 = vmul.f32 %v5417, %v5442
        %v5455 = vmul.f32 %v5418, %v5442
        %v5456 = vmul.f32 %v5419, %v5442
        %v5457 = vmul.f32 %v5420, %v5442
        %v5458 = vmul.f32 %v5421, %v5442
        %v5459 = vmul.f32 %v5422, %v5442
        %v5460 = vmul.f32 %v5423, %v5442
        %v5461 = vmul.f32 %v5424, %v5442
        %v5462 = vmul.f32 %v5425, %v5442
        %v5463 = vmul.f32 %v5426, %v5442
        %v5464 = vmul.f32 %v5427, %v5442
        %v5465 = vmul.f32 %v5428, %v5442
        %v5466 = vmul.f32 %v5429, %v5442
        %v5467 = vmul.f32 %v5430, %v5442
        %v5468 = vmul.f32 %v5431, %v5442
        %v5469 = vmul.f32 %v5432, %v5442
        %v5470 = vmul.f32 %v5433, %v5442
        %v5471 = vmul.f32 %v5434, %v5442
        %v5472 = vmul.f32 %v5435, %v5442
        %v5473 = vmul.f32 %v5436, %v5442
        %v5474 = vmul.f32 %v5437, %v5442
        %v5475 = vadd.f32 %v5374, %v5443
        %v5476 = vadd.f32 %v5375, %v5444
        %v5477 = vadd.f32 %v5376, %v5445
        %v5478 = vadd.f32 %v5377, %v5446
        %v5479 = vadd.f32 %v5378, %v5447
        %v5480 = vadd.f32 %v5379, %v5448
        %v5481 = vadd.f32 %v5380, %v5449
        %v5482 = vadd.f32 %v5381, %v5450
        %v5483 = vadd.f32 %v5382, %v5451
        %v5484 = vadd.f32 %v5383, %v5452
        %v5485 = vadd.f32 %v5384, %v5453
        %v5486 = vadd.f32 %v5385, %v5454
        %v5487 = vadd.f32 %v5386, %v5455
        %v5488 = vadd.f32 %v5387, %v5456
        %v5489 = vadd.f32 %v5388, %v5457
        %v5490 = vadd.f32 %v5389, %v5458
        %v5491 = vadd.f32 %v5390, %v5459
        %v5492 = vadd.f32 %v5391, %v5460
        %v5493 = vadd.f32 %v5392, %v5461
        %v5494 = vadd.f32 %v5393, %v5462
        %v5495 = vadd.f32 %v5394, %v5463
        %v5496 = vadd.f32 %v5395, %v5464
        %v5497 = vadd.f32 %v5396, %v5465
        %v5498 = vadd.f32 %v5397, %v5466
        %v5499 = vadd.f32 %v5398, %v5467
        %v5500 = vadd.f32 %v5399, %v5468
        %v5501 = vadd.f32 %v5400, %v5469
        %v5502 = vadd.f32 %v5401, %v5470
        %v5503 = vadd.f32 %v5402, %v5471
        %v5504 = vadd.f32 %v5403, %v5472
        %v5505 = vadd.f32 %v5404, %v5473
        %v5506 = vadd.f32 %v5405, %v5474
        %v5507 = vld [vmem:[%s5203 + $0x7] sm:$0xff]
        %v5508 = vld [vmem:[%s5203 + $0xf] sm:$0xff]
        %v5509 = vld [vmem:[%s5203 + $0x27] sm:$0xff]
        %v5510 = vld [vmem:[%s5203 + $0x2f] sm:$0xff]
        %v5511 = vld [vmem:[%s5203 + $0x47] sm:$0xff]
        %v5512 = vld [vmem:[%s5203 + $0x4f] sm:$0xff]
        %v5513 = vld [vmem:[%s5203 + $0x67] sm:$0xff]
        %v5514 = vld [vmem:[%s5203 + $0x6f] sm:$0xff]
        %v5515 = vld [vmem:[%s5203 + $0x87] sm:$0xff]
        %v5516 = vld [vmem:[%s5203 + $0x8f] sm:$0xff]
        %v5517 = vld [vmem:[%s5203 + $0xa7] sm:$0xff]
        %v5518 = vld [vmem:[%s5203 + $0xaf] sm:$0xff]
        %v5519 = vld [vmem:[%s5203 + $0xc7] sm:$0xff]
        %v5520 = vld [vmem:[%s5203 + $0xcf] sm:$0xff]
        %v5521 = vld [vmem:[%s5203 + $0xe7] sm:$0xff]
        %v5522 = vld [vmem:[%s5203 + $0xef] sm:$0xff]
        %v5523 = vld [vmem:[%s5203 + $0x107] sm:$0xff]
        %v5524 = vld [vmem:[%s5203 + $0x10f] sm:$0xff]
        %v5525 = vld [vmem:[%s5203 + $0x127] sm:$0xff]
        %v5526 = vld [vmem:[%s5203 + $0x12f] sm:$0xff]
        %v5527 = vld [vmem:[%s5203 + $0x147] sm:$0xff]
        %v5528 = vld [vmem:[%s5203 + $0x14f] sm:$0xff]
        %v5529 = vld [vmem:[%s5203 + $0x167] sm:$0xff]
        %v5530 = vld [vmem:[%s5203 + $0x16f] sm:$0xff]
        %v5531 = vld [vmem:[%s5203 + $0x187] sm:$0xff]
        %v5532 = vld [vmem:[%s5203 + $0x18f] sm:$0xff]
        %v5533 = vld [vmem:[%s5203 + $0x1a7] sm:$0xff]
        %v5534 = vld [vmem:[%s5203 + $0x1af] sm:$0xff]
        %v5535 = vld [vmem:[%s5203 + $0x1c7] sm:$0xff]
        %v5536 = vld [vmem:[%s5203 + $0x1cf] sm:$0xff]
        %v5537 = vld [vmem:[%s5203 + $0x1e7] sm:$0xff]
        %v5538 = vld [vmem:[%s5203 + $0x1ef] sm:$0xff]
        %v5539 = vld [vmem:[%s3 + $0x3] sm:$0x1]
        %v5540 = vlaneseq
        %v5541 = vshrl.u32 %v5540, 7
        %v5542 = vsub.s32 0, %v5541
        %v5543 = vrot.slane %v5539, %v5542
        %v5544 = vmul.f32 %v5507, %v5543
        %v5545 = vmul.f32 %v5508, %v5543
        %v5546 = vmul.f32 %v5509, %v5543
        %v5547 = vmul.f32 %v5510, %v5543
        %v5548 = vmul.f32 %v5511, %v5543
        %v5549 = vmul.f32 %v5512, %v5543
        %v5550 = vmul.f32 %v5513, %v5543
        %v5551 = vmul.f32 %v5514, %v5543
        %v5552 = vmul.f32 %v5515, %v5543
        %v5553 = vmul.f32 %v5516, %v5543
        %v5554 = vmul.f32 %v5517, %v5543
        %v5555 = vmul.f32 %v5518, %v5543
        %v5556 = vmul.f32 %v5519, %v5543
        %v5557 = vmul.f32 %v5520, %v5543
        %v5558 = vmul.f32 %v5521, %v5543
        %v5559 = vmul.f32 %v5522, %v5543
        %v5560 = vmul.f32 %v5523, %v5543
        %v5561 = vmul.f32 %v5524, %v5543
        %v5562 = vmul.f32 %v5525, %v5543
        %v5563 = vmul.f32 %v5526, %v5543
        %v5564 = vmul.f32 %v5527, %v5543
        %v5565 = vmul.f32 %v5528, %v5543
        %v5566 = vmul.f32 %v5529, %v5543
        %v5567 = vmul.f32 %v5530, %v5543
        %v5568 = vmul.f32 %v5531, %v5543
        %v5569 = vmul.f32 %v5532, %v5543
        %v5570 = vmul.f32 %v5533, %v5543
        %v5571 = vmul.f32 %v5534, %v5543
        %v5572 = vmul.f32 %v5535, %v5543
        %v5573 = vmul.f32 %v5536, %v5543
        %v5574 = vmul.f32 %v5537, %v5543
        %v5575 = vmul.f32 %v5538, %v5543
        %v5576 = vadd.f32 %v5475, %v5544
        %v5577 = vadd.f32 %v5476, %v5545
        %v5578 = vadd.f32 %v5477, %v5546
        %v5579 = vadd.f32 %v5478, %v5547
        %v5580 = vadd.f32 %v5479, %v5548
        %v5581 = vadd.f32 %v5480, %v5549
        %v5582 = vadd.f32 %v5481, %v5550
        %v5583 = vadd.f32 %v5482, %v5551
        %v5584 = vadd.f32 %v5483, %v5552
        %v5585 = vadd.f32 %v5484, %v5553
        %v5586 = vadd.f32 %v5485, %v5554
        %v5587 = vadd.f32 %v5486, %v5555
        %v5588 = vadd.f32 %v5487, %v5556
        %v5589 = vadd.f32 %v5488, %v5557
        %v5590 = vadd.f32 %v5489, %v5558
        %v5591 = vadd.f32 %v5490, %v5559
        %v5592 = vadd.f32 %v5491, %v5560
        %v5593 = vadd.f32 %v5492, %v5561
        %v5594 = vadd.f32 %v5493, %v5562
        %v5595 = vadd.f32 %v5494, %v5563
        %v5596 = vadd.f32 %v5495, %v5564
        %v5597 = vadd.f32 %v5496, %v5565
        %v5598 = vadd.f32 %v5497, %v5566
        %v5599 = vadd.f32 %v5498, %v5567
        %v5600 = vadd.f32 %v5499, %v5568
        %v5601 = vadd.f32 %v5500, %v5569
        %v5602 = vadd.f32 %v5501, %v5570
        %v5603 = vadd.f32 %v5502, %v5571
        %v5604 = vadd.f32 %v5503, %v5572
        %v5605 = vadd.f32 %v5504, %v5573
        %v5606 = vadd.f32 %v5505, %v5574
        %v5607 = vadd.f32 %v5506, %v5575
        %v5608 = vld [vmem:[%s5203 + $0x8] sm:$0xff]
        %v5609 = vld [vmem:[%s5203 + $0x10] sm:$0xff]
        %v5610 = vld [vmem:[%s5203 + $0x28] sm:$0xff]
        %v5611 = vld [vmem:[%s5203 + $0x30] sm:$0xff]
        %v5612 = vld [vmem:[%s5203 + $0x48] sm:$0xff]
        %v5613 = vld [vmem:[%s5203 + $0x50] sm:$0xff]
        %v5614 = vld [vmem:[%s5203 + $0x68] sm:$0xff]
        %v5615 = vld [vmem:[%s5203 + $0x70] sm:$0xff]
        %v5616 = vld [vmem:[%s5203 + $0x88] sm:$0xff]
        %v5617 = vld [vmem:[%s5203 + $0x90] sm:$0xff]
        %v5618 = vld [vmem:[%s5203 + $0xa8] sm:$0xff]
        %v5619 = vld [vmem:[%s5203 + $0xb0] sm:$0xff]
        %v5620 = vld [vmem:[%s5203 + $0xc8] sm:$0xff]
        %v5621 = vld [vmem:[%s5203 + $0xd0] sm:$0xff]
        %v5622 = vld [vmem:[%s5203 + $0xe8] sm:$0xff]
        %v5623 = vld [vmem:[%s5203 + $0xf0] sm:$0xff]
        %v5624 = vld [vmem:[%s5203 + $0x108] sm:$0xff]
        %v5625 = vld [vmem:[%s5203 + $0x110] sm:$0xff]
        %v5626 = vld [vmem:[%s5203 + $0x128] sm:$0xff]
        %v5627 = vld [vmem:[%s5203 + $0x130] sm:$0xff]
        %v5628 = vld [vmem:[%s5203 + $0x148] sm:$0xff]
        %v5629 = vld [vmem:[%s5203 + $0x150] sm:$0xff]
        %v5630 = vld [vmem:[%s5203 + $0x168] sm:$0xff]
        %v5631 = vld [vmem:[%s5203 + $0x170] sm:$0xff]
        %v5632 = vld [vmem:[%s5203 + $0x188] sm:$0xff]
        %v5633 = vld [vmem:[%s5203 + $0x190] sm:$0xff]
        %v5634 = vld [vmem:[%s5203 + $0x1a8] sm:$0xff]
        %v5635 = vld [vmem:[%s5203 + $0x1b0] sm:$0xff]
        %v5636 = vld [vmem:[%s5203 + $0x1c8] sm:$0xff]
        %v5637 = vld [vmem:[%s5203 + $0x1d0] sm:$0xff]
        %v5638 = vld [vmem:[%s5203 + $0x1e8] sm:$0xff]
        %v5639 = vld [vmem:[%s5203 + $0x1f0] sm:$0xff]
        %v5640 = vld [vmem:[%s3 + $0x4] sm:$0x1]
        %v5641 = vlaneseq
        %v5642 = vshrl.u32 %v5641, 7
        %v5643 = vsub.s32 0, %v5642
        %v5644 = vrot.slane %v5640, %v5643
        %v5645 = vmul.f32 %v5608, %v5644
        %v5646 = vmul.f32 %v5609, %v5644
        %v5647 = vmul.f32 %v5610, %v5644
        %v5648 = vmul.f32 %v5611, %v5644
        %v5649 = vmul.f32 %v5612, %v5644
        %v5650 = vmul.f32 %v5613, %v5644
        %v5651 = vmul.f32 %v5614, %v5644
        %v5652 = vmul.f32 %v5615, %v5644
        %v5653 = vmul.f32 %v5616, %v5644
        %v5654 = vmul.f32 %v5617, %v5644
        %v5655 = vmul.f32 %v5618, %v5644
        %v5656 = vmul.f32 %v5619, %v5644
        %v5657 = vmul.f32 %v5620, %v5644
        %v5658 = vmul.f32 %v5621, %v5644
        %v5659 = vmul.f32 %v5622, %v5644
        %v5660 = vmul.f32 %v5623, %v5644
        %v5661 = vmul.f32 %v5624, %v5644
        %v5662 = vmul.f32 %v5625, %v5644
        %v5663 = vmul.f32 %v5626, %v5644
        %v5664 = vmul.f32 %v5627, %v5644
        %v5665 = vmul.f32 %v5628, %v5644
        %v5666 = vmul.f32 %v5629, %v5644
        %v5667 = vmul.f32 %v5630, %v5644
        %v5668 = vmul.f32 %v5631, %v5644
        %v5669 = vmul.f32 %v5632, %v5644
        %v5670 = vmul.f32 %v5633, %v5644
        %v5671 = vmul.f32 %v5634, %v5644
        %v5672 = vmul.f32 %v5635, %v5644
        %v5673 = vmul.f32 %v5636, %v5644
        %v5674 = vmul.f32 %v5637, %v5644
        %v5675 = vmul.f32 %v5638, %v5644
        %v5676 = vmul.f32 %v5639, %v5644
        %v5677 = vadd.f32 %v5576, %v5645
        %v5678 = vadd.f32 %v5577, %v5646
        %v5679 = vadd.f32 %v5578, %v5647
        %v5680 = vadd.f32 %v5579, %v5648
        %v5681 = vadd.f32 %v5580, %v5649
        %v5682 = vadd.f32 %v5581, %v5650
        %v5683 = vadd.f32 %v5582, %v5651
        %v5684 = vadd.f32 %v5583, %v5652
        %v5685 = vadd.f32 %v5584, %v5653
        %v5686 = vadd.f32 %v5585, %v5654
        %v5687 = vadd.f32 %v5586, %v5655
        %v5688 = vadd.f32 %v5587, %v5656
        %v5689 = vadd.f32 %v5588, %v5657
        %v5690 = vadd.f32 %v5589, %v5658
        %v5691 = vadd.f32 %v5590, %v5659
        %v5692 = vadd.f32 %v5591, %v5660
        %v5693 = vadd.f32 %v5592, %v5661
        %v5694 = vadd.f32 %v5593, %v5662
        %v5695 = vadd.f32 %v5594, %v5663
        %v5696 = vadd.f32 %v5595, %v5664
        %v5697 = vadd.f32 %v5596, %v5665
        %v5698 = vadd.f32 %v5597, %v5666
        %v5699 = vadd.f32 %v5598, %v5667
        %v5700 = vadd.f32 %v5599, %v5668
        %v5701 = vadd.f32 %v5600, %v5669
        %v5702 = vadd.f32 %v5601, %v5670
        %v5703 = vadd.f32 %v5602, %v5671
        %v5704 = vadd.f32 %v5603, %v5672
        %v5705 = vadd.f32 %v5604, %v5673
        %v5706 = vadd.f32 %v5605, %v5674
        %v5707 = vadd.f32 %v5606, %v5675
        %v5708 = vadd.f32 %v5607, %v5676
        %v5709 = vld [vmem:[%s5203 + $0x9] sm:$0xff]
        %v5710 = vld [vmem:[%s5203 + $0x11] sm:$0xff]
        %v5711 = vld [vmem:[%s5203 + $0x29] sm:$0xff]
        %v5712 = vld [vmem:[%s5203 + $0x31] sm:$0xff]
        %v5713 = vld [vmem:[%s5203 + $0x49] sm:$0xff]
        %v5714 = vld [vmem:[%s5203 + $0x51] sm:$0xff]
        %v5715 = vld [vmem:[%s5203 + $0x69] sm:$0xff]
        %v5716 = vld [vmem:[%s5203 + $0x71] sm:$0xff]
        %v5717 = vld [vmem:[%s5203 + $0x89] sm:$0xff]
        %v5718 = vld [vmem:[%s5203 + $0x91] sm:$0xff]
        %v5719 = vld [vmem:[%s5203 + $0xa9] sm:$0xff]
        %v5720 = vld [vmem:[%s5203 + $0xb1] sm:$0xff]
        %v5721 = vld [vmem:[%s5203 + $0xc9] sm:$0xff]
        %v5722 = vld [vmem:[%s5203 + $0xd1] sm:$0xff]
        %v5723 = vld [vmem:[%s5203 + $0xe9] sm:$0xff]
        %v5724 = vld [vmem:[%s5203 + $0xf1] sm:$0xff]
        %v5725 = vld [vmem:[%s5203 + $0x109] sm:$0xff]
        %v5726 = vld [vmem:[%s5203 + $0x111] sm:$0xff]
        %v5727 = vld [vmem:[%s5203 + $0x129] sm:$0xff]
        %v5728 = vld [vmem:[%s5203 + $0x131] sm:$0xff]
        %v5729 = vld [vmem:[%s5203 + $0x149] sm:$0xff]
        %v5730 = vld [vmem:[%s5203 + $0x151] sm:$0xff]
        %v5731 = vld [vmem:[%s5203 + $0x169] sm:$0xff]
        %v5732 = vld [vmem:[%s5203 + $0x171] sm:$0xff]
        %v5733 = vld [vmem:[%s5203 + $0x189] sm:$0xff]
        %v5734 = vld [vmem:[%s5203 + $0x191] sm:$0xff]
        %v5735 = vld [vmem:[%s5203 + $0x1a9] sm:$0xff]
        %v5736 = vld [vmem:[%s5203 + $0x1b1] sm:$0xff]
        %v5737 = vld [vmem:[%s5203 + $0x1c9] sm:$0xff]
        %v5738 = vld [vmem:[%s5203 + $0x1d1] sm:$0xff]
        %v5739 = vld [vmem:[%s5203 + $0x1e9] sm:$0xff]
        %v5740 = vld [vmem:[%s5203 + $0x1f1] sm:$0xff]
        %v5741 = vld [vmem:[%s3 + $0x5] sm:$0x1]
        %v5742 = vlaneseq
        %v5743 = vshrl.u32 %v5742, 7
        %v5744 = vsub.s32 0, %v5743
        %v5745 = vrot.slane %v5741, %v5744
        %v5746 = vmul.f32 %v5709, %v5745
        %v5747 = vmul.f32 %v5710, %v5745
        %v5748 = vmul.f32 %v5711, %v5745
        %v5749 = vmul.f32 %v5712, %v5745
        %v5750 = vmul.f32 %v5713, %v5745
        %v5751 = vmul.f32 %v5714, %v5745
        %v5752 = vmul.f32 %v5715, %v5745
        %v5753 = vmul.f32 %v5716, %v5745
        %v5754 = vmul.f32 %v5717, %v5745
        %v5755 = vmul.f32 %v5718, %v5745
        %v5756 = vmul.f32 %v5719, %v5745
        %v5757 = vmul.f32 %v5720, %v5745
        %v5758 = vmul.f32 %v5721, %v5745
        %v5759 = vmul.f32 %v5722, %v5745
        %v5760 = vmul.f32 %v5723, %v5745
        %v5761 = vmul.f32 %v5724, %v5745
        %v5762 = vmul.f32 %v5725, %v5745
        %v5763 = vmul.f32 %v5726, %v5745
        %v5764 = vmul.f32 %v5727, %v5745
        %v5765 = vmul.f32 %v5728, %v5745
        %v5766 = vmul.f32 %v5729, %v5745
        %v5767 = vmul.f32 %v5730, %v5745
        %v5768 = vmul.f32 %v5731, %v5745
        %v5769 = vmul.f32 %v5732, %v5745
        %v5770 = vmul.f32 %v5733, %v5745
        %v5771 = vmul.f32 %v5734, %v5745
        %v5772 = vmul.f32 %v5735, %v5745
        %v5773 = vmul.f32 %v5736, %v5745
        %v5774 = vmul.f32 %v5737, %v5745
        %v5775 = vmul.f32 %v5738, %v5745
        %v5776 = vmul.f32 %v5739, %v5745
        %v5777 = vmul.f32 %v5740, %v5745
        %v5778 = vadd.f32 %v5677, %v5746
        %v5779 = vadd.f32 %v5678, %v5747
        %v5780 = vadd.f32 %v5679, %v5748
        %v5781 = vadd.f32 %v5680, %v5749
        %v5782 = vadd.f32 %v5681, %v5750
        %v5783 = vadd.f32 %v5682, %v5751
        %v5784 = vadd.f32 %v5683, %v5752
        %v5785 = vadd.f32 %v5684, %v5753
        %v5786 = vadd.f32 %v5685, %v5754
        %v5787 = vadd.f32 %v5686, %v5755
        %v5788 = vadd.f32 %v5687, %v5756
        %v5789 = vadd.f32 %v5688, %v5757
        %v5790 = vadd.f32 %v5689, %v5758
        %v5791 = vadd.f32 %v5690, %v5759
        %v5792 = vadd.f32 %v5691, %v5760
        %v5793 = vadd.f32 %v5692, %v5761
        %v5794 = vadd.f32 %v5693, %v5762
        %v5795 = vadd.f32 %v5694, %v5763
        %v5796 = vadd.f32 %v5695, %v5764
        %v5797 = vadd.f32 %v5696, %v5765
        %v5798 = vadd.f32 %v5697, %v5766
        %v5799 = vadd.f32 %v5698, %v5767
        %v5800 = vadd.f32 %v5699, %v5768
        %v5801 = vadd.f32 %v5700, %v5769
        %v5802 = vadd.f32 %v5701, %v5770
        %v5803 = vadd.f32 %v5702, %v5771
        %v5804 = vadd.f32 %v5703, %v5772
        %v5805 = vadd.f32 %v5704, %v5773
        %v5806 = vadd.f32 %v5705, %v5774
        %v5807 = vadd.f32 %v5706, %v5775
        %v5808 = vadd.f32 %v5707, %v5776
        %v5809 = vadd.f32 %v5708, %v5777
        %s5810 = scalar_lea.vmem [#allocation2], 64
        %v5811 = vld [vmem:[%s5810 + $0x7] sm:$0xff]
        %v5812 = vld [vmem:[%s5810 + $0xf] sm:$0xff]
        %v5813 = vld [vmem:[%s5810 + $0x27] sm:$0xff]
        %v5814 = vld [vmem:[%s5810 + $0x2f] sm:$0xff]
        %v5815 = vld [vmem:[%s5810 + $0x47] sm:$0xff]
        %v5816 = vld [vmem:[%s5810 + $0x4f] sm:$0xff]
        %v5817 = vld [vmem:[%s5810 + $0x67] sm:$0xff]
        %v5818 = vld [vmem:[%s5810 + $0x6f] sm:$0xff]
        %v5819 = vld [vmem:[%s5810 + $0x87] sm:$0xff]
        %v5820 = vld [vmem:[%s5810 + $0x8f] sm:$0xff]
        %v5821 = vld [vmem:[%s5810 + $0xa7] sm:$0xff]
        %v5822 = vld [vmem:[%s5810 + $0xaf] sm:$0xff]
        %v5823 = vld [vmem:[%s5810 + $0xc7] sm:$0xff]
        %v5824 = vld [vmem:[%s5810 + $0xcf] sm:$0xff]
        %v5825 = vld [vmem:[%s5810 + $0xe7] sm:$0xff]
        %v5826 = vld [vmem:[%s5810 + $0xef] sm:$0xff]
        %v5827 = vld [vmem:[%s5810 + $0x107] sm:$0xff]
        %v5828 = vld [vmem:[%s5810 + $0x10f] sm:$0xff]
        %v5829 = vld [vmem:[%s5810 + $0x127] sm:$0xff]
        %v5830 = vld [vmem:[%s5810 + $0x12f] sm:$0xff]
        %v5831 = vld [vmem:[%s5810 + $0x147] sm:$0xff]
        %v5832 = vld [vmem:[%s5810 + $0x14f] sm:$0xff]
        %v5833 = vld [vmem:[%s5810 + $0x167] sm:$0xff]
        %v5834 = vld [vmem:[%s5810 + $0x16f] sm:$0xff]
        %v5835 = vld [vmem:[%s5810 + $0x187] sm:$0xff]
        %v5836 = vld [vmem:[%s5810 + $0x18f] sm:$0xff]
        %v5837 = vld [vmem:[%s5810 + $0x1a7] sm:$0xff]
        %v5838 = vld [vmem:[%s5810 + $0x1af] sm:$0xff]
        %v5839 = vld [vmem:[%s5810 + $0x1c7] sm:$0xff]
        %v5840 = vld [vmem:[%s5810 + $0x1cf] sm:$0xff]
        %v5841 = vld [vmem:[%s5810 + $0x1e7] sm:$0xff]
        %v5842 = vld [vmem:[%s5810 + $0x1ef] sm:$0xff]
        %v5843 = vld [vmem:[%s3 + $0x6] sm:$0x1]
        %v5844 = vlaneseq
        %v5845 = vshrl.u32 %v5844, 7
        %v5846 = vsub.s32 0, %v5845
        %v5847 = vrot.slane %v5843, %v5846
        %v5848 = vmul.f32 %v5811, %v5847
        %v5849 = vmul.f32 %v5812, %v5847
        %v5850 = vmul.f32 %v5813, %v5847
        %v5851 = vmul.f32 %v5814, %v5847
        %v5852 = vmul.f32 %v5815, %v5847
        %v5853 = vmul.f32 %v5816, %v5847
        %v5854 = vmul.f32 %v5817, %v5847
        %v5855 = vmul.f32 %v5818, %v5847
        %v5856 = vmul.f32 %v5819, %v5847
        %v5857 = vmul.f32 %v5820, %v5847
        %v5858 = vmul.f32 %v5821, %v5847
        %v5859 = vmul.f32 %v5822, %v5847
        %v5860 = vmul.f32 %v5823, %v5847
        %v5861 = vmul.f32 %v5824, %v5847
        %v5862 = vmul.f32 %v5825, %v5847
        %v5863 = vmul.f32 %v5826, %v5847
        %v5864 = vmul.f32 %v5827, %v5847
        %v5865 = vmul.f32 %v5828, %v5847
        %v5866 = vmul.f32 %v5829, %v5847
        %v5867 = vmul.f32 %v5830, %v5847
        %v5868 = vmul.f32 %v5831, %v5847
        %v5869 = vmul.f32 %v5832, %v5847
        %v5870 = vmul.f32 %v5833, %v5847
        %v5871 = vmul.f32 %v5834, %v5847
        %v5872 = vmul.f32 %v5835, %v5847
        %v5873 = vmul.f32 %v5836, %v5847
        %v5874 = vmul.f32 %v5837, %v5847
        %v5875 = vmul.f32 %v5838, %v5847
        %v5876 = vmul.f32 %v5839, %v5847
        %v5877 = vmul.f32 %v5840, %v5847
        %v5878 = vmul.f32 %v5841, %v5847
        %v5879 = vmul.f32 %v5842, %v5847
        %v5880 = vadd.f32 %v5778, %v5848
        %v5881 = vadd.f32 %v5779, %v5849
        %v5882 = vadd.f32 %v5780, %v5850
        %v5883 = vadd.f32 %v5781, %v5851
        %v5884 = vadd.f32 %v5782, %v5852
        %v5885 = vadd.f32 %v5783, %v5853
        %v5886 = vadd.f32 %v5784, %v5854
        %v5887 = vadd.f32 %v5785, %v5855
        %v5888 = vadd.f32 %v5786, %v5856
        %v5889 = vadd.f32 %v5787, %v5857
        %v5890 = vadd.f32 %v5788, %v5858
        %v5891 = vadd.f32 %v5789, %v5859
        %v5892 = vadd.f32 %v5790, %v5860
        %v5893 = vadd.f32 %v5791, %v5861
        %v5894 = vadd.f32 %v5792, %v5862
        %v5895 = vadd.f32 %v5793, %v5863
        %v5896 = vadd.f32 %v5794, %v5864
        %v5897 = vadd.f32 %v5795, %v5865
        %v5898 = vadd.f32 %v5796, %v5866
        %v5899 = vadd.f32 %v5797, %v5867
        %v5900 = vadd.f32 %v5798, %v5868
        %v5901 = vadd.f32 %v5799, %v5869
        %v5902 = vadd.f32 %v5800, %v5870
        %v5903 = vadd.f32 %v5801, %v5871
        %v5904 = vadd.f32 %v5802, %v5872
        %v5905 = vadd.f32 %v5803, %v5873
        %v5906 = vadd.f32 %v5804, %v5874
        %v5907 = vadd.f32 %v5805, %v5875
        %v5908 = vadd.f32 %v5806, %v5876
        %v5909 = vadd.f32 %v5807, %v5877
        %v5910 = vadd.f32 %v5808, %v5878
        %v5911 = vadd.f32 %v5809, %v5879
        %v5912 = vld [vmem:[%s5810 + $0x8] sm:$0xff]
        %v5913 = vld [vmem:[%s5810 + $0x10] sm:$0xff]
        %v5914 = vld [vmem:[%s5810 + $0x28] sm:$0xff]
        %v5915 = vld [vmem:[%s5810 + $0x30] sm:$0xff]
        %v5916 = vld [vmem:[%s5810 + $0x48] sm:$0xff]
        %v5917 = vld [vmem:[%s5810 + $0x50] sm:$0xff]
        %v5918 = vld [vmem:[%s5810 + $0x68] sm:$0xff]
        %v5919 = vld [vmem:[%s5810 + $0x70] sm:$0xff]
        %v5920 = vld [vmem:[%s5810 + $0x88] sm:$0xff]
        %v5921 = vld [vmem:[%s5810 + $0x90] sm:$0xff]
        %v5922 = vld [vmem:[%s5810 + $0xa8] sm:$0xff]
        %v5923 = vld [vmem:[%s5810 + $0xb0] sm:$0xff]
        %v5924 = vld [vmem:[%s5810 + $0xc8] sm:$0xff]
        %v5925 = vld [vmem:[%s5810 + $0xd0] sm:$0xff]
        %v5926 = vld [vmem:[%s5810 + $0xe8] sm:$0xff]
        %v5927 = vld [vmem:[%s5810 + $0xf0] sm:$0xff]
        %v5928 = vld [vmem:[%s5810 + $0x108] sm:$0xff]
        %v5929 = vld [vmem:[%s5810 + $0x110] sm:$0xff]
        %v5930 = vld [vmem:[%s5810 + $0x128] sm:$0xff]
        %v5931 = vld [vmem:[%s5810 + $0x130] sm:$0xff]
        %v5932 = vld [vmem:[%s5810 + $0x148] sm:$0xff]
        %v5933 = vld [vmem:[%s5810 + $0x150] sm:$0xff]
        %v5934 = vld [vmem:[%s5810 + $0x168] sm:$0xff]
        %v5935 = vld [vmem:[%s5810 + $0x170] sm:$0xff]
        %v5936 = vld [vmem:[%s5810 + $0x188] sm:$0xff]
        %v5937 = vld [vmem:[%s5810 + $0x190] sm:$0xff]
        %v5938 = vld [vmem:[%s5810 + $0x1a8] sm:$0xff]
        %v5939 = vld [vmem:[%s5810 + $0x1b0] sm:$0xff]
        %v5940 = vld [vmem:[%s5810 + $0x1c8] sm:$0xff]
        %v5941 = vld [vmem:[%s5810 + $0x1d0] sm:$0xff]
        %v5942 = vld [vmem:[%s5810 + $0x1e8] sm:$0xff]
        %v5943 = vld [vmem:[%s5810 + $0x1f0] sm:$0xff]
        %v5944 = vld [vmem:[%s3 + $0x7] sm:$0x1]
        %v5945 = vlaneseq
        %v5946 = vshrl.u32 %v5945, 7
        %v5947 = vsub.s32 0, %v5946
        %v5948 = vrot.slane %v5944, %v5947
        %v5949 = vmul.f32 %v5912, %v5948
        %v5950 = vmul.f32 %v5913, %v5948
        %v5951 = vmul.f32 %v5914, %v5948
        %v5952 = vmul.f32 %v5915, %v5948
        %v5953 = vmul.f32 %v5916, %v5948
        %v5954 = vmul.f32 %v5917, %v5948
        %v5955 = vmul.f32 %v5918, %v5948
        %v5956 = vmul.f32 %v5919, %v5948
        %v5957 = vmul.f32 %v5920, %v5948
        %v5958 = vmul.f32 %v5921, %v5948
        %v5959 = vmul.f32 %v5922, %v5948
        %v5960 = vmul.f32 %v5923, %v5948
        %v5961 = vmul.f32 %v5924, %v5948
        %v5962 = vmul.f32 %v5925, %v5948
        %v5963 = vmul.f32 %v5926, %v5948
        %v5964 = vmul.f32 %v5927, %v5948
        %v5965 = vmul.f32 %v5928, %v5948
        %v5966 = vmul.f32 %v5929, %v5948
        %v5967 = vmul.f32 %v5930, %v5948
        %v5968 = vmul.f32 %v5931, %v5948
        %v5969 = vmul.f32 %v5932, %v5948
        %v5970 = vmul.f32 %v5933, %v5948
        %v5971 = vmul.f32 %v5934, %v5948
        %v5972 = vmul.f32 %v5935, %v5948
        %v5973 = vmul.f32 %v5936, %v5948
        %v5974 = vmul.f32 %v5937, %v5948
        %v5975 = vmul.f32 %v5938, %v5948
        %v5976 = vmul.f32 %v5939, %v5948
        %v5977 = vmul.f32 %v5940, %v5948
        %v5978 = vmul.f32 %v5941, %v5948
        %v5979 = vmul.f32 %v5942, %v5948
        %v5980 = vmul.f32 %v5943, %v5948
        %v5981 = vadd.f32 %v5880, %v5949
        %v5982 = vadd.f32 %v5881, %v5950
        %v5983 = vadd.f32 %v5882, %v5951
        %v5984 = vadd.f32 %v5883, %v5952
        %v5985 = vadd.f32 %v5884, %v5953
        %v5986 = vadd.f32 %v5885, %v5954
        %v5987 = vadd.f32 %v5886, %v5955
        %v5988 = vadd.f32 %v5887, %v5956
        %v5989 = vadd.f32 %v5888, %v5957
        %v5990 = vadd.f32 %v5889, %v5958
        %v5991 = vadd.f32 %v5890, %v5959
        %v5992 = vadd.f32 %v5891, %v5960
        %v5993 = vadd.f32 %v5892, %v5961
        %v5994 = vadd.f32 %v5893, %v5962
        %v5995 = vadd.f32 %v5894, %v5963
        %v5996 = vadd.f32 %v5895, %v5964
        %v5997 = vadd.f32 %v5896, %v5965
        %v5998 = vadd.f32 %v5897, %v5966
        %v5999 = vadd.f32 %v5898, %v5967
        %v6000 = vadd.f32 %v5899, %v5968
        %v6001 = vadd.f32 %v5900, %v5969
        %v6002 = vadd.f32 %v5901, %v5970
        %v6003 = vadd.f32 %v5902, %v5971
        %v6004 = vadd.f32 %v5903, %v5972
        %v6005 = vadd.f32 %v5904, %v5973
        %v6006 = vadd.f32 %v5905, %v5974
        %v6007 = vadd.f32 %v5906, %v5975
        %v6008 = vadd.f32 %v5907, %v5976
        %v6009 = vadd.f32 %v5908, %v5977
        %v6010 = vadd.f32 %v5909, %v5978
        %v6011 = vadd.f32 %v5910, %v5979
        %v6012 = vadd.f32 %v5911, %v5980
        %v6013 = vld [vmem:[%s5810 + $0x9] sm:$0xff]
        %v6014 = vld [vmem:[%s5810 + $0x11] sm:$0xff]
        %v6015 = vld [vmem:[%s5810 + $0x29] sm:$0xff]
        %v6016 = vld [vmem:[%s5810 + $0x31] sm:$0xff]
        %v6017 = vld [vmem:[%s5810 + $0x49] sm:$0xff]
        %v6018 = vld [vmem:[%s5810 + $0x51] sm:$0xff]
        %v6019 = vld [vmem:[%s5810 + $0x69] sm:$0xff]
        %v6020 = vld [vmem:[%s5810 + $0x71] sm:$0xff]
        %v6021 = vld [vmem:[%s5810 + $0x89] sm:$0xff]
        %v6022 = vld [vmem:[%s5810 + $0x91] sm:$0xff]
        %v6023 = vld [vmem:[%s5810 + $0xa9] sm:$0xff]
        %v6024 = vld [vmem:[%s5810 + $0xb1] sm:$0xff]
        %v6025 = vld [vmem:[%s5810 + $0xc9] sm:$0xff]
        %v6026 = vld [vmem:[%s5810 + $0xd1] sm:$0xff]
        %v6027 = vld [vmem:[%s5810 + $0xe9] sm:$0xff]
        %v6028 = vld [vmem:[%s5810 + $0xf1] sm:$0xff]
        %v6029 = vld [vmem:[%s5810 + $0x109] sm:$0xff]
        %v6030 = vld [vmem:[%s5810 + $0x111] sm:$0xff]
        %v6031 = vld [vmem:[%s5810 + $0x129] sm:$0xff]
        %v6032 = vld [vmem:[%s5810 + $0x131] sm:$0xff]
        %v6033 = vld [vmem:[%s5810 + $0x149] sm:$0xff]
        %v6034 = vld [vmem:[%s5810 + $0x151] sm:$0xff]
        %v6035 = vld [vmem:[%s5810 + $0x169] sm:$0xff]
        %v6036 = vld [vmem:[%s5810 + $0x171] sm:$0xff]
        %v6037 = vld [vmem:[%s5810 + $0x189] sm:$0xff]
        %v6038 = vld [vmem:[%s5810 + $0x191] sm:$0xff]
        %v6039 = vld [vmem:[%s5810 + $0x1a9] sm:$0xff]
        %v6040 = vld [vmem:[%s5810 + $0x1b1] sm:$0xff]
        %v6041 = vld [vmem:[%s5810 + $0x1c9] sm:$0xff]
        %v6042 = vld [vmem:[%s5810 + $0x1d1] sm:$0xff]
        %v6043 = vld [vmem:[%s5810 + $0x1e9] sm:$0xff]
        %v6044 = vld [vmem:[%s5810 + $0x1f1] sm:$0xff]
        %v6045 = vld [vmem:[%s3 + $0x8] sm:$0x1]
        %v6046 = vlaneseq
        %v6047 = vshrl.u32 %v6046, 7
        %v6048 = vsub.s32 0, %v6047
        %v6049 = vrot.slane %v6045, %v6048
        %v6050 = vmul.f32 %v6013, %v6049
        %v6051 = vmul.f32 %v6014, %v6049
        %v6052 = vmul.f32 %v6015, %v6049
        %v6053 = vmul.f32 %v6016, %v6049
        %v6054 = vmul.f32 %v6017, %v6049
        %v6055 = vmul.f32 %v6018, %v6049
        %v6056 = vmul.f32 %v6019, %v6049
        %v6057 = vmul.f32 %v6020, %v6049
        %v6058 = vmul.f32 %v6021, %v6049
        %v6059 = vmul.f32 %v6022, %v6049
        %v6060 = vmul.f32 %v6023, %v6049
        %v6061 = vmul.f32 %v6024, %v6049
        %v6062 = vmul.f32 %v6025, %v6049
        %v6063 = vmul.f32 %v6026, %v6049
        %v6064 = vmul.f32 %v6027, %v6049
        %v6065 = vmul.f32 %v6028, %v6049
        %v6066 = vmul.f32 %v6029, %v6049
        %v6067 = vmul.f32 %v6030, %v6049
        %v6068 = vmul.f32 %v6031, %v6049
        %v6069 = vmul.f32 %v6032, %v6049
        %v6070 = vmul.f32 %v6033, %v6049
        %v6071 = vmul.f32 %v6034, %v6049
        %v6072 = vmul.f32 %v6035, %v6049
        %v6073 = vmul.f32 %v6036, %v6049
        %v6074 = vmul.f32 %v6037, %v6049
        %v6075 = vmul.f32 %v6038, %v6049
        %v6076 = vmul.f32 %v6039, %v6049
        %v6077 = vmul.f32 %v6040, %v6049
        %v6078 = vmul.f32 %v6041, %v6049
        %v6079 = vmul.f32 %v6042, %v6049
        %v6080 = vmul.f32 %v6043, %v6049
        %v6081 = vmul.f32 %v6044, %v6049
        %v6082 = vadd.f32 %v5981, %v6050
        %v6083 = vadd.f32 %v5982, %v6051
        %v6084 = vadd.f32 %v5983, %v6052
        %v6085 = vadd.f32 %v5984, %v6053
        %v6086 = vadd.f32 %v5985, %v6054
        %v6087 = vadd.f32 %v5986, %v6055
        %v6088 = vadd.f32 %v5987, %v6056
        %v6089 = vadd.f32 %v5988, %v6057
        %v6090 = vadd.f32 %v5989, %v6058
        %v6091 = vadd.f32 %v5990, %v6059
        %v6092 = vadd.f32 %v5991, %v6060
        %v6093 = vadd.f32 %v5992, %v6061
        %v6094 = vadd.f32 %v5993, %v6062
        %v6095 = vadd.f32 %v5994, %v6063
        %v6096 = vadd.f32 %v5995, %v6064
        %v6097 = vadd.f32 %v5996, %v6065
        %v6098 = vadd.f32 %v5997, %v6066
        %v6099 = vadd.f32 %v5998, %v6067
        %v6100 = vadd.f32 %v5999, %v6068
        %v6101 = vadd.f32 %v6000, %v6069
        %v6102 = vadd.f32 %v6001, %v6070
        %v6103 = vadd.f32 %v6002, %v6071
        %v6104 = vadd.f32 %v6003, %v6072
        %v6105 = vadd.f32 %v6004, %v6073
        %v6106 = vadd.f32 %v6005, %v6074
        %v6107 = vadd.f32 %v6006, %v6075
        %v6108 = vadd.f32 %v6007, %v6076
        %v6109 = vadd.f32 %v6008, %v6077
        %v6110 = vadd.f32 %v6009, %v6078
        %v6111 = vadd.f32 %v6010, %v6079
        %v6112 = vadd.f32 %v6011, %v6080
        %v6113 = vadd.f32 %v6012, %v6081
        %v6114 = vld [vmem:[%s4] sm:$0x1]
        %v6116 = vlaneseq
        %v6117 = vshrl.u32 %v6116, 7
        %v6118 = vsub.s32 0, %v6117
        %v6119 = vrot.slane %v6114, %v6118
        %v6121 = vadd.f32 %v6082, %v6119
        %v6122 = vadd.f32 %v6083, %v6119
        %v6123 = vadd.f32 %v6084, %v6119
        %v6124 = vadd.f32 %v6085, %v6119
        %v6125 = vadd.f32 %v6086, %v6119
        %v6126 = vadd.f32 %v6087, %v6119
        %v6127 = vadd.f32 %v6088, %v6119
        %v6128 = vadd.f32 %v6089, %v6119
        %v6129 = vadd.f32 %v6090, %v6119
        %v6130 = vadd.f32 %v6091, %v6119
        %v6131 = vadd.f32 %v6092, %v6119
        %v6132 = vadd.f32 %v6093, %v6119
        %v6133 = vadd.f32 %v6094, %v6119
        %v6134 = vadd.f32 %v6095, %v6119
        %v6135 = vadd.f32 %v6096, %v6119
        %v6136 = vadd.f32 %v6097, %v6119
        %v6137 = vadd.f32 %v6098, %v6119
        %v6138 = vadd.f32 %v6099, %v6119
        %v6139 = vadd.f32 %v6100, %v6119
        %v6140 = vadd.f32 %v6101, %v6119
        %v6141 = vadd.f32 %v6102, %v6119
        %v6142 = vadd.f32 %v6103, %v6119
        %v6143 = vadd.f32 %v6104, %v6119
        %v6144 = vadd.f32 %v6105, %v6119
        %v6145 = vadd.f32 %v6106, %v6119
        %v6146 = vadd.f32 %v6107, %v6119
        %v6147 = vadd.f32 %v6108, %v6119
        %v6148 = vadd.f32 %v6109, %v6119
        %v6149 = vadd.f32 %v6110, %v6119
        %v6150 = vadd.f32 %v6111, %v6119
        %v6151 = vadd.f32 %v6112, %v6119
        %v6152 = vadd.f32 %v6113, %v6119
        %v6153 = vmax.f32 %v6121, 0.0
        %v6154 = vmax.f32 %v6122, 0.0
        %v6155 = vmax.f32 %v6123, 0.0
        %v6156 = vmax.f32 %v6124, 0.0
        %v6157 = vmax.f32 %v6125, 0.0
        %v6158 = vmax.f32 %v6126, 0.0
        %v6159 = vmax.f32 %v6127, 0.0
        %v6160 = vmax.f32 %v6128, 0.0
        %v6161 = vmax.f32 %v6129, 0.0
        %v6162 = vmax.f32 %v6130, 0.0
        %v6163 = vmax.f32 %v6131, 0.0
        %v6164 = vmax.f32 %v6132, 0.0
        %v6165 = vmax.f32 %v6133, 0.0
        %v6166 = vmax.f32 %v6134, 0.0
        %v6167 = vmax.f32 %v6135, 0.0
        %v6168 = vmax.f32 %v6136, 0.0
        %v6169 = vmax.f32 %v6137, 0.0
        %v6170 = vmax.f32 %v6138, 0.0
        %v6171 = vmax.f32 %v6139, 0.0
        %v6172 = vmax.f32 %v6140, 0.0
        %v6173 = vmax.f32 %v6141, 0.0
        %v6174 = vmax.f32 %v6142, 0.0
        %v6175 = vmax.f32 %v6143, 0.0
        %v6176 = vmax.f32 %v6144, 0.0
        %v6177 = vmax.f32 %v6145, 0.0
        %v6178 = vmax.f32 %v6146, 0.0
        %v6179 = vmax.f32 %v6147, 0.0
        %v6180 = vmax.f32 %v6148, 0.0
        %v6181 = vmax.f32 %v6149, 0.0
        %v6182 = vmax.f32 %v6150, 0.0
        %v6183 = vmax.f32 %v6151, 0.0
        %v6184 = vmax.f32 %v6152, 0.0
        %v6185 = vpack.c.bf16 %v6154, %v6153
        %v6186 = vpack.c.bf16 %v6156, %v6155
        %v6187 = vpack.c.bf16 %v6158, %v6157
        %v6188 = vpack.c.bf16 %v6160, %v6159
        %v6189 = vpack.c.bf16 %v6162, %v6161
        %v6190 = vpack.c.bf16 %v6164, %v6163
        %v6191 = vpack.c.bf16 %v6166, %v6165
        %v6192 = vpack.c.bf16 %v6168, %v6167
        %v6193 = vpack.c.bf16 %v6170, %v6169
        %v6194 = vpack.c.bf16 %v6172, %v6171
        %v6195 = vpack.c.bf16 %v6174, %v6173
        %v6196 = vpack.c.bf16 %v6176, %v6175
        %v6197 = vpack.c.bf16 %v6178, %v6177
        %v6198 = vpack.c.bf16 %v6180, %v6179
        %v6199 = vpack.c.bf16 %v6182, %v6181
        %v6200 = vpack.c.bf16 %v6184, %v6183
        %v6201 = vld [vmem:[%s5] sm:$0xf]
        %v6202 = vld [vmem:[%s5 + $0x4] sm:$0xf]
        %v6203 = vld [vmem:[%s5 + $0x8] sm:$0xf]
        %v6204 = vld [vmem:[%s5 + $0xc] sm:$0xf]
        %v6205 = vld [vmem:[%s5 + $0x10] sm:$0xf]
        %v6206 = vld [vmem:[%s5 + $0x14] sm:$0xf]
        %v6207 = vld [vmem:[%s5 + $0x18] sm:$0xf]
        %v6208 = vld [vmem:[%s5 + $0x1c] sm:$0xf]
        %v6209 = vld [vmem:[%s5 + $0x20] sm:$0xf]
        %v6210 = vld [vmem:[%s5 + $0x24] sm:$0xf]
        %v6211 = vld [vmem:[%s5 + $0x28] sm:$0xf]
        %v6212 = vld [vmem:[%s5 + $0x2c] sm:$0xf]
        %v6213 = vld [vmem:[%s5 + $0x30] sm:$0xf]
        %v6214 = vld [vmem:[%s5 + $0x34] sm:$0xf]
        %v6215 = vld [vmem:[%s5 + $0x38] sm:$0xf]
        %v6216 = vld [vmem:[%s5 + $0x3c] sm:$0xf]
        %v6217 = vld [vmem:[%s6] sm:$0x1]
        %v6219 = vlaneseq
        %v6220 = vshrl.u32 %v6219, 7
        %v6221 = vsub.s32 0, %v6220
        %v6222 = vrot.slane %v6217, %v6221
        %v6240 = vunpack.c.l.b16 %v6201
        %v6241 = vunpack.c.l.b16 %v6202
        %v6242 = vunpack.c.l.b16 %v6203
        %v6243 = vunpack.c.l.b16 %v6204
        %v6244 = vunpack.c.l.b16 %v6205
        %v6245 = vunpack.c.l.b16 %v6206
        %v6246 = vunpack.c.l.b16 %v6207
        %v6247 = vunpack.c.l.b16 %v6208
        %v6248 = vunpack.c.l.b16 %v6209
        %v6249 = vunpack.c.l.b16 %v6210
        %v6250 = vunpack.c.l.b16 %v6211
        %v6251 = vunpack.c.l.b16 %v6212
        %v6252 = vunpack.c.l.b16 %v6213
        %v6253 = vunpack.c.l.b16 %v6214
        %v6254 = vunpack.c.l.b16 %v6215
        %v6255 = vunpack.c.l.b16 %v6216
        %v6256 = vpack.c.b16 %v6241, %v6240
        %v6257 = vpack.c.b16 %v6243, %v6242
        %v6258 = vpack.c.b16 %v6245, %v6244
        %v6259 = vpack.c.b16 %v6247, %v6246
        %v6260 = vpack.c.b16 %v6249, %v6248
        %v6261 = vpack.c.b16 %v6251, %v6250
        %v6262 = vpack.c.b16 %v6253, %v6252
        %v6263 = vpack.c.b16 %v6255, %v6254
        %6272 = vmatprep.subr.bf16.mxu0 0
        %6273 = vmatpush1.bf16.msra.mxu0 %v6256
        %6274 = vmatprep.subr.bf16.mxu0 0
        %6275 = vmatpush1.bf16.msra.mxu0 %v6257
        %6276 = vmatprep.subr.bf16.mxu0 0
        %6277 = vmatpush1.bf16.msra.mxu0 %v6258
        %6278 = vmatprep.subr.bf16.mxu0 0
        %6279 = vmatpush1.bf16.msra.mxu0 %v6259
        %6280 = vmatprep.subr.bf16.mxu0 0
        %6281 = vmatpush1.bf16.msra.mxu0 %v6260
        %6282 = vmatprep.subr.bf16.mxu0 0
        %6283 = vmatpush1.bf16.msra.mxu0 %v6261
        %6284 = vmatprep.subr.bf16.mxu0 0
        %6285 = vmatpush1.bf16.msra.mxu0 %v6262
        %6286 = vmatprep.subr.bf16.mxu0 0
        %6287 = vmatpush1.bf16.msra.mxu0 %v6263
        %6288 = vmatprep.subr.bf16.mxu0 0
        %6289 = vmatpush1.bf16.msra.mxu0 0
        %6290 = vmatprep.subr.bf16.mxu0 0
        %6291 = vmatpush1.bf16.msra.mxu0 0
        %6292 = vmatprep.subr.bf16.mxu0 0
        %6293 = vmatpush1.bf16.msra.mxu0 0
        %6294 = vmatprep.subr.bf16.mxu0 0
        %6295 = vmatpush1.bf16.msra.mxu0 0
        %6296 = vmatprep.subr.bf16.mxu0 0
        %6297 = vmatpush1.bf16.msra.mxu0 0
        %6298 = vmatprep.subr.bf16.mxu0 0
        %6299 = vmatpush1.bf16.msra.mxu0 0
        %6300 = vmatprep.subr.bf16.mxu0 0
        %6301 = vmatpush1.bf16.msra.mxu0 0
        %6302 = vmatprep.subr.bf16.mxu0 0
        %6303 = vmatpush1.bf16.msra.mxu0 0
        %6304 = vmatprep.mubr.bf16.mxu0 0
        %6305 = vmatmul.mubr.bf16.gmra.mrb[0].mxu0 %v6185
        %v6306 = vpop.f32.mrb[0].mxu0
        %v6307 = vadd.f32 %v6222, %v6306
        %v6308 = vpop.f32.mrb[0].mxu0
        %v6309 = vpop.f32.mrb[0].mxu0
        %v6310 = vadd.f32 %v6222, %v6309
        %v6311 = vpop.f32.mrb[0].mxu0
        %6312 = vmatprep.mubr.bf16.mxu0 0
        %6313 = vmatmul.mubr.bf16.gmra.mrb[0].mxu0 %v6186
        %v6314 = vpop.f32.mrb[0].mxu0
        %v6315 = vadd.f32 %v6222, %v6314
        %v6316 = vpop.f32.mrb[0].mxu0
        %v6317 = vpop.f32.mrb[0].mxu0
        %v6318 = vadd.f32 %v6222, %v6317
        %v6319 = vpop.f32.mrb[0].mxu0
        %6320 = vmatprep.mubr.bf16.mxu0 0
        %6321 = vmatmul.mubr.bf16.gmra.mrb[0].mxu0 %v6187
        %v6322 = vpop.f32.mrb[0].mxu0
        %v6323 = vadd.f32 %v6222, %v6322
        %v6324 = vpop.f32.mrb[0].mxu0
        %v6325 = vpop.f32.mrb[0].mxu0
        %v6326 = vadd.f32 %v6222, %v6325
        %v6327 = vpop.f32.mrb[0].mxu0
        %6328 = vmatprep.mubr.bf16.mxu0 0
        %6329 = vmatmul.mubr.bf16.gmra.mrb[0].mxu0 %v6188
        %v6330 = vpop.f32.mrb[0].mxu0
        %v6331 = vadd.f32 %v6222, %v6330
        %v6332 = vpop.f32.mrb[0].mxu0
        %v6333 = vpop.f32.mrb[0].mxu0
        %v6334 = vadd.f32 %v6222, %v6333
        %v6335 = vpop.f32.mrb[0].mxu0
        %6336 = vmatprep.mubr.bf16.mxu0 0
        %6337 = vmatmul.mubr.bf16.gmra.mrb[0].mxu0 %v6189
        %v6338 = vpop.f32.mrb[0].mxu0
        %v6339 = vadd.f32 %v6222, %v6338
        %v6340 = vpop.f32.mrb[0].mxu0
        %v6341 = vpop.f32.mrb[0].mxu0
        %v6342 = vadd.f32 %v6222, %v6341
        %v6343 = vpop.f32.mrb[0].mxu0
        %6344 = vmatprep.mubr.bf16.mxu0 0
        %6345 = vmatmul.mubr.bf16.gmra.mrb[0].mxu0 %v6190
        %v6346 = vpop.f32.mrb[0].mxu0
        %v6347 = vadd.f32 %v6222, %v6346
        %v6348 = vpop.f32.mrb[0].mxu0
        %v6349 = vpop.f32.mrb[0].mxu0
        %v6350 = vadd.f32 %v6222, %v6349
        %v6351 = vpop.f32.mrb[0].mxu0
        %6352 = vmatprep.mubr.bf16.mxu0 0
        %6353 = vmatmul.mubr.bf16.gmra.mrb[0].mxu0 %v6191
        %v6354 = vpop.f32.mrb[0].mxu0
        %v6355 = vadd.f32 %v6222, %v6354
        %v6356 = vpop.f32.mrb[0].mxu0
        %v6357 = vpop.f32.mrb[0].mxu0
        %v6358 = vadd.f32 %v6222, %v6357
        %v6359 = vpop.f32.mrb[0].mxu0
        %6360 = vmatprep.mubr.bf16.mxu0 0
        %6361 = vmatmul.mubr.bf16.gmra.mrb[0].mxu0 %v6192
        %v6362 = vpop.f32.mrb[0].mxu0
        %v6363 = vadd.f32 %v6222, %v6362
        %v6364 = vpop.f32.mrb[0].mxu0
        %v6365 = vpop.f32.mrb[0].mxu0
        %v6366 = vadd.f32 %v6222, %v6365
        %v6367 = vpop.f32.mrb[0].mxu0
        %6368 = vmatprep.mubr.bf16.mxu0 0
        %6369 = vmatmul.mubr.bf16.gmra.mrb[0].mxu0 %v6193
        %v6370 = vpop.f32.mrb[0].mxu0
        %v6371 = vadd.f32 %v6222, %v6370
        %v6372 = vpop.f32.mrb[0].mxu0
        %v6373 = vpop.f32.mrb[0].mxu0
        %v6374 = vadd.f32 %v6222, %v6373
        %v6375 = vpop.f32.mrb[0].mxu0
        %6376 = vmatprep.mubr.bf16.mxu0 0
        %6377 = vmatmul.mubr.bf16.gmra.mrb[0].mxu0 %v6194
        %v6378 = vpop.f32.mrb[0].mxu0
        %v6379 = vadd.f32 %v6222, %v6378
        %v6380 = vpop.f32.mrb[0].mxu0
        %v6381 = vpop.f32.mrb[0].mxu0
        %v6382 = vadd.f32 %v6222, %v6381
        %v6383 = vpop.f32.mrb[0].mxu0
        %6384 = vmatprep.mubr.bf16.mxu0 0
        %6385 = vmatmul.mubr.bf16.gmra.mrb[0].mxu0 %v6195
        %v6386 = vpop.f32.mrb[0].mxu0
        %v6387 = vadd.f32 %v6222, %v6386
        %v6388 = vpop.f32.mrb[0].mxu0
        %v6389 = vpop.f32.mrb[0].mxu0
        %v6390 = vadd.f32 %v6222, %v6389
        %v6391 = vpop.f32.mrb[0].mxu0
        %6392 = vmatprep.mubr.bf16.mxu0 0
        %6393 = vmatmul.mubr.bf16.gmra.mrb[0].mxu0 %v6196
        %v6394 = vpop.f32.mrb[0].mxu0
        %v6395 = vadd.f32 %v6222, %v6394
        %v6396 = vpop.f32.mrb[0].mxu0
        %v6397 = vpop.f32.mrb[0].mxu0
        %v6398 = vadd.f32 %v6222, %v6397
        %v6399 = vpop.f32.mrb[0].mxu0
        %6400 = vmatprep.mubr.bf16.mxu0 0
        %6401 = vmatmul.mubr.bf16.gmra.mrb[0].mxu0 %v6197
        %v6402 = vpop.f32.mrb[0].mxu0
        %v6403 = vadd.f32 %v6222, %v6402
        %v6404 = vpop.f32.mrb[0].mxu0
        %v6405 = vpop.f32.mrb[0].mxu0
        %v6406 = vadd.f32 %v6222, %v6405
        %v6407 = vpop.f32.mrb[0].mxu0
        %6408 = vmatprep.mubr.bf16.mxu0 0
        %6409 = vmatmul.mubr.bf16.gmra.mrb[0].mxu0 %v6198
        %v6410 = vpop.f32.mrb[0].mxu0
        %v6411 = vadd.f32 %v6222, %v6410
        %v6412 = vpop.f32.mrb[0].mxu0
        %v6413 = vpop.f32.mrb[0].mxu0
        %v6414 = vadd.f32 %v6222, %v6413
        %v6415 = vpop.f32.mrb[0].mxu0
        %6416 = vmatprep.mubr.bf16.mxu0 0
        %6417 = vmatmul.mubr.bf16.gmra.mrb[0].mxu0 %v6199
        %v6418 = vpop.f32.mrb[0].mxu0
        %v6419 = vadd.f32 %v6222, %v6418
        %v6420 = vpop.f32.mrb[0].mxu0
        %v6421 = vpop.f32.mrb[0].mxu0
        %v6422 = vadd.f32 %v6222, %v6421
        %v6423 = vpop.f32.mrb[0].mxu0
        %6424 = vmatprep.mubr.bf16.mxu0 0
        %6425 = vmatmul.mubr.bf16.gmra.mrb[0].mxu0 %v6200
        %v6426 = vpop.f32.mrb[0].mxu0
        %v6427 = vadd.f32 %v6222, %v6426
        %v6428 = vpop.f32.mrb[0].mxu0
        %v6429 = vpop.f32.mrb[0].mxu0
        %v6430 = vadd.f32 %v6222, %v6429
        %v6431 = vpop.f32.mrb[0].mxu0
        %6432 = vdwg.mxu0
        %v6433 = vmax.f32 %v6307, 0.0
        %v6434 = vmax.f32 %v6310, 0.0
        %v6435 = vmax.f32 %v6315, 0.0
        %v6436 = vmax.f32 %v6318, 0.0
        %v6437 = vmax.f32 %v6323, 0.0
        %v6438 = vmax.f32 %v6326, 0.0
        %v6439 = vmax.f32 %v6331, 0.0
        %v6440 = vmax.f32 %v6334, 0.0
        %v6441 = vmax.f32 %v6339, 0.0
        %v6442 = vmax.f32 %v6342, 0.0
        %v6443 = vmax.f32 %v6347, 0.0
        %v6444 = vmax.f32 %v6350, 0.0
        %v6445 = vmax.f32 %v6355, 0.0
        %v6446 = vmax.f32 %v6358, 0.0
        %v6447 = vmax.f32 %v6363, 0.0
        %v6448 = vmax.f32 %v6366, 0.0
        %v6449 = vmax.f32 %v6371, 0.0
        %v6450 = vmax.f32 %v6374, 0.0
        %v6451 = vmax.f32 %v6379, 0.0
        %v6452 = vmax.f32 %v6382, 0.0
        %v6453 = vmax.f32 %v6387, 0.0
        %v6454 = vmax.f32 %v6390, 0.0
        %v6455 = vmax.f32 %v6395, 0.0
        %v6456 = vmax.f32 %v6398, 0.0
        %v6457 = vmax.f32 %v6403, 0.0
        %v6458 = vmax.f32 %v6406, 0.0
        %v6459 = vmax.f32 %v6411, 0.0
        %v6460 = vmax.f32 %v6414, 0.0
        %v6461 = vmax.f32 %v6419, 0.0
        %v6462 = vmax.f32 %v6422, 0.0
        %v6463 = vmax.f32 %v6427, 0.0
        %v6464 = vmax.f32 %v6430, 0.0
        %v6465 = vpack.c.bf16 %v6434, %v6433
        %v6466 = vpack.c.bf16 %v6436, %v6435
        %v6467 = vpack.c.bf16 %v6438, %v6437
        %v6468 = vpack.c.bf16 %v6440, %v6439
        %v6469 = vpack.c.bf16 %v6442, %v6441
        %v6470 = vpack.c.bf16 %v6444, %v6443
        %v6471 = vpack.c.bf16 %v6446, %v6445
        %v6472 = vpack.c.bf16 %v6448, %v6447
        %v6473 = vpack.c.bf16 %v6450, %v6449
        %v6474 = vpack.c.bf16 %v6452, %v6451
        %v6475 = vpack.c.bf16 %v6454, %v6453
        %v6476 = vpack.c.bf16 %v6456, %v6455
        %v6477 = vpack.c.bf16 %v6458, %v6457
        %v6478 = vpack.c.bf16 %v6460, %v6459
        %v6479 = vpack.c.bf16 %v6462, %v6461
        %v6480 = vpack.c.bf16 %v6464, %v6463
        %v6497 = vunpack.c.l.b16 %v6465
        %v6498 = vunpack.c.h.b16 %v6465
        %v6499 = vunpack.c.l.b16 %v6466
        %v6500 = vunpack.c.h.b16 %v6466
        %v6501 = vunpack.c.l.b16 %v6467
        %v6502 = vunpack.c.h.b16 %v6467
        %v6503 = vunpack.c.l.b16 %v6468
        %v6504 = vunpack.c.h.b16 %v6468
        %v6505 = vunpack.c.l.b16 %v6469
        %v6506 = vunpack.c.h.b16 %v6469
        %v6507 = vunpack.c.l.b16 %v6470
        %v6508 = vunpack.c.h.b16 %v6470
        %v6509 = vunpack.c.l.b16 %v6471
        %v6510 = vunpack.c.h.b16 %v6471
        %v6511 = vunpack.c.l.b16 %v6472
        %v6512 = vunpack.c.h.b16 %v6472
        %v6513 = vunpack.c.l.b16 %v6473
        %v6514 = vunpack.c.h.b16 %v6473
        %v6515 = vunpack.c.l.b16 %v6474
        %v6516 = vunpack.c.h.b16 %v6474
        %v6517 = vunpack.c.l.b16 %v6475
        %v6518 = vunpack.c.h.b16 %v6475
        %v6519 = vunpack.c.l.b16 %v6476
        %v6520 = vunpack.c.h.b16 %v6476
        %v6521 = vunpack.c.l.b16 %v6477
        %v6522 = vunpack.c.h.b16 %v6477
        %v6523 = vunpack.c.l.b16 %v6478
        %v6524 = vunpack.c.h.b16 %v6478
        %v6525 = vunpack.c.l.b16 %v6479
        %v6526 = vunpack.c.h.b16 %v6479
        %v6527 = vunpack.c.l.b16 %v6480
        %v6528 = vunpack.c.h.b16 %v6480
        %v6529 = vpack.c.b16 %v6497, %v6497
        %v6530 = vpack.c.b16 %v6498, %v6498
        %v6531 = vpack.c.b16 %v6499, %v6499
        %v6532 = vpack.c.b16 %v6500, %v6500
        %v6533 = vpack.c.b16 %v6501, %v6501
        %v6534 = vpack.c.b16 %v6502, %v6502
        %v6535 = vpack.c.b16 %v6503, %v6503
        %v6536 = vpack.c.b16 %v6504, %v6504
        %v6537 = vpack.c.b16 %v6505, %v6505
        %v6538 = vpack.c.b16 %v6506, %v6506
        %v6539 = vpack.c.b16 %v6507, %v6507
        %v6540 = vpack.c.b16 %v6508, %v6508
        %v6541 = vpack.c.b16 %v6509, %v6509
        %v6542 = vpack.c.b16 %v6510, %v6510
        %v6543 = vpack.c.b16 %v6511, %v6511
        %v6544 = vpack.c.b16 %v6512, %v6512
        %v6545 = vpack.c.b16 %v6513, %v6513
        %v6546 = vpack.c.b16 %v6514, %v6514
        %v6547 = vpack.c.b16 %v6515, %v6515
        %v6548 = vpack.c.b16 %v6516, %v6516
        %v6549 = vpack.c.b16 %v6517, %v6517
        %v6550 = vpack.c.b16 %v6518, %v6518
        %v6551 = vpack.c.b16 %v6519, %v6519
        %v6552 = vpack.c.b16 %v6520, %v6520
        %v6553 = vpack.c.b16 %v6521, %v6521
        %v6554 = vpack.c.b16 %v6522, %v6522
        %v6555 = vpack.c.b16 %v6523, %v6523
        %v6556 = vpack.c.b16 %v6524, %v6524
        %v6557 = vpack.c.b16 %v6525, %v6525
        %v6558 = vpack.c.b16 %v6526, %v6526
        %v6559 = vpack.c.b16 %v6527, %v6527
        %v6560 = vpack.c.b16 %v6528, %v6528
        %6593 = vst [vmem:[%s271] sm:$0xf] %v6529
        %6594 = vst [vmem:[%s271 + $0x4] sm:$0xf] %v6530
        %6595 = vst [vmem:[%s271 + $0x8] sm:$0xf] %v6531
        %6596 = vst [vmem:[%s271 + $0xc] sm:$0xf] %v6532
        %6597 = vst [vmem:[%s271 + $0x10] sm:$0xf] %v6533
        %6598 = vst [vmem:[%s271 + $0x14] sm:$0xf] %v6534
        %6599 = vst [vmem:[%s271 + $0x18] sm:$0xf] %v6535
        %6600 = vst [vmem:[%s271 + $0x1c] sm:$0xf] %v6536
        %6601 = vst [vmem:[%s271 + $0x20] sm:$0xf] %v6537
        %6602 = vst [vmem:[%s271 + $0x24] sm:$0xf] %v6538
        %6603 = vst [vmem:[%s271 + $0x28] sm:$0xf] %v6539
        %6604 = vst [vmem:[%s271 + $0x2c] sm:$0xf] %v6540
        %6605 = vst [vmem:[%s271 + $0x30] sm:$0xf] %v6541
        %6606 = vst [vmem:[%s271 + $0x34] sm:$0xf] %v6542
        %6607 = vst [vmem:[%s271 + $0x38] sm:$0xf] %v6543
        %6608 = vst [vmem:[%s271 + $0x3c] sm:$0xf] %v6544
        %6609 = vst [vmem:[%s271 + $0x40] sm:$0xf] %v6545
        %6610 = vst [vmem:[%s271 + $0x44] sm:$0xf] %v6546
        %6611 = vst [vmem:[%s271 + $0x48] sm:$0xf] %v6547
        %6612 = vst [vmem:[%s271 + $0x4c] sm:$0xf] %v6548
        %6613 = vst [vmem:[%s271 + $0x50] sm:$0xf] %v6549
        %6614 = vst [vmem:[%s271 + $0x54] sm:$0xf] %v6550
        %6615 = vst [vmem:[%s271 + $0x58] sm:$0xf] %v6551
        %6616 = vst [vmem:[%s271 + $0x5c] sm:$0xf] %v6552
        %6617 = vst [vmem:[%s271 + $0x60] sm:$0xf] %v6553
        %6618 = vst [vmem:[%s271 + $0x64] sm:$0xf] %v6554
        %6619 = vst [vmem:[%s271 + $0x68] sm:$0xf] %v6555
        %6620 = vst [vmem:[%s271 + $0x6c] sm:$0xf] %v6556
        %6621 = vst [vmem:[%s271 + $0x70] sm:$0xf] %v6557
        %6622 = vst [vmem:[%s271 + $0x74] sm:$0xf] %v6558
        %6623 = vst [vmem:[%s271 + $0x78] sm:$0xf] %v6559
        %6624 = vst [vmem:[%s271 + $0x7c] sm:$0xf] %v6560
        %s6625 = sand.u32 %s181, 1
        %s6626 = scalar_lea.sflag [#allocation4], %s6625
        %s6627 = sand.u32 %s181, 1
        %s6628 = smul.addr %s6627, 128
        %s6629 = scalar_lea.vmem [#allocation3], %s6628
        // Predicated region
        $region49: #{tpu_custom_call.1} parent=47 // pred_check
          %p6630 = pneg %p191
        $region50: #{tpu_custom_call.1} parent=47 // pred_check_branch
          %6632 = sbr.rel (%p6630) target = $region52
        $region51: #{tpu_custom_call.1} parent=47 // pred_region
          %s6634 = ssub.s32 2048, 2048
          %6635 = vsyncadd %s6626, %s6634
          %s6636 = smul.addr %s21, 32
          %s6637 = smul.addr %s6636, 64
          %s6638 = scalar_lea.hbm %s7, %s6637
          %s6639 = sshll.u32 %s6629, 4
          %s6640 = int_to_ptr.vmem [resolvable:$true] %s6639
          %6645 = dma.vmem_to_hbm [thread:$0]  %s6640, 2048, %s6638, %s6626, 64, 64, 4
        $region52: #{tpu_custom_call.1} parent=47 // pred_fallthru
          _
      $region48: #{tpu_custom_call.1} parent=5 // pred_fallthru
        _
      %p6646 = scmp.le.s32.totalorder 2, %s16
      // Predicated region
      $region53: #{tpu_custom_call.1} parent=5 // pred_check
        %p6647 = pneg %p6646
      $region54: #{tpu_custom_call.1} parent=5 // pred_check_branch
        %6649 = sbr.rel (%p6647) target = $region56
      $region55: #{tpu_custom_call.1} parent=5 // pred_region
        %s6650 = ssub.s32 %s16, 2
        // Predicated region
        $region57: #{tpu_custom_call.1} parent=55 // pred_check
          %p6651 = pneg %p197
        $region58: #{tpu_custom_call.1} parent=55 // pred_check_branch
          %6653 = sbr.rel (%p6651) target = $region60
        $region59: #{tpu_custom_call.1} parent=55 // pred_region
          %s6654 = sand.u32 %s182, 1
          %s6655 = scalar_lea.sflag [#allocation4], %s6654
          %s6656 = sand.u32 %s182, 1
          %s6657 = smul.addr %s6656, 128
          %s6658 = scalar_lea.vmem [#allocation3], %s6657
          %6659 = dma.done %s6655, 2048
        $region60: #{tpu_custom_call.1} parent=55 // pred_fallthru
          _
      $region56: #{tpu_custom_call.1} parent=5 // pred_fallthru
        _
    $region6: #{tpu_custom_call.1} parent=1 // loop_footer
      %s20 = sadd.s32 1, %s16
    $region7: #{tpu_custom_call.1} parent=1 // loop_footer_branch
      %15 = sbr.rel target = $region3
    $region8: #{tpu_custom_call.1} parent=1 // loop_exit
      _
    %6660 = vsyncpa [#allocation4], 1
    %s6661 = scalar_lea.sflag [#allocation4], 1
    %6662 = vsyncpa %s6661, 1

</llo_original>
